<compile_context>
chip_gen: v6e
topology: v6e:2x2x1
jax: 0.10.0
libtpu: 0.0.40
codegen_flags: <defaults>
</compile_context>

<pallas_src>
import functools

import jax
import jax.numpy as jnp
from jax.experimental import pallas as pl
from jax.experimental.pallas import tpu as pltpu


_VMEM_LIMIT = 32 * 1024 * 1024    # safe scoped-VMEM budget on v5e/v6e/v7x
_IN_EPS = 1e-9                    # matches the custom InstanceNormalization eps
_FUSED_BUDGET = 20 * 1024 * 1024  # per-image footprint allowed for the fused path


def _round_up(x, m):
    return ((x + m - 1) // m) * m


def _pick_tile(dim_size, cap, align):
    """Largest aligned tile <= cap; prefer an exact divisor, but only search
    down to cap//2 (pad instead of using tiny tiles that tank MXU util)."""
    if dim_size <= cap:
        return _round_up(dim_size, align)
    for t in range(cap, cap // 2, -align):
        if dim_size % t == 0:
            return t
    return cap


# ----------------------------------------------------------------------------
# Shared in-kernel helpers
# ----------------------------------------------------------------------------
def _inorm(y, scale, shift, eps):
    """InstanceNorm over axis 0 of a (HW, C) block; single-pass stats.

    Biased variance (matches torch.var * (n-1)/n in the reference module),
    clamped at 0 before adding the tiny eps (cancellation safety)."""
    hw = y.shape[0]
    inv_n = 1.0 / hw
    mean = jnp.sum(y, axis=0, keepdims=True) * inv_n
    ex2 = jnp.sum(y * y, axis=0, keepdims=True) * inv_n
    var = jnp.maximum(ex2 - mean * mean, 0.0)
    return (y - mean) * jax.lax.rsqrt(var + eps) * scale + shift


def _reflect_pad_1(x, H, W):
    """ReflectionPad2d((1,1,1,1)) on a VMEM-resident (H, W, C) value."""
    xp = jnp.concatenate([x[1:2], x, x[H - 2:H - 1]], axis=0)           # (H+2, W, C)
    xp = jnp.concatenate([xp[:, 1:2], xp, xp[:, W - 2:W - 1]], axis=1)  # (H+2, W+2, C)
    return xp


def _conv3x3_vmem(x_hwc, w_ref, H, W, C):
    """3x3 reflect-padded conv on a VMEM-resident (H, W, C) activation.

    The 9 taps are 9 shifted-window bf16 MXU matmuls accumulated in f32;
    nothing round-trips HBM.  Conv bias is intentionally omitted: every conv
    here feeds an InstanceNorm, which cancels it exactly."""
    xp = _reflect_pad_1(x_hwc, H, W)
    acc = None
    for kh in range(3):
        for kw in range(3):
            t = kh * 3 + kw
            patch = xp[kh:kh + H, kw:kw + W, :].reshape(H * W, C)
            contrib = jnp.dot(patch.astype(jnp.bfloat16),
                              w_ref[t * C:(t + 1) * C, :],
                              preferred_element_type=jnp.float32)
            acc = contrib if acc is None else acc + contrib
    return acc                                                           # (HW, C) f32


# ----------------------------------------------------------------------------
# Fused residual-block kernel (primary path): grid over batch, activation
# stays VMEM-resident through conv1 -> IN1 -> ReLU -> conv2 -> IN2 -> +x.
# ----------------------------------------------------------------------------
def _resblock_kernel(x_ref, w1_ref, w2_ref, sc1_ref, sh1_ref, sc2_ref, sh2_ref,
                     o_ref, *, H, W, C, eps):
    x = x_ref[0].astype(jnp.float32)                       # (H, W, C)

    h = _conv3x3_vmem(x, w1_ref, H, W, C)                  # (HW, C) f32
    h = _inorm(h, sc1_ref[...], sh1_ref[...], eps)
    h = jnp.maximum(h, 0.0)

    h = _conv3x3_vmem(h.reshape(H, W, C), w2_ref, H, W, C)
    h = _inorm(h, sc2_ref[...], sh2_ref[...], eps)

    out = h + x.reshape(H * W, C)                          # residual add
    o_ref[0] = out.reshape(H, W, C).astype(o_ref.dtype)


def _fused_residual_block(x_nhwc, w1, w2, sc1, sh1, sc2, sh2):
    N, H, W, C = x_nhwc.shape
    kernel = functools.partial(_resblock_kernel, H=H, W=W, C=C, eps=_IN_EPS)

    act_spec = pl.BlockSpec((1, H, W, C), lambda n: (n, 0, 0, 0))
    w_spec = pl.BlockSpec((9 * C, C), lambda n: (0, 0))     # constant -> fetched once
    p_spec = pl.BlockSpec((1, C), lambda n: (0, 0))

    return pl.pallas_call(
        kernel,
        out_shape=jax.ShapeDtypeStruct((N, H, W, C), jnp.float32),
        grid_spec=pltpu.PrefetchScalarGridSpec(
            num_scalar_prefetch=0,
            grid=(N,),
            in_specs=[act_spec, w_spec, w_spec, p_spec, p_spec, p_spec, p_spec],
            out_specs=act_spec,
        ),
        compiler_params=pltpu.CompilerParams(
            dimension_semantics=("parallel",),
            vmem_limit_bytes=_VMEM_LIMIT),
    )(x_nhwc, w1, w2, sc1, sh1, sc2, sh2)


def _fused_fits(H, W, C):
    act = H * W * C * 4                       # one f32 activation plane
    w_bytes = 2 * 9 * C * C * 2               # both bf16 weight matrices
    # ~2x double-buffered in/out blocks + ~8 activation-sized temporaries.
    return 12 * act + 2 * w_bytes <= _FUSED_BUDGET


# ----------------------------------------------------------------------------
# Fallback path for activations too large to keep VMEM-resident:
# tiled bf16 MXU matmul (f32 scratch accumulator, bf16 output) + NHWC IN kernel
# ----------------------------------------------------------------------------
def _matmul_kernel(a_ref, b_ref, o_ref, acc_ref):
    k = pl.program_id(2)

    @pl.when(k == 0)
    def _():
        acc_ref[...] = jnp.zeros_like(acc_ref)

    acc_ref[...] += jnp.dot(a_ref[...], b_ref[...],
                            preferred_element_type=jnp.float32)

    @pl.when(k == pl.num_programs(2) - 1)
    def _():
        o_ref[...] = acc_ref[...].astype(o_ref.dtype)


def matmul_bf16(a, b, out_dtype=jnp.bfloat16):
    """a:(M,K) bf16, b:(K,N) bf16 -> (M,N) out_dtype; f32 accumulation in VMEM."""
    M, K = a.shape
    K2, N = b.shape
    assert K == K2, (a.shape, b.shape)

    tn = _pick_tile(N, 256, 128)
    tk = _pick_tile(K, 512, 128)
    tm = _pick_tile(M, 512, 16)          # 16-aligned: clean bf16 sublane packing
    # v7x megacore: make sure the 'parallel' grid axes have >= 2 points.
    if M >= 64 and (_round_up(M, tm) // tm) * (_round_up(N, tn) // tn) < 2:
        tm = _round_up((M + 1) // 2, 16)

    Mp, Kp, Np = _round_up(M, tm), _round_up(K, tk), _round_up(N, tn)
    if (Mp, Kp) != (M, K):
        a = jnp.pad(a, ((0, Mp - M), (0, Kp - K)))
    if (Kp, Np) != (K, N):
        b = jnp.pad(b, ((0, Kp - K), (0, Np - N)))

    out = pl.pallas_call(
        _matmul_kernel,
        out_shape=jax.ShapeDtypeStruct((Mp, Np), out_dtype),
        grid_spec=pltpu.PrefetchScalarGridSpec(
            num_scalar_prefetch=0,
            grid=(Mp // tm, Np // tn, Kp // tk),
            in_specs=[
                pl.BlockSpec((tm, tk), lambda i, j, k: (i, k)),
                pl.BlockSpec((tk, tn), lambda i, j, k: (k, j)),
            ],
            out_specs=pl.BlockSpec((tm, tn), lambda i, j, k: (i, j)),
            scratch_shapes=[pltpu.VMEM((tm, tn), jnp.float32)],
        ),
        compiler_params=pltpu.CompilerParams(
            dimension_semantics=("parallel", "parallel", "arbitrary"),
            vmem_limit_bytes=_VMEM_LIMIT),
    )(a, b)

    if (Mp, Np) != (M, N):
        out = out[:M, :N]
    return out


def _in_compute(x_ref, sc_ref, sh_ref, r_ref, o_ref, *, relu, eps):
    y = x_ref[0].astype(jnp.float32)                        # (HW, ct)
    y = _inorm(y, sc_ref[...], sh_ref[...], eps)
    if r_ref is not None:
        y = y + r_ref[0].astype(jnp.float32)
    if relu:
        y = jnp.maximum(y, 0.0)
    o_ref[0] = y


def _in_kernel(x_ref, sc_ref, sh_ref, o_ref, *, relu, eps):
    _in_compute(x_ref, sc_ref, sh_ref, None, o_ref, relu=relu, eps=eps)


def _in_res_kernel(x_ref, sc_ref, sh_ref, r_ref, o_ref, *, relu, eps):
    _in_compute(x_ref, sc_ref, sh_ref, r_ref, o_ref, relu=relu, eps=eps)


def instance_norm_nhwc(x, scale, shift, residual=None, relu=False, eps=_IN_EPS):
    """InstanceNorm over spatial dims of an NHWC tensor, optional +res / ReLU."""
    N, H, W, C = x.shape
    HW = H * W
    x3 = x.reshape(N, HW, C)
    sc = scale.reshape(1, C).astype(jnp.float32)
    sh = shift.reshape(1, C).astype(jnp.float32)

    # 128-lane channel tiles whenever possible -> (N, C/128) parallel grid
    # points (megacore sharding) and smaller resident blocks.
    ct = 128 if C % 128 == 0 else C
    grid = (N, C // ct)
    # TODO(synk): for very large H*W add an 'arbitrary' spatial axis that
    # accumulates sum / sum-of-squares in scratch and normalizes in a second
    # pass, so resident blocks stay under v7x's 64 MiB VMEM.

    x_spec = pl.BlockSpec((1, HW, ct), lambda n, j: (n, 0, j))
    p_spec = pl.BlockSpec((1, ct), lambda n, j: (0, j))

    args = [x3, sc, sh]
    in_specs = [x_spec, p_spec, p_spec]
    if residual is not None:
        args.append(residual.reshape(N, HW, C))
        in_specs.append(pl.BlockSpec((1, HW, ct), lambda n, j: (n, 0, j)))
        kernel = functools.partial(_in_res_kernel, relu=relu, eps=eps)
    else:
        kernel = functools.partial(_in_kernel, relu=relu, eps=eps)

    out = pl.pallas_call(
        kernel,
        out_shape=jax.ShapeDtypeStruct((N, HW, C), jnp.float32),
        grid_spec=pltpu.PrefetchScalarGridSpec(
            num_scalar_prefetch=0,
            grid=grid,
            in_specs=in_specs,
            out_specs=x_spec,
        ),
        compiler_params=pltpu.CompilerParams(
            dimension_semantics=("parallel", "parallel"),
            vmem_limit_bytes=_VMEM_LIMIT),
    )(*args)
    return out.reshape(N, H, W, C)


def conv3x3_reflect(x_nhwc, w_oihw):
    """Fallback conv: ReflectionPad2d(1) + Conv2d(C, Cout, 3).  Bias omitted
    (cancelled exactly by the following InstanceNorm)."""
    # TODO(synk): fold the 9 taps into the matmul grid (shifted-window A blocks
    # via manual DMA) to avoid materializing the 9x patch tensor on this path.
    N, H, W, C = x_nhwc.shape
    Cout = w_oihw.shape[0]

    xp = jnp.pad(x_nhwc.astype(jnp.bfloat16),
                 ((0, 0), (1, 1), (1, 1), (0, 0)), mode="reflect")
    cols = [xp[:, kh:kh + H, kw:kw + W, :] for kh in range(3) for kw in range(3)]
    patches = jnp.concatenate(cols, axis=-1).reshape(N * H * W, 9 * C)

    w2 = jnp.transpose(w_oihw, (2, 3, 1, 0)).reshape(9 * C, Cout).astype(jnp.bfloat16)
    out = matmul_bf16(patches, w2, out_dtype=jnp.bfloat16)   # bf16 handoff to IN
    return out.reshape(N, H, W, Cout)


# ----------------------------------------------------------------------------
# ResidualBlock forward
# ----------------------------------------------------------------------------
def residual_block_forward(x_nchw, p):
    x = jnp.transpose(x_nchw, (0, 2, 3, 1)).astype(jnp.float32)   # NCHW -> NHWC
    N, H, W, C = x.shape

    if _fused_fits(H, W, C):
        w1 = jnp.transpose(p["w1"], (2, 3, 1, 0)).reshape(9 * C, C).astype(jnp.bfloat16)
        w2 = jnp.transpose(p["w2"], (2, 3, 1, 0)).reshape(9 * C, C).astype(jnp.bfloat16)
        out = _fused_residual_block(
            x, w1, w2,
            p["in1_s"].reshape(1, C).astype(jnp.float32),
            p["in1_b"].reshape(1, C).astype(jnp.float32),
            p["in2_s"].reshape(1, C).astype(jnp.float32),
            p["in2_b"].reshape(1, C).astype(jnp.float32))
    else:
        h = conv3x3_reflect(x, p["w1"])
        h = instance_norm_nhwc(h, p["in1_s"], p["in1_b"], relu=True)
        h = conv3x3_reflect(h, p["w2"])
        out = instance_norm_nhwc(h, p["in2_s"], p["in2_b"], residual=x, relu=False)

    return jnp.transpose(out, (0, 3, 1, 2))                       # NHWC -> NCHW


def init_params(key, dim):
    k1, k2, k3, k4, k5, k6 = jax.random.split(key, 6)
    return {
        "w1": jax.random.normal(k1, (dim, dim, 3, 3), jnp.float32) * 0.05,
        "w2": jax.random.normal(k2, (dim, dim, 3, 3), jnp.float32) * 0.05,
        # Conv biases exist in the PyTorch module but are mathematically
        # cancelled by the following InstanceNorm, so the forward skips them.
        "b1": jax.random.normal(k3, (dim,), jnp.float32) * 0.01,
        "b2": jax.random.normal(k4, (dim,), jnp.float32) * 0.01,
        "in1_s": jax.random.uniform(k5, (dim,), jnp.float32),
        "in1_b": jnp.zeros((dim,), jnp.float32),
        "in2_s": jax.random.uniform(k6, (dim,), jnp.float32),
        "in2_b": jnp.zeros((dim,), jnp.float32),
    }


def _reference_forward(x_nchw, p, eps=_IN_EPS):
    """Pure-JAX f32 reference mirroring the PyTorch module (bias included)."""
    x = x_nchw.astype(jnp.float32)

    def conv(y, w, b):
        yp = jnp.pad(y, ((0, 0), (0, 0), (1, 1), (1, 1)), mode="reflect")
        out = jax.lax.conv_general_dilated(
            yp, w, (1, 1), "VALID", dimension_numbers=("NCHW", "OIHW", "NCHW"))
        return out + b[None, :, None, None]

    def inorm(y, s, sh):
        mean = jnp.mean(y, axis=(2, 3), keepdims=True)
        var = jnp.mean((y - mean) ** 2, axis=(2, 3), keepdims=True)
        return ((y - mean) * jax.lax.rsqrt(var + eps) * s[None, :, None, None]
                + sh[None, :, None, None])

    h = jnp.maximum(inorm(conv(x, p["w1"], p["b1"]), p["in1_s"], p["in1_b"]), 0.0)
    h = inorm(conv(h, p["w2"], p["b2"]), p["in2_s"], p["in2_b"])
    return h + x


if __name__ == "__main__":
    key = jax.random.PRNGKey(0)
    k_params, k_input = jax.random.split(key)

    batch, dim, spatial = 2, 128, 16     # dim = ngf*4 of the generator's blocks
    params = init_params(k_params, dim)
    x = jax.random.normal(k_input, (batch, dim, spatial, spatial), jnp.float32)

    fwd = jax.jit(residual_block_forward)
    out = jax.block_until_ready(fwd(x, params))

    assert out.shape == (batch, dim, spatial, spatial), out.shape
    assert bool(jnp.all(jnp.isfinite(out)))

    # Correctness vs. a pure-JAX f32 reference (tolerance covers bf16 MXU inputs).
    ref = _reference_forward(x, params)
    max_err = float(jnp.max(jnp.abs(out - ref)))
    assert max_err < 0.2, max_err

    print("KERNEL_OK")
</pallas_src>

<mosaic_0001>
module attributes {stable_mosaic.version = 11 : i64} {
  func.func @_resblock_kernel(%arg0: i32, %arg1: memref<1x16x16x128xf32, #tpu.memory_space<vmem>>, %arg2: memref<1152x128xbf16, #tpu.memory_space<vmem>>, %arg3: memref<1152x128xbf16, #tpu.memory_space<vmem>>, %arg4: memref<1x128xf32, #tpu.memory_space<vmem>>, %arg5: memref<1x128xf32, #tpu.memory_space<vmem>>, %arg6: memref<1x128xf32, #tpu.memory_space<vmem>>, %arg7: memref<1x128xf32, #tpu.memory_space<vmem>>, %arg8: memref<1x16x16x128xf32, #tpu.memory_space<vmem>>) attributes {dimension_semantics = [#tpu.dimension_semantics<parallel>], iteration_bounds = array<i64: 2>, scalar_prefetch = 0 : i64, scratch_operands = 0 : i64, tpu.core_type = #tpu.core_type<tc>, window_params = [{transform_indices = @transform_0, window_bounds = array<i64: 1, 16, 16, 128>}, {pipeline_mode = #tpu.pipeline_mode<synchronous>, transform_indices = @transform_1, window_bounds = array<i64: 1152, 128>}, {pipeline_mode = #tpu.pipeline_mode<synchronous>, transform_indices = @transform_2, window_bounds = array<i64: 1152, 128>}, {pipeline_mode = #tpu.pipeline_mode<synchronous>, transform_indices = @transform_3, window_bounds = array<i64: 1, 128>}, {pipeline_mode = #tpu.pipeline_mode<synchronous>, transform_indices = @transform_4, window_bounds = array<i64: 1, 128>}, {pipeline_mode = #tpu.pipeline_mode<synchronous>, transform_indices = @transform_5, window_bounds = array<i64: 1, 128>}, {pipeline_mode = #tpu.pipeline_mode<synchronous>, transform_indices = @transform_6, window_bounds = array<i64: 1, 128>}, {transform_indices = @transform_7, window_bounds = array<i64: 1, 16, 16, 128>}]} {
    %c0 = arith.constant 0 : index
    %c0_0 = arith.constant 0 : index
    %c0_1 = arith.constant 0 : index
    %c0_2 = arith.constant 0 : index
    %0 = vector.load %arg1[%c0, %c0_0, %c0_1, %c0_2] : memref<1x16x16x128xf32, #tpu.memory_space<vmem>>, vector<1x16x16x128xf32>
    %1 = vector.shape_cast %0 : vector<1x16x16x128xf32> to vector<16x16x128xf32>
    %2 = vector.extract_strided_slice %1 {offsets = [1, 0, 0], sizes = [1, 16, 128], strides = [1, 1, 1]} : vector<16x16x128xf32> to vector<1x16x128xf32>
    %3 = vector.extract_strided_slice %1 {offsets = [14, 0, 0], sizes = [1, 16, 128], strides = [1, 1, 1]} : vector<16x16x128xf32> to vector<1x16x128xf32>
    %4 = tpu.concatenate %2, %1, %3 in 0 : vector<1x16x128xf32>, vector<16x16x128xf32>, vector<1x16x128xf32> -> vector<18x16x128xf32>
    %5 = vector.extract_strided_slice %4 {offsets = [0, 1, 0], sizes = [18, 1, 128], strides = [1, 1, 1]} : vector<18x16x128xf32> to vector<18x1x128xf32>
    %6 = vector.extract_strided_slice %4 {offsets = [0, 14, 0], sizes = [18, 1, 128], strides = [1, 1, 1]} : vector<18x16x128xf32> to vector<18x1x128xf32>
    %7 = tpu.concatenate %5, %4, %6 in 1 : vector<18x1x128xf32>, vector<18x16x128xf32>, vector<18x1x128xf32> -> vector<18x18x128xf32>
    %8 = vector.extract_strided_slice %7 {offsets = [0, 0, 0], sizes = [16, 16, 128], strides = [1, 1, 1]} : vector<18x18x128xf32> to vector<16x16x128xf32>
    %9 = vector.shape_cast %8 : vector<16x16x128xf32> to vector<256x128xf32>
    %10 = arith.truncf %9 : vector<256x128xf32> to vector<256x128xbf16>
    %c0_3 = arith.constant 0 : index
    %c0_4 = arith.constant 0 : index
    %11 = vector.load %arg2[%c0_3, %c0_4] : memref<1152x128xbf16, #tpu.memory_space<vmem>>, vector<128x128xbf16>
    %cst = arith.constant dense<0.000000e+00> : vector<256x128xf32>
    %12 = tpu.matmul %10, %11, %cst {dimension_numbers = #tpu.dot_dimension_numbers<[1], [0], [0], [1], [0, 0, 1, 1], [], []>} : vector<256x128xbf16>, vector<128x128xbf16>, vector<256x128xf32> -> vector<256x128xf32>
    %13 = vector.extract_strided_slice %7 {offsets = [0, 1, 0], sizes = [16, 16, 128], strides = [1, 1, 1]} : vector<18x18x128xf32> to vector<16x16x128xf32>
    %14 = vector.shape_cast %13 : vector<16x16x128xf32> to vector<256x128xf32>
    %15 = arith.truncf %14 : vector<256x128xf32> to vector<256x128xbf16>
    %c128 = arith.constant 128 : index
    %c0_5 = arith.constant 0 : index
    %16 = vector.load %arg2[%c128, %c0_5] : memref<1152x128xbf16, #tpu.memory_space<vmem>>, vector<128x128xbf16>
    %cst_6 = arith.constant dense<0.000000e+00> : vector<256x128xf32>
    %17 = tpu.matmul %15, %16, %cst_6 {dimension_numbers = #tpu.dot_dimension_numbers<[1], [0], [0], [1], [0, 0, 1, 1], [], []>} : vector<256x128xbf16>, vector<128x128xbf16>, vector<256x128xf32> -> vector<256x128xf32>
    %18 = arith.addf %12, %17 : vector<256x128xf32>
    %19 = vector.extract_strided_slice %7 {offsets = [0, 2, 0], sizes = [16, 16, 128], strides = [1, 1, 1]} : vector<18x18x128xf32> to vector<16x16x128xf32>
    %20 = vector.shape_cast %19 : vector<16x16x128xf32> to vector<256x128xf32>
    %21 = arith.truncf %20 : vector<256x128xf32> to vector<256x128xbf16>
    %c256 = arith.constant 256 : index
    %c0_7 = arith.constant 0 : index
    %22 = vector.load %arg2[%c256, %c0_7] : memref<1152x128xbf16, #tpu.memory_space<vmem>>, vector<128x128xbf16>
    %cst_8 = arith.constant dense<0.000000e+00> : vector<256x128xf32>
    %23 = tpu.matmul %21, %22, %cst_8 {dimension_numbers = #tpu.dot_dimension_numbers<[1], [0], [0], [1], [0, 0, 1, 1], [], []>} : vector<256x128xbf16>, vector<128x128xbf16>, vector<256x128xf32> -> vector<256x128xf32>
    %24 = arith.addf %18, %23 : vector<256x128xf32>
    %25 = vector.extract_strided_slice %7 {offsets = [1, 0, 0], sizes = [16, 16, 128], strides = [1, 1, 1]} : vector<18x18x128xf32> to vector<16x16x128xf32>
    %26 = vector.shape_cast %25 : vector<16x16x128xf32> to vector<256x128xf32>
    %27 = arith.truncf %26 : vector<256x128xf32> to vector<256x128xbf16>
    %c384 = arith.constant 384 : index
    %c0_9 = arith.constant 0 : index
    %28 = vector.load %arg2[%c384, %c0_9] : memref<1152x128xbf16, #tpu.memory_space<vmem>>, vector<128x128xbf16>
    %cst_10 = arith.constant dense<0.000000e+00> : vector<256x128xf32>
    %29 = tpu.matmul %27, %28, %cst_10 {dimension_numbers = #tpu.dot_dimension_numbers<[1], [0], [0], [1], [0, 0, 1, 1], [], []>} : vector<256x128xbf16>, vector<128x128xbf16>, vector<256x128xf32> -> vector<256x128xf32>
    %30 = arith.addf %24, %29 : vector<256x128xf32>
    %31 = vector.extract_strided_slice %7 {offsets = [1, 1, 0], sizes = [16, 16, 128], strides = [1, 1, 1]} : vector<18x18x128xf32> to vector<16x16x128xf32>
    %32 = vector.shape_cast %31 : vector<16x16x128xf32> to vector<256x128xf32>
    %33 = arith.truncf %32 : vector<256x128xf32> to vector<256x128xbf16>
    %c512 = arith.constant 512 : index
    %c0_11 = arith.constant 0 : index
    %34 = vector.load %arg2[%c512, %c0_11] : memref<1152x128xbf16, #tpu.memory_space<vmem>>, vector<128x128xbf16>
    %cst_12 = arith.constant dense<0.000000e+00> : vector<256x128xf32>
    %35 = tpu.matmul %33, %34, %cst_12 {dimension_numbers = #tpu.dot_dimension_numbers<[1], [0], [0], [1], [0, 0, 1, 1], [], []>} : vector<256x128xbf16>, vector<128x128xbf16>, vector<256x128xf32> -> vector<256x128xf32>
    %36 = arith.addf %30, %35 : vector<256x128xf32>
    %37 = vector.extract_strided_slice %7 {offsets = [1, 2, 0], sizes = [16, 16, 128], strides = [1, 1, 1]} : vector<18x18x128xf32> to vector<16x16x128xf32>
    %38 = vector.shape_cast %37 : vector<16x16x128xf32> to vector<256x128xf32>
    %39 = arith.truncf %38 : vector<256x128xf32> to vector<256x128xbf16>
    %c640 = arith.constant 640 : index
    %c0_13 = arith.constant 0 : index
    %40 = vector.load %arg2[%c640, %c0_13] : memref<1152x128xbf16, #tpu.memory_space<vmem>>, vector<128x128xbf16>
    %cst_14 = arith.constant dense<0.000000e+00> : vector<256x128xf32>
    %41 = tpu.matmul %39, %40, %cst_14 {dimension_numbers = #tpu.dot_dimension_numbers<[1], [0], [0], [1], [0, 0, 1, 1], [], []>} : vector<256x128xbf16>, vector<128x128xbf16>, vector<256x128xf32> -> vector<256x128xf32>
    %42 = arith.addf %36, %41 : vector<256x128xf32>
    %43 = vector.extract_strided_slice %7 {offsets = [2, 0, 0], sizes = [16, 16, 128], strides = [1, 1, 1]} : vector<18x18x128xf32> to vector<16x16x128xf32>
    %44 = vector.shape_cast %43 : vector<16x16x128xf32> to vector<256x128xf32>
    %45 = arith.truncf %44 : vector<256x128xf32> to vector<256x128xbf16>
    %c768 = arith.constant 768 : index
    %c0_15 = arith.constant 0 : index
    %46 = vector.load %arg2[%c768, %c0_15] : memref<1152x128xbf16, #tpu.memory_space<vmem>>, vector<128x128xbf16>
    %cst_16 = arith.constant dense<0.000000e+00> : vector<256x128xf32>
    %47 = tpu.matmul %45, %46, %cst_16 {dimension_numbers = #tpu.dot_dimension_numbers<[1], [0], [0], [1], [0, 0, 1, 1], [], []>} : vector<256x128xbf16>, vector<128x128xbf16>, vector<256x128xf32> -> vector<256x128xf32>
    %48 = arith.addf %42, %47 : vector<256x128xf32>
    %49 = vector.extract_strided_slice %7 {offsets = [2, 1, 0], sizes = [16, 16, 128], strides = [1, 1, 1]} : vector<18x18x128xf32> to vector<16x16x128xf32>
    %50 = vector.shape_cast %49 : vector<16x16x128xf32> to vector<256x128xf32>
    %51 = arith.truncf %50 : vector<256x128xf32> to vector<256x128xbf16>
    %c896 = arith.constant 896 : index
    %c0_17 = arith.constant 0 : index
    %52 = vector.load %arg2[%c896, %c0_17] : memref<1152x128xbf16, #tpu.memory_space<vmem>>, vector<128x128xbf16>
    %cst_18 = arith.constant dense<0.000000e+00> : vector<256x128xf32>
    %53 = tpu.matmul %51, %52, %cst_18 {dimension_numbers = #tpu.dot_dimension_numbers<[1], [0], [0], [1], [0, 0, 1, 1], [], []>} : vector<256x128xbf16>, vector<128x128xbf16>, vector<256x128xf32> -> vector<256x128xf32>
    %54 = arith.addf %48, %53 : vector<256x128xf32>
    %55 = vector.extract_strided_slice %7 {offsets = [2, 2, 0], sizes = [16, 16, 128], strides = [1, 1, 1]} : vector<18x18x128xf32> to vector<16x16x128xf32>
    %56 = vector.shape_cast %55 : vector<16x16x128xf32> to vector<256x128xf32>
    %57 = arith.truncf %56 : vector<256x128xf32> to vector<256x128xbf16>
    %c1024 = arith.constant 1024 : index
    %c0_19 = arith.constant 0 : index
    %58 = vector.load %arg2[%c1024, %c0_19] : memref<1152x128xbf16, #tpu.memory_space<vmem>>, vector<128x128xbf16>
    %cst_20 = arith.constant dense<0.000000e+00> : vector<256x128xf32>
    %59 = tpu.matmul %57, %58, %cst_20 {dimension_numbers = #tpu.dot_dimension_numbers<[1], [0], [0], [1], [0, 0, 1, 1], [], []>} : vector<256x128xbf16>, vector<128x128xbf16>, vector<256x128xf32> -> vector<256x128xf32>
    %60 = arith.addf %54, %59 : vector<256x128xf32>
    %c0_21 = arith.constant 0 : index
    %c0_22 = arith.constant 0 : index
    %61 = vector.load %arg4[%c0_21, %c0_22] : memref<1x128xf32, #tpu.memory_space<vmem>>, vector<1x128xf32>
    %c0_23 = arith.constant 0 : index
    %c0_24 = arith.constant 0 : index
    %62 = vector.load %arg5[%c0_23, %c0_24] : memref<1x128xf32, #tpu.memory_space<vmem>>, vector<1x128xf32>
    %cst_25 = arith.constant dense<0.000000e+00> : vector<128xf32>
    %63 = vector.multi_reduction <add>, %60, %cst_25 [0] : vector<256x128xf32> to vector<128xf32>
    %64 = vector.shape_cast %63 : vector<128xf32> to vector<1x128xf32>
    %cst_26 = arith.constant 3.906250e-03 : f32
    %65 = vector.broadcast %cst_26 : f32 to vector<1x128xf32>
    %66 = arith.mulf %64, %65 : vector<1x128xf32>
    %67 = arith.mulf %60, %60 : vector<256x128xf32>
    %cst_27 = arith.constant dense<0.000000e+00> : vector<128xf32>
    %68 = vector.multi_reduction <add>, %67, %cst_27 [0] : vector<256x128xf32> to vector<128xf32>
    %69 = vector.shape_cast %68 : vector<128xf32> to vector<1x128xf32>
    %cst_28 = arith.constant 3.906250e-03 : f32
    %70 = vector.broadcast %cst_28 : f32 to vector<1x128xf32>
    %71 = arith.mulf %69, %70 : vector<1x128xf32>
    %72 = arith.mulf %66, %66 : vector<1x128xf32>
    %73 = arith.subf %71, %72 : vector<1x128xf32>
    %cst_29 = arith.constant 0.000000e+00 : f32
    %74 = vector.broadcast %cst_29 : f32 to vector<1x128xf32>
    %75 = arith.maximumf %73, %74 : vector<1x128xf32>
    %76 = vector.broadcast %66 : vector<1x128xf32> to vector<256x128xf32>
    %77 = arith.subf %60, %76 : vector<256x128xf32>
    %cst_30 = arith.constant 9.99999971E-10 : f32
    %78 = vector.broadcast %cst_30 : f32 to vector<1x128xf32>
    %79 = arith.addf %75, %78 : vector<1x128xf32>
    %80 = math.rsqrt %79 : vector<1x128xf32>
    %81 = vector.broadcast %80 : vector<1x128xf32> to vector<256x128xf32>
    %82 = arith.mulf %77, %81 : vector<256x128xf32>
    %83 = vector.broadcast %61 : vector<1x128xf32> to vector<256x128xf32>
    %84 = arith.mulf %82, %83 : vector<256x128xf32>
    %85 = vector.broadcast %62 : vector<1x128xf32> to vector<256x128xf32>
    %86 = arith.addf %84, %85 : vector<256x128xf32>
    %cst_31 = arith.constant 0.000000e+00 : f32
    %87 = vector.broadcast %cst_31 : f32 to vector<256x128xf32>
    %88 = arith.maximumf %86, %87 : vector<256x128xf32>
    %89 = vector.shape_cast %88 : vector<256x128xf32> to vector<16x16x128xf32>
    %90 = vector.extract_strided_slice %89 {offsets = [1, 0, 0], sizes = [1, 16, 128], strides = [1, 1, 1]} : vector<16x16x128xf32> to vector<1x16x128xf32>
    %91 = vector.extract_strided_slice %89 {offsets = [14, 0, 0], sizes = [1, 16, 128], strides = [1, 1, 1]} : vector<16x16x128xf32> to vector<1x16x128xf32>
    %92 = tpu.concatenate %90, %89, %91 in 0 : vector<1x16x128xf32>, vector<16x16x128xf32>, vector<1x16x128xf32> -> vector<18x16x128xf32>
    %93 = vector.extract_strided_slice %92 {offsets = [0, 1, 0], sizes = [18, 1, 128], strides = [1, 1, 1]} : vector<18x16x128xf32> to vector<18x1x128xf32>
    %94 = vector.extract_strided_slice %92 {offsets = [0, 14, 0], sizes = [18, 1, 128], strides = [1, 1, 1]} : vector<18x16x128xf32> to vector<18x1x128xf32>
    %95 = tpu.concatenate %93, %92, %94 in 1 : vector<18x1x128xf32>, vector<18x16x128xf32>, vector<18x1x128xf32> -> vector<18x18x128xf32>
    %96 = vector.extract_strided_slice %95 {offsets = [0, 0, 0], sizes = [16, 16, 128], strides = [1, 1, 1]} : vector<18x18x128xf32> to vector<16x16x128xf32>
    %97 = vector.shape_cast %96 : vector<16x16x128xf32> to vector<256x128xf32>
    %98 = arith.truncf %97 : vector<256x128xf32> to vector<256x128xbf16>
    %c0_32 = arith.constant 0 : index
    %c0_33 = arith.constant 0 : index
    %99 = vector.load %arg3[%c0_32, %c0_33] : memref<1152x128xbf16, #tpu.memory_space<vmem>>, vector<128x128xbf16>
    %cst_34 = arith.constant dense<0.000000e+00> : vector<256x128xf32>
    %100 = tpu.matmul %98, %99, %cst_34 {dimension_numbers = #tpu.dot_dimension_numbers<[1], [0], [0], [1], [0, 0, 1, 1], [], []>} : vector<256x128xbf16>, vector<128x128xbf16>, vector<256x128xf32> -> vector<256x128xf32>
    %101 = vector.extract_strided_slice %95 {offsets = [0, 1, 0], sizes = [16, 16, 128], strides = [1, 1, 1]} : vector<18x18x128xf32> to vector<16x16x128xf32>
    %102 = vector.shape_cast %101 : vector<16x16x128xf32> to vector<256x128xf32>
    %103 = arith.truncf %102 : vector<256x128xf32> to vector<256x128xbf16>
    %c128_35 = arith.constant 128 : index
    %c0_36 = arith.constant 0 : index
    %104 = vector.load %arg3[%c128_35, %c0_36] : memref<1152x128xbf16, #tpu.memory_space<vmem>>, vector<128x128xbf16>
    %cst_37 = arith.constant dense<0.000000e+00> : vector<256x128xf32>
    %105 = tpu.matmul %103, %104, %cst_37 {dimension_numbers = #tpu.dot_dimension_numbers<[1], [0], [0], [1], [0, 0, 1, 1], [], []>} : vector<256x128xbf16>, vector<128x128xbf16>, vector<256x128xf32> -> vector<256x128xf32>
    %106 = arith.addf %100, %105 : vector<256x128xf32>
    %107 = vector.extract_strided_slice %95 {offsets = [0, 2, 0], sizes = [16, 16, 128], strides = [1, 1, 1]} : vector<18x18x128xf32> to vector<16x16x128xf32>
    %108 = vector.shape_cast %107 : vector<16x16x128xf32> to vector<256x128xf32>
    %109 = arith.truncf %108 : vector<256x128xf32> to vector<256x128xbf16>
    %c256_38 = arith.constant 256 : index
    %c0_39 = arith.constant 0 : index
    %110 = vector.load %arg3[%c256_38, %c0_39] : memref<1152x128xbf16, #tpu.memory_space<vmem>>, vector<128x128xbf16>
    %cst_40 = arith.constant dense<0.000000e+00> : vector<256x128xf32>
    %111 = tpu.matmul %109, %110, %cst_40 {dimension_numbers = #tpu.dot_dimension_numbers<[1], [0], [0], [1], [0, 0, 1, 1], [], []>} : vector<256x128xbf16>, vector<128x128xbf16>, vector<256x128xf32> -> vector<256x128xf32>
    %112 = arith.addf %106, %111 : vector<256x128xf32>
    %113 = vector.extract_strided_slice %95 {offsets = [1, 0, 0], sizes = [16, 16, 128], strides = [1, 1, 1]} : vector<18x18x128xf32> to vector<16x16x128xf32>
    %114 = vector.shape_cast %113 : vector<16x16x128xf32> to vector<256x128xf32>
    %115 = arith.truncf %114 : vector<256x128xf32> to vector<256x128xbf16>
    %c384_41 = arith.constant 384 : index
    %c0_42 = arith.constant 0 : index
    %116 = vector.load %arg3[%c384_41, %c0_42] : memref<1152x128xbf16, #tpu.memory_space<vmem>>, vector<128x128xbf16>
    %cst_43 = arith.constant dense<0.000000e+00> : vector<256x128xf32>
    %117 = tpu.matmul %115, %116, %cst_43 {dimension_numbers = #tpu.dot_dimension_numbers<[1], [0], [0], [1], [0, 0, 1, 1], [], []>} : vector<256x128xbf16>, vector<128x128xbf16>, vector<256x128xf32> -> vector<256x128xf32>
    %118 = arith.addf %112, %117 : vector<256x128xf32>
    %119 = vector.extract_strided_slice %95 {offsets = [1, 1, 0], sizes = [16, 16, 128], strides = [1, 1, 1]} : vector<18x18x128xf32> to vector<16x16x128xf32>
    %120 = vector.shape_cast %119 : vector<16x16x128xf32> to vector<256x128xf32>
    %121 = arith.truncf %120 : vector<256x128xf32> to vector<256x128xbf16>
    %c512_44 = arith.constant 512 : index
    %c0_45 = arith.constant 0 : index
    %122 = vector.load %arg3[%c512_44, %c0_45] : memref<1152x128xbf16, #tpu.memory_space<vmem>>, vector<128x128xbf16>
    %cst_46 = arith.constant dense<0.000000e+00> : vector<256x128xf32>
    %123 = tpu.matmul %121, %122, %cst_46 {dimension_numbers = #tpu.dot_dimension_numbers<[1], [0], [0], [1], [0, 0, 1, 1], [], []>} : vector<256x128xbf16>, vector<128x128xbf16>, vector<256x128xf32> -> vector<256x128xf32>
    %124 = arith.addf %118, %123 : vector<256x128xf32>
    %125 = vector.extract_strided_slice %95 {offsets = [1, 2, 0], sizes = [16, 16, 128], strides = [1, 1, 1]} : vector<18x18x128xf32> to vector<16x16x128xf32>
    %126 = vector.shape_cast %125 : vector<16x16x128xf32> to vector<256x128xf32>
    %127 = arith.truncf %126 : vector<256x128xf32> to vector<256x128xbf16>
    %c640_47 = arith.constant 640 : index
    %c0_48 = arith.constant 0 : index
    %128 = vector.load %arg3[%c640_47, %c0_48] : memref<1152x128xbf16, #tpu.memory_space<vmem>>, vector<128x128xbf16>
    %cst_49 = arith.constant dense<0.000000e+00> : vector<256x128xf32>
    %129 = tpu.matmul %127, %128, %cst_49 {dimension_numbers = #tpu.dot_dimension_numbers<[1], [0], [0], [1], [0, 0, 1, 1], [], []>} : vector<256x128xbf16>, vector<128x128xbf16>, vector<256x128xf32> -> vector<256x128xf32>
    %130 = arith.addf %124, %129 : vector<256x128xf32>
    %131 = vector.extract_strided_slice %95 {offsets = [2, 0, 0], sizes = [16, 16, 128], strides = [1, 1, 1]} : vector<18x18x128xf32> to vector<16x16x128xf32>
    %132 = vector.shape_cast %131 : vector<16x16x128xf32> to vector<256x128xf32>
    %133 = arith.truncf %132 : vector<256x128xf32> to vector<256x128xbf16>
    %c768_50 = arith.constant 768 : index
    %c0_51 = arith.constant 0 : index
    %134 = vector.load %arg3[%c768_50, %c0_51] : memref<1152x128xbf16, #tpu.memory_space<vmem>>, vector<128x128xbf16>
    %cst_52 = arith.constant dense<0.000000e+00> : vector<256x128xf32>
    %135 = tpu.matmul %133, %134, %cst_52 {dimension_numbers = #tpu.dot_dimension_numbers<[1], [0], [0], [1], [0, 0, 1, 1], [], []>} : vector<256x128xbf16>, vector<128x128xbf16>, vector<256x128xf32> -> vector<256x128xf32>
    %136 = arith.addf %130, %135 : vector<256x128xf32>
    %137 = vector.extract_strided_slice %95 {offsets = [2, 1, 0], sizes = [16, 16, 128], strides = [1, 1, 1]} : vector<18x18x128xf32> to vector<16x16x128xf32>
    %138 = vector.shape_cast %137 : vector<16x16x128xf32> to vector<256x128xf32>
    %139 = arith.truncf %138 : vector<256x128xf32> to vector<256x128xbf16>
    %c896_53 = arith.constant 896 : index
    %c0_54 = arith.constant 0 : index
    %140 = vector.load %arg3[%c896_53, %c0_54] : memref<1152x128xbf16, #tpu.memory_space<vmem>>, vector<128x128xbf16>
    %cst_55 = arith.constant dense<0.000000e+00> : vector<256x128xf32>
    %141 = tpu.matmul %139, %140, %cst_55 {dimension_numbers = #tpu.dot_dimension_numbers<[1], [0], [0], [1], [0, 0, 1, 1], [], []>} : vector<256x128xbf16>, vector<128x128xbf16>, vector<256x128xf32> -> vector<256x128xf32>
    %142 = arith.addf %136, %141 : vector<256x128xf32>
    %143 = vector.extract_strided_slice %95 {offsets = [2, 2, 0], sizes = [16, 16, 128], strides = [1, 1, 1]} : vector<18x18x128xf32> to vector<16x16x128xf32>
    %144 = vector.shape_cast %143 : vector<16x16x128xf32> to vector<256x128xf32>
    %145 = arith.truncf %144 : vector<256x128xf32> to vector<256x128xbf16>
    %c1024_56 = arith.constant 1024 : index
    %c0_57 = arith.constant 0 : index
    %146 = vector.load %arg3[%c1024_56, %c0_57] : memref<1152x128xbf16, #tpu.memory_space<vmem>>, vector<128x128xbf16>
    %cst_58 = arith.constant dense<0.000000e+00> : vector<256x128xf32>
    %147 = tpu.matmul %145, %146, %cst_58 {dimension_numbers = #tpu.dot_dimension_numbers<[1], [0], [0], [1], [0, 0, 1, 1], [], []>} : vector<256x128xbf16>, vector<128x128xbf16>, vector<256x128xf32> -> vector<256x128xf32>
    %148 = arith.addf %142, %147 : vector<256x128xf32>
    %c0_59 = arith.constant 0 : index
    %c0_60 = arith.constant 0 : index
    %149 = vector.load %arg6[%c0_59, %c0_60] : memref<1x128xf32, #tpu.memory_space<vmem>>, vector<1x128xf32>
    %c0_61 = arith.constant 0 : index
    %c0_62 = arith.constant 0 : index
    %150 = vector.load %arg7[%c0_61, %c0_62] : memref<1x128xf32, #tpu.memory_space<vmem>>, vector<1x128xf32>
    %cst_63 = arith.constant dense<0.000000e+00> : vector<128xf32>
    %151 = vector.multi_reduction <add>, %148, %cst_63 [0] : vector<256x128xf32> to vector<128xf32>
    %152 = vector.shape_cast %151 : vector<128xf32> to vector<1x128xf32>
    %cst_64 = arith.constant 3.906250e-03 : f32
    %153 = vector.broadcast %cst_64 : f32 to vector<1x128xf32>
    %154 = arith.mulf %152, %153 : vector<1x128xf32>
    %155 = arith.mulf %148, %148 : vector<256x128xf32>
    %cst_65 = arith.constant dense<0.000000e+00> : vector<128xf32>
    %156 = vector.multi_reduction <add>, %155, %cst_65 [0] : vector<256x128xf32> to vector<128xf32>
    %157 = vector.shape_cast %156 : vector<128xf32> to vector<1x128xf32>
    %cst_66 = arith.constant 3.906250e-03 : f32
    %158 = vector.broadcast %cst_66 : f32 to vector<1x128xf32>
    %159 = arith.mulf %157, %158 : vector<1x128xf32>
    %160 = arith.mulf %154, %154 : vector<1x128xf32>
    %161 = arith.subf %159, %160 : vector<1x128xf32>
    %cst_67 = arith.constant 0.000000e+00 : f32
    %162 = vector.broadcast %cst_67 : f32 to vector<1x128xf32>
    %163 = arith.maximumf %161, %162 : vector<1x128xf32>
    %164 = vector.broadcast %154 : vector<1x128xf32> to vector<256x128xf32>
    %165 = arith.subf %148, %164 : vector<256x128xf32>
    %cst_68 = arith.constant 9.99999971E-10 : f32
    %166 = vector.broadcast %cst_68 : f32 to vector<1x128xf32>
    %167 = arith.addf %163, %166 : vector<1x128xf32>
    %168 = math.rsqrt %167 : vector<1x128xf32>
    %169 = vector.broadcast %168 : vector<1x128xf32> to vector<256x128xf32>
    %170 = arith.mulf %165, %169 : vector<256x128xf32>
    %171 = vector.broadcast %149 : vector<1x128xf32> to vector<256x128xf32>
    %172 = arith.mulf %170, %171 : vector<256x128xf32>
    %173 = vector.broadcast %150 : vector<1x128xf32> to vector<256x128xf32>
    %174 = arith.addf %172, %173 : vector<256x128xf32>
    %175 = vector.shape_cast %1 : vector<16x16x128xf32> to vector<256x128xf32>
    %176 = arith.addf %174, %175 : vector<256x128xf32>
    %177 = vector.shape_cast %176 : vector<256x128xf32> to vector<16x16x128xf32>
    %c0_69 = arith.constant 0 : index
    %c0_70 = arith.constant 0 : index
    %c0_71 = arith.constant 0 : index
    %c0_72 = arith.constant 0 : index
    %178 = vector.load %arg8[%c0_69, %c0_70, %c0_71, %c0_72] : memref<1x16x16x128xf32, #tpu.memory_space<vmem>>, vector<1x16x16x128xf32>
    %179 = vector.shape_cast %178 : vector<1x16x16x128xf32> to vector<16x16x128xf32>
    %180 = vector.shape_cast %177 : vector<16x16x128xf32> to vector<1x16x16x128xf32>
    tpu.vector_store %arg8[%c0_69, %c0_70, %c0_71, %c0_72], %180 {strides = array<i32>} : memref<1x16x16x128xf32, #tpu.memory_space<vmem>>, vector<1x16x16x128xf32>,
    return
  }
  func.func @transform_0(%arg0: i32) -> (i32, i32, i32, i32) {
    %c0_i32 = arith.constant 0 : i32
    %c0_i32_0 = arith.constant 0 : i32
    %c0_i32_1 = arith.constant 0 : i32
    %c0_i32_2 = arith.constant 0 : i32
    return %arg0, %c0_i32, %c0_i32_0, %c0_i32_1 : i32, i32, i32, i32
  }
  func.func @transform_1(%arg0: i32) -> (i32, i32) {
    %c0_i32 = arith.constant 0 : i32
    %c0_i32_0 = arith.constant 0 : i32
    %c0_i32_1 = arith.constant 0 : i32
    return %c0_i32, %c0_i32_0 : i32, i32
  }
  func.func @transform_2(%arg0: i32) -> (i32, i32) {
    %c0_i32 = arith.constant 0 : i32
    %c0_i32_0 = arith.constant 0 : i32
    %c0_i32_1 = arith.constant 0 : i32
    return %c0_i32, %c0_i32_0 : i32, i32
  }
  func.func @transform_3(%arg0: i32) -> (i32, i32) {
    %c0_i32 = arith.constant 0 : i32
    %c0_i32_0 = arith.constant 0 : i32
    %c0_i32_1 = arith.constant 0 : i32
    return %c0_i32, %c0_i32_0 : i32, i32
  }
  func.func @transform_4(%arg0: i32) -> (i32, i32) {
    %c0_i32 = arith.constant 0 : i32
    %c0_i32_0 = arith.constant 0 : i32
    %c0_i32_1 = arith.constant 0 : i32
    return %c0_i32, %c0_i32_0 : i32, i32
  }
  func.func @transform_5(%arg0: i32) -> (i32, i32) {
    %c0_i32 = arith.constant 0 : i32
    %c0_i32_0 = arith.constant 0 : i32
    %c0_i32_1 = arith.constant 0 : i32
    return %c0_i32, %c0_i32_0 : i32, i32
  }
  func.func @transform_6(%arg0: i32) -> (i32, i32) {
    %c0_i32 = arith.constant 0 : i32
    %c0_i32_0 = arith.constant 0 : i32
    %c0_i32_1 = arith.constant 0 : i32
    return %c0_i32, %c0_i32_0 : i32, i32
  }
  func.func @transform_7(%arg0: i32) -> (i32, i32, i32, i32) {
    %c0_i32 = arith.constant 0 : i32
    %c0_i32_0 = arith.constant 0 : i32
    %c0_i32_1 = arith.constant 0 : i32
    %c0_i32_2 = arith.constant 0 : i32
    return %arg0, %c0_i32, %c0_i32_0, %c0_i32_1 : i32, i32, i32, i32
  }
}

</mosaic_0001>

<llo_original>
// kernel: residual_block_forward.1
$region0: #{residual_block_forward.1}
  #allocation0 [shape = 'u32[]', space=smem, size = 0x4, offset = 0x4, fixed_abs, tag = 'smem constant byte address 0x4 - core index']
  #allocation1 [shape = 'u32[144,128]{1,0:T(1,128)}', space=vmem, size = 0x12000, scoped, tag = 'internal scratch']
  %s0 = inlined_call_operand.vmem [shape: f32[2,16,16,128], index: 0, kind: input, shape index: {}]
  %s1 = inlined_call_operand.vmem [shape: bf16[1152,128], index: 1, kind: input, shape index: {}]
  %s2 = inlined_call_operand.vmem [shape: bf16[1152,128], index: 2, kind: input, shape index: {}]
  %s3 = inlined_call_operand.vmem [shape: f32[1,128], index: 3, kind: input, shape index: {}]
  %s4 = inlined_call_operand.vmem [shape: f32[1,128], index: 4, kind: input, shape index: {}]
  %s5 = inlined_call_operand.vmem [shape: f32[1,128], index: 5, kind: input, shape index: {}]
  %s6 = inlined_call_operand.vmem [shape: f32[1,128], index: 6, kind: input, shape index: {}]
  %s7 = inlined_call_operand.hbm [shape: f32[2,16,16,128], index: 7, kind: output, shape index: {}]
  %s8 = sld [smem:[#allocation0]]
  $region61: #{residual_block_forward.1} parent=0
    _
  %s10 = ssub.s32 1, %s8
  %s11 = scalar_select 0, %s10, %s8
  $region1: #{residual_block_forward.1} parent=0
    #allocation2 [shape = 'u8[262144]{0}', space=vmem, size = 0x40000, scoped, tag = 'output window, operand 0']
    #allocation3 [shape = 's32[2]{0}', space=sflag, size = 0x8, scoped, tag = 'scoped memory for residual_block_forward.1']
    %12 = vsyncpa [#allocation3], 0
    %s13 = scalar_lea.sflag [#allocation3], 1
    %14 = vsyncpa %s13, 0
    loop: start=0, step=1, limit=4
    $region2: #{residual_block_forward.1} parent=1 // loop_pre_header
      _
    $region3: #{residual_block_forward.1} parent=1 // loop_header
      %s16 = sphi 0, %s20
      %p17 = scmp.ge.s32.totalorder %s16, 4
      %s26 = sphi 0, %s28
      %s29 = sphi 0, %s26
      %s30 = sphi 0, %s29
      %s46 = sphi 0, %s30
      %s50 = sphi 0, %s50
      %s52 = sphi 0, %s50
      %s53 = sphi 0, %s52
      %s67 = sphi 0, %s53
      %s71 = sphi 0, %s71
      %s73 = sphi 0, %s71
      %s74 = sphi 0, %s73
      %s88 = sphi 0, %s74
      %s92 = sphi 0, %s92
      %s94 = sphi 0, %s92
      %s95 = sphi 0, %s94
      %s109 = sphi 0, %s95
      %s113 = sphi 0, %s113
      %s115 = sphi 0, %s113
      %s116 = sphi 0, %s115
      %s130 = sphi 0, %s116
      %s134 = sphi 0, %s134
      %s136 = sphi 0, %s134
      %s137 = sphi 0, %s136
      %s151 = sphi 0, %s137
      %s155 = sphi 0, %s155
      %s157 = sphi 0, %s155
      %s158 = sphi 0, %s157
      %s172 = sphi 0, %s158
      %s178 = sphi 0, %s180
      %s181 = sphi 0, %s178
      %s182 = sphi 0, %s181
      %s198 = sphi 0, %s182
    $region4: #{residual_block_forward.1} parent=1 // loop_header_branch
      %19 = sbr.rel (%p17) target = $region8
    $region5: #{residual_block_forward.1} parent=1 // loop_body
      %s21 = ssub.s32 %s16, 1
      %s22 = ssub.s32 %s16, 2
      %s23 = sadd.s32 %s16, 1
      %s24 = ssub.s32 %s16, %s23
      %p25 = scmp.eq.s32.totalorder %s24, 0
      %s27 = sadd.s32 %s26, 1
      %s28 = scalar_select %p25, %s26, %s27
      %p31 = pneg %p25
      %p32 = scmp.eq.s32.totalorder %s16, 1
      %p33 = por %p31, %p32
      %p34 = scmp.ne.s32.totalorder %s26, %s29
      %p35 = scmp.eq.s32.totalorder %s16, 0
      %p36 = por %p34, %p35
      %p37 = scmp.ne.s32.totalorder %s26, %s29
      %p38 = scmp.eq.s32.totalorder %s21, 1
      %p39 = por %p37, %p38
      %p40 = scmp.ne.s32.totalorder %s29, %s30
      %p41 = scmp.eq.s32.totalorder %s21, 0
      %p42 = por %p40, %p41
      %p43 = scmp.ne.s32.totalorder %s29, %s30
      %p44 = scmp.eq.s32.totalorder %s22, 1
      %p45 = por %p43, %p44
      %p47 = scmp.ne.s32.totalorder %s30, %s46
      %p48 = scmp.eq.s32.totalorder %s22, 0
      %p49 = por %p47, %p48
      %s51 = sadd.s32 %s50, 1
      %p54 = scmp.eq.s32.totalorder %s16, 1
      %p55 = scmp.ne.s32.totalorder %s50, %s52
      %p56 = scmp.eq.s32.totalorder %s16, 0
      %p57 = por %p55, %p56
      %p58 = scmp.ne.s32.totalorder %s50, %s52
      %p59 = scmp.eq.s32.totalorder %s21, 1
      %p60 = por %p58, %p59
      %p61 = scmp.ne.s32.totalorder %s52, %s53
      %p62 = scmp.eq.s32.totalorder %s21, 0
      %p63 = por %p61, %p62
      %p64 = scmp.ne.s32.totalorder %s52, %s53
      %p65 = scmp.eq.s32.totalorder %s22, 1
      %p66 = por %p64, %p65
      %p68 = scmp.ne.s32.totalorder %s53, %s67
      %p69 = scmp.eq.s32.totalorder %s22, 0
      %p70 = por %p68, %p69
      %s72 = sadd.s32 %s71, 1
      %p75 = scmp.eq.s32.totalorder %s16, 1
      %p76 = scmp.ne.s32.totalorder %s71, %s73
      %p77 = scmp.eq.s32.totalorder %s16, 0
      %p78 = por %p76, %p77
      %p79 = scmp.ne.s32.totalorder %s71, %s73
      %p80 = scmp.eq.s32.totalorder %s21, 1
      %p81 = por %p79, %p80
      %p82 = scmp.ne.s32.totalorder %s73, %s74
      %p83 = scmp.eq.s32.totalorder %s21, 0
      %p84 = por %p82, %p83
      %p85 = scmp.ne.s32.totalorder %s73, %s74
      %p86 = scmp.eq.s32.totalorder %s22, 1
      %p87 = por %p85, %p86
      %p89 = scmp.ne.s32.totalorder %s74, %s88
      %p90 = scmp.eq.s32.totalorder %s22, 0
      %p91 = por %p89, %p90
      %s93 = sadd.s32 %s92, 1
      %p96 = scmp.eq.s32.totalorder %s16, 1
      %p97 = scmp.ne.s32.totalorder %s92, %s94
      %p98 = scmp.eq.s32.totalorder %s16, 0
      %p99 = por %p97, %p98
      %p100 = scmp.ne.s32.totalorder %s92, %s94
      %p101 = scmp.eq.s32.totalorder %s21, 1
      %p102 = por %p100, %p101
      %p103 = scmp.ne.s32.totalorder %s94, %s95
      %p104 = scmp.eq.s32.totalorder %s21, 0
      %p105 = por %p103, %p104
      %p106 = scmp.ne.s32.totalorder %s94, %s95
      %p107 = scmp.eq.s32.totalorder %s22, 1
      %p108 = por %p106, %p107
      %p110 = scmp.ne.s32.totalorder %s95, %s109
      %p111 = scmp.eq.s32.totalorder %s22, 0
      %p112 = por %p110, %p111
      %s114 = sadd.s32 %s113, 1
      %p117 = scmp.eq.s32.totalorder %s16, 1
      %p118 = scmp.ne.s32.totalorder %s113, %s115
      %p119 = scmp.eq.s32.totalorder %s16, 0
      %p120 = por %p118, %p119
      %p121 = scmp.ne.s32.totalorder %s113, %s115
      %p122 = scmp.eq.s32.totalorder %s21, 1
      %p123 = por %p121, %p122
      %p124 = scmp.ne.s32.totalorder %s115, %s116
      %p125 = scmp.eq.s32.totalorder %s21, 0
      %p126 = por %p124, %p125
      %p127 = scmp.ne.s32.totalorder %s115, %s116
      %p128 = scmp.eq.s32.totalorder %s22, 1
      %p129 = por %p127, %p128
      %p131 = scmp.ne.s32.totalorder %s116, %s130
      %p132 = scmp.eq.s32.totalorder %s22, 0
      %p133 = por %p131, %p132
      %s135 = sadd.s32 %s134, 1
      %p138 = scmp.eq.s32.totalorder %s16, 1
      %p139 = scmp.ne.s32.totalorder %s134, %s136
      %p140 = scmp.eq.s32.totalorder %s16, 0
      %p141 = por %p139, %p140
      %p142 = scmp.ne.s32.totalorder %s134, %s136
      %p143 = scmp.eq.s32.totalorder %s21, 1
      %p144 = por %p142, %p143
      %p145 = scmp.ne.s32.totalorder %s136, %s137
      %p146 = scmp.eq.s32.totalorder %s21, 0
      %p147 = por %p145, %p146
      %p148 = scmp.ne.s32.totalorder %s136, %s137
      %p149 = scmp.eq.s32.totalorder %s22, 1
      %p150 = por %p148, %p149
      %p152 = scmp.ne.s32.totalorder %s137, %s151
      %p153 = scmp.eq.s32.totalorder %s22, 0
      %p154 = por %p152, %p153
      %s156 = sadd.s32 %s155, 1
      %p159 = scmp.eq.s32.totalorder %s16, 1
      %p160 = scmp.ne.s32.totalorder %s155, %s157
      %p161 = scmp.eq.s32.totalorder %s16, 0
      %p162 = por %p160, %p161
      %p163 = scmp.ne.s32.totalorder %s155, %s157
      %p164 = scmp.eq.s32.totalorder %s21, 1
      %p165 = por %p163, %p164
      %p166 = scmp.ne.s32.totalorder %s157, %s158
      %p167 = scmp.eq.s32.totalorder %s21, 0
      %p168 = por %p166, %p167
      %p169 = scmp.ne.s32.totalorder %s157, %s158
      %p170 = scmp.eq.s32.totalorder %s22, 1
      %p171 = por %p169, %p170
      %p173 = scmp.ne.s32.totalorder %s158, %s172
      %p174 = scmp.eq.s32.totalorder %s22, 0
      %p175 = por %p173, %p174
      %s176 = ssub.s32 %s16, %s23
      %p177 = scmp.eq.s32.totalorder %s176, 0
      %s179 = sadd.s32 %s178, 1
      %s180 = scalar_select %p177, %s178, %s179
      %p183 = pneg %p177
      %p184 = scmp.eq.s32.totalorder %s16, 1
      %p185 = por %p183, %p184
      %p186 = scmp.ne.s32.totalorder %s178, %s181
      %p187 = scmp.eq.s32.totalorder %s16, 0
      %p188 = por %p186, %p187
      %p189 = scmp.ne.s32.totalorder %s178, %s181
      %p190 = scmp.eq.s32.totalorder %s21, 1
      %p191 = por %p189, %p190
      %p192 = scmp.ne.s32.totalorder %s181, %s182
      %p193 = scmp.eq.s32.totalorder %s21, 0
      %p194 = por %p192, %p193
      %p195 = scmp.ne.s32.totalorder %s181, %s182
      %p196 = scmp.eq.s32.totalorder %s22, 1
      %p197 = por %p195, %p196
      %p199 = scmp.ne.s32.totalorder %s182, %s198
      %p200 = scmp.eq.s32.totalorder %s22, 0
      %p201 = por %p199, %p200
      %p202 = scmp.le.s32.totalorder 1, %s16
      %p203 = scmp.lt.s32.totalorder %s16, 3
      %p204 = pnand %p202, %p203
      %p205 = pneg %p204
      // Predicated region
      $region9: #{residual_block_forward.1} parent=5 // pred_check
        _
      $region10: #{residual_block_forward.1} parent=5 // pred_check_branch
        %207 = sbr.rel (%p204) target = $region12
      $region11: #{residual_block_forward.1} parent=5 // pred_region
        %s208 = ssub.s32 %s16, 1
        // Predicated region
        $region13: #{residual_block_forward.1} parent=11 // pred_check
          %p209 = pneg %p63
        $region14: #{residual_block_forward.1} parent=11 // pred_check_branch
          %211 = sbr.rel (%p209) target = $region16
        $region15: #{residual_block_forward.1} parent=11 // pred_region
          _
        $region16: #{residual_block_forward.1} parent=11 // pred_fallthru
          _
        // Predicated region
        $region17: #{residual_block_forward.1} parent=11 // pred_check
          %p212 = pneg %p84
        $region18: #{residual_block_forward.1} parent=11 // pred_check_branch
          %214 = sbr.rel (%p212) target = $region20
        $region19: #{residual_block_forward.1} parent=11 // pred_region
          _
        $region20: #{residual_block_forward.1} parent=11 // pred_fallthru
          _
        // Predicated region
        $region21: #{residual_block_forward.1} parent=11 // pred_check
          %p215 = pneg %p105
        $region22: #{residual_block_forward.1} parent=11 // pred_check_branch
          %217 = sbr.rel (%p215) target = $region24
        $region23: #{residual_block_forward.1} parent=11 // pred_region
          _
        $region24: #{residual_block_forward.1} parent=11 // pred_fallthru
          _
        // Predicated region
        $region25: #{residual_block_forward.1} parent=11 // pred_check
          %p218 = pneg %p126
        $region26: #{residual_block_forward.1} parent=11 // pred_check_branch
          %220 = sbr.rel (%p218) target = $region28
        $region27: #{residual_block_forward.1} parent=11 // pred_region
          _
        $region28: #{residual_block_forward.1} parent=11 // pred_fallthru
          _
        // Predicated region
        $region29: #{residual_block_forward.1} parent=11 // pred_check
          %p221 = pneg %p147
        $region30: #{residual_block_forward.1} parent=11 // pred_check_branch
          %223 = sbr.rel (%p221) target = $region32
        $region31: #{residual_block_forward.1} parent=11 // pred_region
          _
        $region32: #{residual_block_forward.1} parent=11 // pred_fallthru
          _
        // Predicated region
        $region33: #{residual_block_forward.1} parent=11 // pred_check
          %p224 = pneg %p168
        $region34: #{residual_block_forward.1} parent=11 // pred_check_branch
          %226 = sbr.rel (%p224) target = $region36
        $region35: #{residual_block_forward.1} parent=11 // pred_region
          _
        $region36: #{residual_block_forward.1} parent=11 // pred_fallthru
          _
      $region12: #{residual_block_forward.1} parent=5 // pred_fallthru
        _
      %p227 = scmp.lt.s32.totalorder %s16, 2
      // Predicated region
      $region37: #{residual_block_forward.1} parent=5 // pred_check
        %p228 = pneg %p227
      $region38: #{residual_block_forward.1} parent=5 // pred_check_branch
        %230 = sbr.rel (%p228) target = $region40
      $region39: #{residual_block_forward.1} parent=5 // pred_region
        // Predicated region
        $region41: #{residual_block_forward.1} parent=39 // pred_check
          %p231 = pneg %p36
        $region42: #{residual_block_forward.1} parent=39 // pred_check_branch
          %233 = sbr.rel (%p231) target = $region44
        $region43: #{residual_block_forward.1} parent=39 // pred_region
          %p234 = scmp.lt.s32.totalorder %s16, 1
          %s235 = scalar_select %p234, %s16, 1
          %s236 = smul.addr %s235, 32
          %s237 = smul.addr %s236, 8
          %s238 = scalar_lea.vmem %s0, %s237
        $region44: #{residual_block_forward.1} parent=39 // pred_fallthru
          _
      $region40: #{residual_block_forward.1} parent=5 // pred_fallthru
        _
      %p239 = scmp.le.s32.totalorder 1, %s16
      %p240 = scmp.lt.s32.totalorder %s16, 3
      %p241 = pnand %p239, %p240
      %p242 = pneg %p241
      // Predicated region
      $region45: #{residual_block_forward.1} parent=5 // pred_check
        _
      $region46: #{residual_block_forward.1} parent=5 // pred_check_branch
        %244 = sbr.rel (%p241) target = $region48
      $region47: #{residual_block_forward.1} parent=5 // pred_region
        %s245 = ssub.s32 %s16, 1
        %p246 = scmp.lt.s32.totalorder %s21, 1
        %s247 = scalar_select %p246, %s21, 1
        %s248 = smul.addr %s247, 32
        %s249 = smul.addr %s248, 8
        %s250 = scalar_lea.vmem %s0, %s249
        %p251 = pneg %p42
        %p252 = pneg %p39
        %p253 = pneg %p63
        %p254 = pneg %p60
        %p255 = pneg %p84
        %p256 = pneg %p81
        %p257 = pneg %p105
        %p258 = pneg %p102
        %p259 = pneg %p126
        %p260 = pneg %p123
        %p261 = pneg %p147
        %p262 = pneg %p144
        %p263 = pneg %p168
        %p264 = pneg %p165
        %p265 = pneg %p194
        %p266 = pneg %p191
        %s267 = sand.u32 %s181, 1
        %s268 = scalar_lea.sflag [#allocation3], %s267
        %s269 = sand.u32 %s181, 1
        %s270 = smul.addr %s269, 256
        %s271 = scalar_lea.vmem [#allocation2], %s270
        %p272 = scmp.lt.s32.totalorder %s21, 1
        %s273 = scalar_select %p272, %s21, 1
        %s274 = smul.addr %s273, 32
        %s275 = smul.addr %s274, 8
        %s276 = scalar_lea.vmem %s0, %s275
        %v278 = vld [vmem:[%s276] sm:$0xff]
        %v279 = vld [vmem:[%s276 + $0x8] sm:$0xff]
        %v280 = vld [vmem:[%s276 + $0x10] sm:$0xff]
        %v281 = vld [vmem:[%s276 + $0x18] sm:$0xff]
        %v282 = vld [vmem:[%s276 + $0x20] sm:$0xff]
        %v283 = vld [vmem:[%s276 + $0x28] sm:$0xff]
        %v284 = vld [vmem:[%s276 + $0x30] sm:$0xff]
        %v285 = vld [vmem:[%s276 + $0x38] sm:$0xff]
        %v286 = vld [vmem:[%s276 + $0x40] sm:$0xff]
        %v287 = vld [vmem:[%s276 + $0x48] sm:$0xff]
        %v288 = vld [vmem:[%s276 + $0x50] sm:$0xff]
        %v289 = vld [vmem:[%s276 + $0x58] sm:$0xff]
        %v290 = vld [vmem:[%s276 + $0x60] sm:$0xff]
        %v291 = vld [vmem:[%s276 + $0x68] sm:$0xff]
        %v292 = vld [vmem:[%s276 + $0x70] sm:$0xff]
        %v293 = vld [vmem:[%s276 + $0x78] sm:$0xff]
        %v294 = vld [vmem:[%s276 + $0x80] sm:$0xff]
        %v295 = vld [vmem:[%s276 + $0x88] sm:$0xff]
        %v296 = vld [vmem:[%s276 + $0x90] sm:$0xff]
        %v297 = vld [vmem:[%s276 + $0x98] sm:$0xff]
        %v298 = vld [vmem:[%s276 + $0xa0] sm:$0xff]
        %v299 = vld [vmem:[%s276 + $0xa8] sm:$0xff]
        %v300 = vld [vmem:[%s276 + $0xb0] sm:$0xff]
        %v301 = vld [vmem:[%s276 + $0xb8] sm:$0xff]
        %v302 = vld [vmem:[%s276 + $0xc0] sm:$0xff]
        %v303 = vld [vmem:[%s276 + $0xc8] sm:$0xff]
        %v304 = vld [vmem:[%s276 + $0xd0] sm:$0xff]
        %v305 = vld [vmem:[%s276 + $0xd8] sm:$0xff]
        %v306 = vld [vmem:[%s276 + $0xe0] sm:$0xff]
        %v307 = vld [vmem:[%s276 + $0xe8] sm:$0xff]
        %v308 = vld [vmem:[%s276 + $0xf0] sm:$0xff]
        %v309 = vld [vmem:[%s276 + $0xf8] sm:$0xff]
        %v326 = vrot.slane %v280, 1
        %v327 = vrot.slane %v278, 1
        %v328 = vrot.slane %v282, 1
        %v329 = vrot.slane %v284, 1
        %v330 = vrot.slane %v286, 1
        %v331 = vrot.slane %v288, 1
        %v332 = vrot.slane %v290, 1
        %v333 = vrot.slane %v292, 1
        %v334 = vrot.slane %v294, 1
        %v335 = vrot.slane %v296, 1
        %v336 = vrot.slane %v298, 1
        %v337 = vrot.slane %v300, 1
        %v338 = vrot.slane %v302, 1
        %v339 = vrot.slane %v304, 1
        %v340 = vrot.slane %v306, 1
        %v341 = vrot.slane %v308, 1
        %vm374 = vcmask 1040384
        %v375 = vrot.slane %v280, 7
        %v376 = vrot.slane %v281, 7
        %v377 = vsel %vm374, %v375, %v376
        %v378 = vrot.slane %v278, 7
        %v379 = vrot.slane %v279, 7
        %v380 = vsel %vm374, %v378, %v379
        %v381 = vrot.slane %v282, 7
        %v382 = vrot.slane %v283, 7
        %v383 = vsel %vm374, %v381, %v382
        %v384 = vrot.slane %v284, 7
        %v385 = vrot.slane %v285, 7
        %v386 = vsel %vm374, %v384, %v385
        %v387 = vrot.slane %v286, 7
        %v388 = vrot.slane %v287, 7
        %v389 = vsel %vm374, %v387, %v388
        %v390 = vrot.slane %v288, 7
        %v391 = vrot.slane %v289, 7
        %v392 = vsel %vm374, %v390, %v391
        %v393 = vrot.slane %v290, 7
        %v394 = vrot.slane %v291, 7
        %v395 = vsel %vm374, %v393, %v394
        %v396 = vrot.slane %v292, 7
        %v397 = vrot.slane %v293, 7
        %v398 = vsel %vm374, %v396, %v397
        %v399 = vrot.slane %v294, 7
        %v400 = vrot.slane %v295, 7
        %v401 = vsel %vm374, %v399, %v400
        %v402 = vrot.slane %v296, 7
        %v403 = vrot.slane %v297, 7
        %v404 = vsel %vm374, %v402, %v403
        %v405 = vrot.slane %v298, 7
        %v406 = vrot.slane %v299, 7
        %v407 = vsel %vm374, %v405, %v406
        %v408 = vrot.slane %v300, 7
        %v409 = vrot.slane %v301, 7
        %v410 = vsel %vm374, %v408, %v409
        %v411 = vrot.slane %v302, 7
        %v412 = vrot.slane %v303, 7
        %v413 = vsel %vm374, %v411, %v412
        %v414 = vrot.slane %v304, 7
        %v415 = vrot.slane %v305, 7
        %v416 = vsel %vm374, %v414, %v415
        %v417 = vrot.slane %v306, 7
        %v418 = vrot.slane %v307, 7
        %v419 = vsel %vm374, %v417, %v418
        %v420 = vrot.slane %v308, 7
        %v421 = vrot.slane %v309, 7
        %v422 = vsel %vm374, %v420, %v421
        %v471 = vrot.slane %v281, 5
        %v472 = vrot.slane %v279, 5
        %v473 = vrot.slane %v283, 5
        %v474 = vrot.slane %v285, 5
        %v475 = vrot.slane %v287, 5
        %v476 = vrot.slane %v289, 5
        %v477 = vrot.slane %v291, 5
        %v478 = vrot.slane %v293, 5
        %v479 = vrot.slane %v295, 5
        %v480 = vrot.slane %v297, 5
        %v481 = vrot.slane %v299, 5
        %v482 = vrot.slane %v301, 5
        %v483 = vrot.slane %v303, 5
        %v484 = vrot.slane %v305, 5
        %v485 = vrot.slane %v307, 5
        %v486 = vrot.slane %v309, 5
        %v503 = vsel %vm374, %v326, %v375
        %v504 = vsel %vm374, %v327, %v378
        %v505 = vsel %vm374, %v328, %v381
        %v506 = vsel %vm374, %v329, %v384
        %v507 = vsel %vm374, %v330, %v387
        %v508 = vsel %vm374, %v331, %v390
        %v509 = vsel %vm374, %v332, %v393
        %v510 = vsel %vm374, %v333, %v396
        %v511 = vsel %vm374, %v334, %v399
        %v512 = vsel %vm374, %v335, %v402
        %v513 = vsel %vm374, %v336, %v405
        %v514 = vsel %vm374, %v337, %v408
        %v515 = vsel %vm374, %v338, %v411
        %v516 = vsel %vm374, %v339, %v414
        %v517 = vsel %vm374, %v340, %v417
        %v518 = vsel %vm374, %v341, %v420
        %v519 = vsel %vm374, %v376, %v471
        %v520 = vsel %vm374, %v379, %v472
        %v521 = vsel %vm374, %v382, %v473
        %v522 = vsel %vm374, %v385, %v474
        %v523 = vsel %vm374, %v388, %v475
        %v524 = vsel %vm374, %v391, %v476
        %v525 = vsel %vm374, %v394, %v477
        %v526 = vsel %vm374, %v397, %v478
        %v527 = vsel %vm374, %v400, %v479
        %v528 = vsel %vm374, %v403, %v480
        %v529 = vsel %vm374, %v406, %v481
        %v530 = vsel %vm374, %v409, %v482
        %v531 = vsel %vm374, %v412, %v483
        %v532 = vsel %vm374, %v415, %v484
        %v533 = vsel %vm374, %v418, %v485
        %v534 = vsel %vm374, %v421, %v486
        %v535 = vpack.c.bf16 %v377, %v503
        %v536 = vpack.c.bf16 %v380, %v504
        %v537 = vpack.c.bf16 %v383, %v505
        %v538 = vpack.c.bf16 %v386, %v506
        %v539 = vpack.c.bf16 %v389, %v507
        %v540 = vpack.c.bf16 %v392, %v508
        %v541 = vpack.c.bf16 %v395, %v509
        %v542 = vpack.c.bf16 %v398, %v510
        %v543 = vpack.c.bf16 %v401, %v511
        %v544 = vpack.c.bf16 %v404, %v512
        %v545 = vpack.c.bf16 %v407, %v513
        %v546 = vpack.c.bf16 %v410, %v514
        %v547 = vpack.c.bf16 %v413, %v515
        %v548 = vpack.c.bf16 %v416, %v516
        %v549 = vpack.c.bf16 %v419, %v517
        %v550 = vld [vmem:[%s1] sm:$0xf]
        %v551 = vld [vmem:[%s1 + $0x4] sm:$0xf]
        %v552 = vld [vmem:[%s1 + $0x8] sm:$0xf]
        %v553 = vld [vmem:[%s1 + $0xc] sm:$0xf]
        %v554 = vld [vmem:[%s1 + $0x10] sm:$0xf]
        %v555 = vld [vmem:[%s1 + $0x14] sm:$0xf]
        %v556 = vld [vmem:[%s1 + $0x18] sm:$0xf]
        %v557 = vld [vmem:[%s1 + $0x1c] sm:$0xf]
        %v558 = vld [vmem:[%s1 + $0x20] sm:$0xf]
        %v559 = vld [vmem:[%s1 + $0x24] sm:$0xf]
        %v560 = vld [vmem:[%s1 + $0x28] sm:$0xf]
        %v561 = vld [vmem:[%s1 + $0x2c] sm:$0xf]
        %v562 = vld [vmem:[%s1 + $0x30] sm:$0xf]
        %v563 = vld [vmem:[%s1 + $0x34] sm:$0xf]
        %v564 = vld [vmem:[%s1 + $0x38] sm:$0xf]
        %v565 = vld [vmem:[%s1 + $0x3c] sm:$0xf]
        %vm596 = vcmask 1046528
        %v597 = vrot.slane %v503, 1
        %v598 = vrot.slane %v377, 1
        %v599 = vsel %vm596, %v597, %v598
        %v600 = vrot.slane %v519, 1
        %v601 = vsel %vm596, %v598, %v600
        %v602 = vrot.slane %v504, 1
        %v603 = vrot.slane %v380, 1
        %v604 = vsel %vm596, %v602, %v603
        %v605 = vrot.slane %v520, 1
        %v606 = vsel %vm596, %v603, %v605
        %v607 = vrot.slane %v505, 1
        %v608 = vrot.slane %v383, 1
        %v609 = vsel %vm596, %v607, %v608
        %v610 = vrot.slane %v521, 1
        %v611 = vsel %vm596, %v608, %v610
        %v612 = vrot.slane %v506, 1
        %v613 = vrot.slane %v386, 1
        %v614 = vsel %vm596, %v612, %v613
        %v615 = vrot.slane %v522, 1
        %v616 = vsel %vm596, %v613, %v615
        %v617 = vrot.slane %v507, 1
        %v618 = vrot.slane %v389, 1
        %v619 = vsel %vm596, %v617, %v618
        %v620 = vrot.slane %v523, 1
        %v621 = vsel %vm596, %v618, %v620
        %v622 = vrot.slane %v508, 1
        %v623 = vrot.slane %v392, 1
        %v624 = vsel %vm596, %v622, %v623
        %v625 = vrot.slane %v524, 1
        %v626 = vsel %vm596, %v623, %v625
        %v627 = vrot.slane %v509, 1
        %v628 = vrot.slane %v395, 1
        %v629 = vsel %vm596, %v627, %v628
        %v630 = vrot.slane %v525, 1
        %v631 = vsel %vm596, %v628, %v630
        %v632 = vrot.slane %v510, 1
        %v633 = vrot.slane %v398, 1
        %v634 = vsel %vm596, %v632, %v633
        %v635 = vrot.slane %v526, 1
        %v636 = vsel %vm596, %v633, %v635
        %v637 = vrot.slane %v511, 1
        %v638 = vrot.slane %v401, 1
        %v639 = vsel %vm596, %v637, %v638
        %v640 = vrot.slane %v527, 1
        %v641 = vsel %vm596, %v638, %v640
        %v642 = vrot.slane %v512, 1
        %v643 = vrot.slane %v404, 1
        %v644 = vsel %vm596, %v642, %v643
        %v645 = vrot.slane %v528, 1
        %v646 = vsel %vm596, %v643, %v645
        %v647 = vrot.slane %v513, 1
        %v648 = vrot.slane %v407, 1
        %v649 = vsel %vm596, %v647, %v648
        %v650 = vrot.slane %v529, 1
        %v651 = vsel %vm596, %v648, %v650
        %v652 = vrot.slane %v514, 1
        %v653 = vrot.slane %v410, 1
        %v654 = vsel %vm596, %v652, %v653
        %v655 = vrot.slane %v530, 1
        %v656 = vsel %vm596, %v653, %v655
        %v657 = vrot.slane %v515, 1
        %v658 = vrot.slane %v413, 1
        %v659 = vsel %vm596, %v657, %v658
        %v660 = vrot.slane %v531, 1
        %v661 = vsel %vm596, %v658, %v660
        %v662 = vrot.slane %v516, 1
        %v663 = vrot.slane %v416, 1
        %v664 = vsel %vm596, %v662, %v663
        %v665 = vrot.slane %v532, 1
        %v666 = vsel %vm596, %v663, %v665
        %v667 = vrot.slane %v517, 1
        %v668 = vrot.slane %v419, 1
        %v669 = vsel %vm596, %v667, %v668
        %v670 = vrot.slane %v533, 1
        %v671 = vsel %vm596, %v668, %v670
        %v702 = vpack.c.bf16 %v601, %v599
        %v703 = vpack.c.bf16 %v606, %v604
        %v704 = vpack.c.bf16 %v611, %v609
        %v705 = vpack.c.bf16 %v616, %v614
        %v706 = vpack.c.bf16 %v621, %v619
        %v707 = vpack.c.bf16 %v626, %v624
        %v708 = vpack.c.bf16 %v631, %v629
        %v709 = vpack.c.bf16 %v636, %v634
        %v710 = vpack.c.bf16 %v641, %v639
        %v711 = vpack.c.bf16 %v646, %v644
        %v712 = vpack.c.bf16 %v651, %v649
        %v713 = vpack.c.bf16 %v656, %v654
        %v714 = vpack.c.bf16 %v661, %v659
        %v715 = vpack.c.bf16 %v666, %v664
        %v716 = vpack.c.bf16 %v671, %v669
        %v717 = vld [vmem:[%s1 + $0x40] sm:$0xf]
        %v718 = vld [vmem:[%s1 + $0x44] sm:$0xf]
        %v719 = vld [vmem:[%s1 + $0x48] sm:$0xf]
        %v720 = vld [vmem:[%s1 + $0x4c] sm:$0xf]
        %v721 = vld [vmem:[%s1 + $0x50] sm:$0xf]
        %v722 = vld [vmem:[%s1 + $0x54] sm:$0xf]
        %v723 = vld [vmem:[%s1 + $0x58] sm:$0xf]
        %v724 = vld [vmem:[%s1 + $0x5c] sm:$0xf]
        %v725 = vld [vmem:[%s1 + $0x60] sm:$0xf]
        %v726 = vld [vmem:[%s1 + $0x64] sm:$0xf]
        %v727 = vld [vmem:[%s1 + $0x68] sm:$0xf]
        %v728 = vld [vmem:[%s1 + $0x6c] sm:$0xf]
        %v729 = vld [vmem:[%s1 + $0x70] sm:$0xf]
        %v730 = vld [vmem:[%s1 + $0x74] sm:$0xf]
        %v731 = vld [vmem:[%s1 + $0x78] sm:$0xf]
        %v732 = vld [vmem:[%s1 + $0x7c] sm:$0xf]
        %v749 = vunpack.c.l.b16 %v717
        %v750 = vunpack.c.l.b16 %v718
        %v751 = vunpack.c.l.b16 %v719
        %v752 = vunpack.c.l.b16 %v720
        %v753 = vunpack.c.l.b16 %v721
        %v754 = vunpack.c.l.b16 %v722
        %v755 = vunpack.c.l.b16 %v723
        %v756 = vunpack.c.l.b16 %v724
        %v757 = vunpack.c.l.b16 %v725
        %v758 = vunpack.c.l.b16 %v726
        %v759 = vunpack.c.l.b16 %v727
        %v760 = vunpack.c.l.b16 %v728
        %v761 = vunpack.c.l.b16 %v729
        %v762 = vunpack.c.l.b16 %v730
        %v763 = vunpack.c.l.b16 %v731
        %v764 = vunpack.c.l.b16 %v732
        %v765 = vpack.c.b16 %v750, %v749
        %v766 = vpack.c.b16 %v752, %v751
        %v767 = vpack.c.b16 %v754, %v753
        %v768 = vpack.c.b16 %v756, %v755
        %v769 = vpack.c.b16 %v758, %v757
        %v770 = vpack.c.b16 %v760, %v759
        %v771 = vpack.c.b16 %v762, %v761
        %v772 = vpack.c.b16 %v764, %v763
        %781 = vmatprep.subr.bf16.mxu0 0
        %782 = vmatpush1.bf16.msra.mxu0 %v772
        %783 = vmatprep.subr.bf16.mxu0 0
        %784 = vmatpush1.bf16.msra.mxu0 %v771
        %785 = vmatprep.subr.bf16.mxu0 0
        %786 = vmatpush1.bf16.msra.mxu0 %v770
        %787 = vmatprep.subr.bf16.mxu0 0
        %788 = vmatpush1.bf16.msra.mxu0 %v769
        %789 = vmatprep.subr.bf16.mxu0 0
        %790 = vmatpush1.bf16.msra.mxu0 %v768
        %791 = vmatprep.subr.bf16.mxu0 0
        %792 = vmatpush1.bf16.msra.mxu0 %v767
        %793 = vmatprep.subr.bf16.mxu0 0
        %794 = vmatpush1.bf16.msra.mxu0 %v766
        %795 = vmatprep.subr.bf16.mxu0 0
        %796 = vmatpush1.bf16.msra.mxu0 %v765
        %797 = vmatprep.subr.bf16.mxu0 0
        %798 = vmatpush2.bf16.msra.mxu0 0
        %799 = vmatprep.subr.bf16.mxu0 0
        %800 = vmatpush2.bf16.msra.mxu0 0
        %801 = vmatprep.subr.bf16.mxu0 0
        %802 = vmatpush2.bf16.msra.mxu0 0
        %803 = vmatprep.subr.bf16.mxu0 0
        %804 = vmatpush2.bf16.msra.mxu0 0
        %805 = vmatprep.subr.bf16.mxu0 0
        %806 = vmatpush2.bf16.msra.mxu0 0
        %807 = vmatprep.subr.bf16.mxu0 0
        %808 = vmatpush2.bf16.msra.mxu0 0
        %809 = vmatprep.subr.bf16.mxu0 0
        %810 = vmatpush2.bf16.msra.mxu0 0
        %811 = vmatprep.subr.bf16.mxu0 0
        %812 = vmatpush2.bf16.msra.mxu0 0
        %813 = vmatprep.mubr.bf16.mxu0 0
        %814 = vmatmul.mubr.bf16.gmra.mxu0 %v702
        %v815 = vpop.f32.mrf.mxu0
        %v816 = vadd.f32 0.0, %v815
        %v817 = vpop.f32.mrf.mxu0
        %v818 = vpop.f32.mrf.mxu0
        %v819 = vadd.f32 0.0, %v818
        %v820 = vpop.f32.mrf.mxu0
        %821 = vmatprep.mubr.bf16.mxu0 0
        %822 = vmatmul.mubr.bf16.gmra.mxu0 %v703
        %v823 = vpop.f32.mrf.mxu0
        %v824 = vadd.f32 0.0, %v823
        %v825 = vpop.f32.mrf.mxu0
        %v826 = vpop.f32.mrf.mxu0
        %v827 = vadd.f32 0.0, %v826
        %v828 = vpop.f32.mrf.mxu0
        %829 = vmatprep.mubr.bf16.mxu0 0
        %830 = vmatmul.mubr.bf16.gmra.mxu0 %v702
        %v831 = vpop.f32.mrf.mxu0
        %v832 = vadd.f32 0.0, %v831
        %v833 = vpop.f32.mrf.mxu0
        %v834 = vpop.f32.mrf.mxu0
        %v835 = vadd.f32 0.0, %v834
        %v836 = vpop.f32.mrf.mxu0
        %837 = vmatprep.mubr.bf16.mxu0 0
        %838 = vmatmul.mubr.bf16.gmra.mxu0 %v704
        %v839 = vpop.f32.mrf.mxu0
        %v840 = vadd.f32 0.0, %v839
        %v841 = vpop.f32.mrf.mxu0
        %v842 = vpop.f32.mrf.mxu0
        %v843 = vadd.f32 0.0, %v842
        %v844 = vpop.f32.mrf.mxu0
        %845 = vmatprep.mubr.bf16.mxu0 0
        %846 = vmatmul.mubr.bf16.gmra.mxu0 %v705
        %v847 = vpop.f32.mrf.mxu0
        %v848 = vadd.f32 0.0, %v847
        %v849 = vpop.f32.mrf.mxu0
        %v850 = vpop.f32.mrf.mxu0
        %v851 = vadd.f32 0.0, %v850
        %v852 = vpop.f32.mrf.mxu0
        %853 = vmatprep.mubr.bf16.mxu0 0
        %854 = vmatmul.mubr.bf16.gmra.mxu0 %v706
        %v855 = vpop.f32.mrf.mxu0
        %v856 = vadd.f32 0.0, %v855
        %v857 = vpop.f32.mrf.mxu0
        %v858 = vpop.f32.mrf.mxu0
        %v859 = vadd.f32 0.0, %v858
        %v860 = vpop.f32.mrf.mxu0
        %861 = vmatprep.mubr.bf16.mxu0 0
        %862 = vmatmul.mubr.bf16.gmra.mxu0 %v707
        %v863 = vpop.f32.mrf.mxu0
        %v864 = vadd.f32 0.0, %v863
        %v865 = vpop.f32.mrf.mxu0
        %v866 = vpop.f32.mrf.mxu0
        %v867 = vadd.f32 0.0, %v866
        %v868 = vpop.f32.mrf.mxu0
        %869 = vmatprep.mubr.bf16.mxu0 0
        %870 = vmatmul.mubr.bf16.gmra.mxu0 %v708
        %v871 = vpop.f32.mrf.mxu0
        %v872 = vadd.f32 0.0, %v871
        %v873 = vpop.f32.mrf.mxu0
        %v874 = vpop.f32.mrf.mxu0
        %v875 = vadd.f32 0.0, %v874
        %v876 = vpop.f32.mrf.mxu0
        %877 = vmatprep.mubr.bf16.mxu0 0
        %878 = vmatmul.mubr.bf16.gmra.mxu0 %v709
        %v879 = vpop.f32.mrf.mxu0
        %v880 = vadd.f32 0.0, %v879
        %v881 = vpop.f32.mrf.mxu0
        %v882 = vpop.f32.mrf.mxu0
        %v883 = vadd.f32 0.0, %v882
        %v884 = vpop.f32.mrf.mxu0
        %885 = vmatprep.mubr.bf16.mxu0 0
        %886 = vmatmul.mubr.bf16.gmra.mxu0 %v710
        %v887 = vpop.f32.mrf.mxu0
        %v888 = vadd.f32 0.0, %v887
        %v889 = vpop.f32.mrf.mxu0
        %v890 = vpop.f32.mrf.mxu0
        %v891 = vadd.f32 0.0, %v890
        %v892 = vpop.f32.mrf.mxu0
        %893 = vmatprep.mubr.bf16.mxu0 0
        %894 = vmatmul.mubr.bf16.gmra.mxu0 %v711
        %v895 = vpop.f32.mrf.mxu0
        %v896 = vadd.f32 0.0, %v895
        %v897 = vpop.f32.mrf.mxu0
        %v898 = vpop.f32.mrf.mxu0
        %v899 = vadd.f32 0.0, %v898
        %v900 = vpop.f32.mrf.mxu0
        %901 = vmatprep.mubr.bf16.mxu0 0
        %902 = vmatmul.mubr.bf16.gmra.mxu0 %v712
        %v903 = vpop.f32.mrf.mxu0
        %v904 = vadd.f32 0.0, %v903
        %v905 = vpop.f32.mrf.mxu0
        %v906 = vpop.f32.mrf.mxu0
        %v907 = vadd.f32 0.0, %v906
        %v908 = vpop.f32.mrf.mxu0
        %909 = vmatprep.mubr.bf16.mxu0 0
        %910 = vmatmul.mubr.bf16.gmra.mxu0 %v713
        %v911 = vpop.f32.mrf.mxu0
        %v912 = vadd.f32 0.0, %v911
        %v913 = vpop.f32.mrf.mxu0
        %v914 = vpop.f32.mrf.mxu0
        %v915 = vadd.f32 0.0, %v914
        %v916 = vpop.f32.mrf.mxu0
        %917 = vmatprep.mubr.bf16.mxu0 0
        %918 = vmatmul.mubr.bf16.gmra.mxu0 %v714
        %v919 = vpop.f32.mrf.mxu0
        %v920 = vadd.f32 0.0, %v919
        %v921 = vpop.f32.mrf.mxu0
        %v922 = vpop.f32.mrf.mxu0
        %v923 = vadd.f32 0.0, %v922
        %v924 = vpop.f32.mrf.mxu0
        %925 = vmatprep.mubr.bf16.mxu0 0
        %926 = vmatmul.mubr.bf16.gmra.mxu0 %v715
        %v927 = vpop.f32.mrf.mxu0
        %v928 = vadd.f32 0.0, %v927
        %v929 = vpop.f32.mrf.mxu0
        %v930 = vpop.f32.mrf.mxu0
        %v931 = vadd.f32 0.0, %v930
        %v932 = vpop.f32.mrf.mxu0
        %933 = vmatprep.mubr.bf16.mxu0 0
        %934 = vmatmul.mubr.bf16.gmra.mxu0 %v716
        %v935 = vpop.f32.mrf.mxu0
        %v936 = vadd.f32 0.0, %v935
        %v937 = vpop.f32.mrf.mxu0
        %v938 = vpop.f32.mrf.mxu0
        %v939 = vadd.f32 0.0, %v938
        %v940 = vpop.f32.mrf.mxu0
        %941 = vdwg.mxu0
        %v958 = vunpack.c.l.b16 %v550
        %v959 = vunpack.c.l.b16 %v551
        %v960 = vunpack.c.l.b16 %v552
        %v961 = vunpack.c.l.b16 %v553
        %v962 = vunpack.c.l.b16 %v554
        %v963 = vunpack.c.l.b16 %v555
        %v964 = vunpack.c.l.b16 %v556
        %v965 = vunpack.c.l.b16 %v557
        %v966 = vunpack.c.l.b16 %v558
        %v967 = vunpack.c.l.b16 %v559
        %v968 = vunpack.c.l.b16 %v560
        %v969 = vunpack.c.l.b16 %v561
        %v970 = vunpack.c.l.b16 %v562
        %v971 = vunpack.c.l.b16 %v563
        %v972 = vunpack.c.l.b16 %v564
        %v973 = vunpack.c.l.b16 %v565
        %v974 = vpack.c.b16 %v959, %v958
        %v975 = vpack.c.b16 %v961, %v960
        %v976 = vpack.c.b16 %v963, %v962
        %v977 = vpack.c.b16 %v965, %v964
        %v978 = vpack.c.b16 %v967, %v966
        %v979 = vpack.c.b16 %v969, %v968
        %v980 = vpack.c.b16 %v971, %v970
        %v981 = vpack.c.b16 %v973, %v972
        %990 = vmatprep.subr.bf16.mxu0 0
        %991 = vmatpush1.bf16.msra.mxu0 %v981
        %992 = vmatprep.subr.bf16.mxu0 0
        %993 = vmatpush1.bf16.msra.mxu0 %v980
        %994 = vmatprep.subr.bf16.mxu0 0
        %995 = vmatpush1.bf16.msra.mxu0 %v979
        %996 = vmatprep.subr.bf16.mxu0 0
        %997 = vmatpush1.bf16.msra.mxu0 %v978
        %998 = vmatprep.subr.bf16.mxu0 0
        %999 = vmatpush1.bf16.msra.mxu0 %v977
        %1000 = vmatprep.subr.bf16.mxu0 0
        %1001 = vmatpush1.bf16.msra.mxu0 %v976
        %1002 = vmatprep.subr.bf16.mxu0 0
        %1003 = vmatpush1.bf16.msra.mxu0 %v975
        %1004 = vmatprep.subr.bf16.mxu0 0
        %1005 = vmatpush1.bf16.msra.mxu0 %v974
        %1006 = vmatprep.subr.bf16.mxu0 0
        %1007 = vmatpush2.bf16.msra.mxu0 0
        %1008 = vmatprep.subr.bf16.mxu0 0
        %1009 = vmatpush2.bf16.msra.mxu0 0
        %1010 = vmatprep.subr.bf16.mxu0 0
        %1011 = vmatpush2.bf16.msra.mxu0 0
        %1012 = vmatprep.subr.bf16.mxu0 0
        %1013 = vmatpush2.bf16.msra.mxu0 0
        %1014 = vmatprep.subr.bf16.mxu0 0
        %1015 = vmatpush2.bf16.msra.mxu0 0
        %1016 = vmatprep.subr.bf16.mxu0 0
        %1017 = vmatpush2.bf16.msra.mxu0 0
        %1018 = vmatprep.subr.bf16.mxu0 0
        %1019 = vmatpush2.bf16.msra.mxu0 0
        %1020 = vmatprep.subr.bf16.mxu0 0
        %1021 = vmatpush2.bf16.msra.mxu0 0
        %1022 = vmatprep.mubr.bf16.mxu0 0
        %1023 = vmatmul.mubr.bf16.gmra.mxu0 %v535
        %v1024 = vpop.f32.mrf.mxu0
        %v1025 = vadd.f32 %v816, %v1024
        %v1026 = vpop.f32.mrf.mxu0
        %v1027 = vpop.f32.mrf.mxu0
        %v1028 = vadd.f32 %v819, %v1027
        %v1029 = vpop.f32.mrf.mxu0
        %1030 = vmatprep.mubr.bf16.mxu0 0
        %1031 = vmatmul.mubr.bf16.gmra.mxu0 %v536
        %v1032 = vpop.f32.mrf.mxu0
        %v1033 = vadd.f32 %v824, %v1032
        %v1034 = vpop.f32.mrf.mxu0
        %v1035 = vpop.f32.mrf.mxu0
        %v1036 = vadd.f32 %v827, %v1035
        %v1037 = vpop.f32.mrf.mxu0
        %1038 = vmatprep.mubr.bf16.mxu0 0
        %1039 = vmatmul.mubr.bf16.gmra.mxu0 %v535
        %v1040 = vpop.f32.mrf.mxu0
        %v1041 = vadd.f32 %v832, %v1040
        %v1042 = vpop.f32.mrf.mxu0
        %v1043 = vpop.f32.mrf.mxu0
        %v1044 = vadd.f32 %v835, %v1043
        %v1045 = vpop.f32.mrf.mxu0
        %1046 = vmatprep.mubr.bf16.mxu0 0
        %1047 = vmatmul.mubr.bf16.gmra.mxu0 %v537
        %v1048 = vpop.f32.mrf.mxu0
        %v1049 = vadd.f32 %v840, %v1048
        %v1050 = vpop.f32.mrf.mxu0
        %v1051 = vpop.f32.mrf.mxu0
        %v1052 = vadd.f32 %v843, %v1051
        %v1053 = vpop.f32.mrf.mxu0
        %1054 = vmatprep.mubr.bf16.mxu0 0
        %1055 = vmatmul.mubr.bf16.gmra.mxu0 %v538
        %v1056 = vpop.f32.mrf.mxu0
        %v1057 = vadd.f32 %v848, %v1056
        %v1058 = vpop.f32.mrf.mxu0
        %v1059 = vpop.f32.mrf.mxu0
        %v1060 = vadd.f32 %v851, %v1059
        %v1061 = vpop.f32.mrf.mxu0
        %1062 = vmatprep.mubr.bf16.mxu0 0
        %1063 = vmatmul.mubr.bf16.gmra.mxu0 %v539
        %v1064 = vpop.f32.mrf.mxu0
        %v1065 = vadd.f32 %v856, %v1064
        %v1066 = vpop.f32.mrf.mxu0
        %v1067 = vpop.f32.mrf.mxu0
        %v1068 = vadd.f32 %v859, %v1067
        %v1069 = vpop.f32.mrf.mxu0
        %1070 = vmatprep.mubr.bf16.mxu0 0
        %1071 = vmatmul.mubr.bf16.gmra.mxu0 %v540
        %v1072 = vpop.f32.mrf.mxu0
        %v1073 = vadd.f32 %v864, %v1072
        %v1074 = vpop.f32.mrf.mxu0
        %v1075 = vpop.f32.mrf.mxu0
        %v1076 = vadd.f32 %v867, %v1075
        %v1077 = vpop.f32.mrf.mxu0
        %1078 = vmatprep.mubr.bf16.mxu0 0
        %1079 = vmatmul.mubr.bf16.gmra.mxu0 %v541
        %v1080 = vpop.f32.mrf.mxu0
        %v1081 = vadd.f32 %v872, %v1080
        %v1082 = vpop.f32.mrf.mxu0
        %v1083 = vpop.f32.mrf.mxu0
        %v1084 = vadd.f32 %v875, %v1083
        %v1085 = vpop.f32.mrf.mxu0
        %1086 = vmatprep.mubr.bf16.mxu0 0
        %1087 = vmatmul.mubr.bf16.gmra.mxu0 %v542
        %v1088 = vpop.f32.mrf.mxu0
        %v1089 = vadd.f32 %v880, %v1088
        %v1090 = vpop.f32.mrf.mxu0
        %v1091 = vpop.f32.mrf.mxu0
        %v1092 = vadd.f32 %v883, %v1091
        %v1093 = vpop.f32.mrf.mxu0
        %1094 = vmatprep.mubr.bf16.mxu0 0
        %1095 = vmatmul.mubr.bf16.gmra.mxu0 %v543
        %v1096 = vpop.f32.mrf.mxu0
        %v1097 = vadd.f32 %v888, %v1096
        %v1098 = vpop.f32.mrf.mxu0
        %v1099 = vpop.f32.mrf.mxu0
        %v1100 = vadd.f32 %v891, %v1099
        %v1101 = vpop.f32.mrf.mxu0
        %1102 = vmatprep.mubr.bf16.mxu0 0
        %1103 = vmatmul.mubr.bf16.gmra.mxu0 %v544
        %v1104 = vpop.f32.mrf.mxu0
        %v1105 = vadd.f32 %v896, %v1104
        %v1106 = vpop.f32.mrf.mxu0
        %v1107 = vpop.f32.mrf.mxu0
        %v1108 = vadd.f32 %v899, %v1107
        %v1109 = vpop.f32.mrf.mxu0
        %1110 = vmatprep.mubr.bf16.mxu0 0
        %1111 = vmatmul.mubr.bf16.gmra.mxu0 %v545
        %v1112 = vpop.f32.mrf.mxu0
        %v1113 = vadd.f32 %v904, %v1112
        %v1114 = vpop.f32.mrf.mxu0
        %v1115 = vpop.f32.mrf.mxu0
        %v1116 = vadd.f32 %v907, %v1115
        %v1117 = vpop.f32.mrf.mxu0
        %1118 = vmatprep.mubr.bf16.mxu0 0
        %1119 = vmatmul.mubr.bf16.gmra.mxu0 %v546
        %v1120 = vpop.f32.mrf.mxu0
        %v1121 = vadd.f32 %v912, %v1120
        %v1122 = vpop.f32.mrf.mxu0
        %v1123 = vpop.f32.mrf.mxu0
        %v1124 = vadd.f32 %v915, %v1123
        %v1125 = vpop.f32.mrf.mxu0
        %1126 = vmatprep.mubr.bf16.mxu0 0
        %1127 = vmatmul.mubr.bf16.gmra.mxu0 %v547
        %v1128 = vpop.f32.mrf.mxu0
        %v1129 = vadd.f32 %v920, %v1128
        %v1130 = vpop.f32.mrf.mxu0
        %v1131 = vpop.f32.mrf.mxu0
        %v1132 = vadd.f32 %v923, %v1131
        %v1133 = vpop.f32.mrf.mxu0
        %1134 = vmatprep.mubr.bf16.mxu0 0
        %1135 = vmatmul.mubr.bf16.gmra.mxu0 %v548
        %v1136 = vpop.f32.mrf.mxu0
        %v1137 = vadd.f32 %v928, %v1136
        %v1138 = vpop.f32.mrf.mxu0
        %v1139 = vpop.f32.mrf.mxu0
        %v1140 = vadd.f32 %v931, %v1139
        %v1141 = vpop.f32.mrf.mxu0
        %1142 = vmatprep.mubr.bf16.mxu0 0
        %1143 = vmatmul.mubr.bf16.gmra.mxu0 %v549
        %v1144 = vpop.f32.mrf.mxu0
        %v1145 = vadd.f32 %v936, %v1144
        %v1146 = vpop.f32.mrf.mxu0
        %v1147 = vpop.f32.mrf.mxu0
        %v1148 = vadd.f32 %v939, %v1147
        %v1149 = vpop.f32.mrf.mxu0
        %1150 = vdwg.mxu0
        %vm1151 = vcmask 1045504
        %v1152 = vrot.slane %v503, 2
        %v1153 = vrot.slane %v377, 2
        %v1154 = vsel %vm1151, %v1152, %v1153
        %v1155 = vrot.slane %v519, 2
        %v1156 = vsel %vm1151, %v1153, %v1155
        %v1157 = vrot.slane %v504, 2
        %v1158 = vrot.slane %v380, 2
        %v1159 = vsel %vm1151, %v1157, %v1158
        %v1160 = vrot.slane %v520, 2
        %v1161 = vsel %vm1151, %v1158, %v1160
        %v1162 = vrot.slane %v505, 2
        %v1163 = vrot.slane %v383, 2
        %v1164 = vsel %vm1151, %v1162, %v1163
        %v1165 = vrot.slane %v521, 2
        %v1166 = vsel %vm1151, %v1163, %v1165
        %v1167 = vrot.slane %v506, 2
        %v1168 = vrot.slane %v386, 2
        %v1169 = vsel %vm1151, %v1167, %v1168
        %v1170 = vrot.slane %v522, 2
        %v1171 = vsel %vm1151, %v1168, %v1170
        %v1172 = vrot.slane %v507, 2
        %v1173 = vrot.slane %v389, 2
        %v1174 = vsel %vm1151, %v1172, %v1173
        %v1175 = vrot.slane %v523, 2
        %v1176 = vsel %vm1151, %v1173, %v1175
        %v1177 = vrot.slane %v508, 2
        %v1178 = vrot.slane %v392, 2
        %v1179 = vsel %vm1151, %v1177, %v1178
        %v1180 = vrot.slane %v524, 2
        %v1181 = vsel %vm1151, %v1178, %v1180
        %v1182 = vrot.slane %v509, 2
        %v1183 = vrot.slane %v395, 2
        %v1184 = vsel %vm1151, %v1182, %v1183
        %v1185 = vrot.slane %v525, 2
        %v1186 = vsel %vm1151, %v1183, %v1185
        %v1187 = vrot.slane %v510, 2
        %v1188 = vrot.slane %v398, 2
        %v1189 = vsel %vm1151, %v1187, %v1188
        %v1190 = vrot.slane %v526, 2
        %v1191 = vsel %vm1151, %v1188, %v1190
        %v1192 = vrot.slane %v511, 2
        %v1193 = vrot.slane %v401, 2
        %v1194 = vsel %vm1151, %v1192, %v1193
        %v1195 = vrot.slane %v527, 2
        %v1196 = vsel %vm1151, %v1193, %v1195
        %v1197 = vrot.slane %v512, 2
        %v1198 = vrot.slane %v404, 2
        %v1199 = vsel %vm1151, %v1197, %v1198
        %v1200 = vrot.slane %v528, 2
        %v1201 = vsel %vm1151, %v1198, %v1200
        %v1202 = vrot.slane %v513, 2
        %v1203 = vrot.slane %v407, 2
        %v1204 = vsel %vm1151, %v1202, %v1203
        %v1205 = vrot.slane %v529, 2
        %v1206 = vsel %vm1151, %v1203, %v1205
        %v1207 = vrot.slane %v514, 2
        %v1208 = vrot.slane %v410, 2
        %v1209 = vsel %vm1151, %v1207, %v1208
        %v1210 = vrot.slane %v530, 2
        %v1211 = vsel %vm1151, %v1208, %v1210
        %v1212 = vrot.slane %v515, 2
        %v1213 = vrot.slane %v413, 2
        %v1214 = vsel %vm1151, %v1212, %v1213
        %v1215 = vrot.slane %v531, 2
        %v1216 = vsel %vm1151, %v1213, %v1215
        %v1217 = vrot.slane %v516, 2
        %v1218 = vrot.slane %v416, 2
        %v1219 = vsel %vm1151, %v1217, %v1218
        %v1220 = vrot.slane %v532, 2
        %v1221 = vsel %vm1151, %v1218, %v1220
        %v1222 = vrot.slane %v517, 2
        %v1223 = vrot.slane %v419, 2
        %v1224 = vsel %vm1151, %v1222, %v1223
        %v1225 = vrot.slane %v533, 2
        %v1226 = vsel %vm1151, %v1223, %v1225
        %v1257 = vpack.c.bf16 %v1156, %v1154
        %v1258 = vpack.c.bf16 %v1161, %v1159
        %v1259 = vpack.c.bf16 %v1166, %v1164
        %v1260 = vpack.c.bf16 %v1171, %v1169
        %v1261 = vpack.c.bf16 %v1176, %v1174
        %v1262 = vpack.c.bf16 %v1181, %v1179
        %v1263 = vpack.c.bf16 %v1186, %v1184
        %v1264 = vpack.c.bf16 %v1191, %v1189
        %v1265 = vpack.c.bf16 %v1196, %v1194
        %v1266 = vpack.c.bf16 %v1201, %v1199
        %v1267 = vpack.c.bf16 %v1206, %v1204
        %v1268 = vpack.c.bf16 %v1211, %v1209
        %v1269 = vpack.c.bf16 %v1216, %v1214
        %v1270 = vpack.c.bf16 %v1221, %v1219
        %v1271 = vpack.c.bf16 %v1226, %v1224
        %v1272 = vld [vmem:[%s1 + $0x80] sm:$0xf]
        %v1273 = vld [vmem:[%s1 + $0x84] sm:$0xf]
        %v1274 = vld [vmem:[%s1 + $0x88] sm:$0xf]
        %v1275 = vld [vmem:[%s1 + $0x8c] sm:$0xf]
        %v1276 = vld [vmem:[%s1 + $0x90] sm:$0xf]
        %v1277 = vld [vmem:[%s1 + $0x94] sm:$0xf]
        %v1278 = vld [vmem:[%s1 + $0x98] sm:$0xf]
        %v1279 = vld [vmem:[%s1 + $0x9c] sm:$0xf]
        %v1280 = vld [vmem:[%s1 + $0xa0] sm:$0xf]
        %v1281 = vld [vmem:[%s1 + $0xa4] sm:$0xf]
        %v1282 = vld [vmem:[%s1 + $0xa8] sm:$0xf]
        %v1283 = vld [vmem:[%s1 + $0xac] sm:$0xf]
        %v1284 = vld [vmem:[%s1 + $0xb0] sm:$0xf]
        %v1285 = vld [vmem:[%s1 + $0xb4] sm:$0xf]
        %v1286 = vld [vmem:[%s1 + $0xb8] sm:$0xf]
        %v1287 = vld [vmem:[%s1 + $0xbc] sm:$0xf]
        %v1304 = vunpack.c.l.b16 %v1272
        %v1305 = vunpack.c.l.b16 %v1273
        %v1306 = vunpack.c.l.b16 %v1274
        %v1307 = vunpack.c.l.b16 %v1275
        %v1308 = vunpack.c.l.b16 %v1276
        %v1309 = vunpack.c.l.b16 %v1277
        %v1310 = vunpack.c.l.b16 %v1278
        %v1311 = vunpack.c.l.b16 %v1279
        %v1312 = vunpack.c.l.b16 %v1280
        %v1313 = vunpack.c.l.b16 %v1281
        %v1314 = vunpack.c.l.b16 %v1282
        %v1315 = vunpack.c.l.b16 %v1283
        %v1316 = vunpack.c.l.b16 %v1284
        %v1317 = vunpack.c.l.b16 %v1285
        %v1318 = vunpack.c.l.b16 %v1286
        %v1319 = vunpack.c.l.b16 %v1287
        %v1320 = vpack.c.b16 %v1305, %v1304
        %v1321 = vpack.c.b16 %v1307, %v1306
        %v1322 = vpack.c.b16 %v1309, %v1308
        %v1323 = vpack.c.b16 %v1311, %v1310
        %v1324 = vpack.c.b16 %v1313, %v1312
        %v1325 = vpack.c.b16 %v1315, %v1314
        %v1326 = vpack.c.b16 %v1317, %v1316
        %v1327 = vpack.c.b16 %v1319, %v1318
        %1336 = vmatprep.subr.bf16.mxu0 0
        %1337 = vmatpush1.bf16.msra.mxu0 %v1327
        %1338 = vmatprep.subr.bf16.mxu0 0
        %1339 = vmatpush1.bf16.msra.mxu0 %v1326
        %1340 = vmatprep.subr.bf16.mxu0 0
        %1341 = vmatpush1.bf16.msra.mxu0 %v1325
        %1342 = vmatprep.subr.bf16.mxu0 0
        %1343 = vmatpush1.bf16.msra.mxu0 %v1324
        %1344 = vmatprep.subr.bf16.mxu0 0
        %1345 = vmatpush1.bf16.msra.mxu0 %v1323
        %1346 = vmatprep.subr.bf16.mxu0 0
        %1347 = vmatpush1.bf16.msra.mxu0 %v1322
        %1348 = vmatprep.subr.bf16.mxu0 0
        %1349 = vmatpush1.bf16.msra.mxu0 %v1321
        %1350 = vmatprep.subr.bf16.mxu0 0
        %1351 = vmatpush1.bf16.msra.mxu0 %v1320
        %1352 = vmatprep.subr.bf16.mxu0 0
        %1353 = vmatpush2.bf16.msra.mxu0 0
        %1354 = vmatprep.subr.bf16.mxu0 0
        %1355 = vmatpush2.bf16.msra.mxu0 0
        %1356 = vmatprep.subr.bf16.mxu0 0
        %1357 = vmatpush2.bf16.msra.mxu0 0
        %1358 = vmatprep.subr.bf16.mxu0 0
        %1359 = vmatpush2.bf16.msra.mxu0 0
        %1360 = vmatprep.subr.bf16.mxu0 0
        %1361 = vmatpush2.bf16.msra.mxu0 0
        %1362 = vmatprep.subr.bf16.mxu0 0
        %1363 = vmatpush2.bf16.msra.mxu0 0
        %1364 = vmatprep.subr.bf16.mxu0 0
        %1365 = vmatpush2.bf16.msra.mxu0 0
        %1366 = vmatprep.subr.bf16.mxu0 0
        %1367 = vmatpush2.bf16.msra.mxu0 0
        %1368 = vmatprep.mubr.bf16.mxu0 0
        %1369 = vmatmul.mubr.bf16.gmra.mxu0 %v1257
        %v1370 = vpop.f32.mrf.mxu0
        %v1371 = vadd.f32 0.0, %v1370
        %v1372 = vpop.f32.mrf.mxu0
        %v1373 = vpop.f32.mrf.mxu0
        %v1374 = vadd.f32 0.0, %v1373
        %v1375 = vpop.f32.mrf.mxu0
        %1376 = vmatprep.mubr.bf16.mxu0 0
        %1377 = vmatmul.mubr.bf16.gmra.mxu0 %v1258
        %v1378 = vpop.f32.mrf.mxu0
        %v1379 = vadd.f32 0.0, %v1378
        %v1380 = vpop.f32.mrf.mxu0
        %v1381 = vpop.f32.mrf.mxu0
        %v1382 = vadd.f32 0.0, %v1381
        %v1383 = vpop.f32.mrf.mxu0
        %1384 = vmatprep.mubr.bf16.mxu0 0
        %1385 = vmatmul.mubr.bf16.gmra.mxu0 %v1257
        %v1386 = vpop.f32.mrf.mxu0
        %v1387 = vadd.f32 0.0, %v1386
        %v1388 = vpop.f32.mrf.mxu0
        %v1389 = vpop.f32.mrf.mxu0
        %v1390 = vadd.f32 0.0, %v1389
        %v1391 = vpop.f32.mrf.mxu0
        %1392 = vmatprep.mubr.bf16.mxu0 0
        %1393 = vmatmul.mubr.bf16.gmra.mxu0 %v1259
        %v1394 = vpop.f32.mrf.mxu0
        %v1395 = vadd.f32 0.0, %v1394
        %v1396 = vpop.f32.mrf.mxu0
        %v1397 = vpop.f32.mrf.mxu0
        %v1398 = vadd.f32 0.0, %v1397
        %v1399 = vpop.f32.mrf.mxu0
        %1400 = vmatprep.mubr.bf16.mxu0 0
        %1401 = vmatmul.mubr.bf16.gmra.mxu0 %v1260
        %v1402 = vpop.f32.mrf.mxu0
        %v1403 = vadd.f32 0.0, %v1402
        %v1404 = vpop.f32.mrf.mxu0
        %v1405 = vpop.f32.mrf.mxu0
        %v1406 = vadd.f32 0.0, %v1405
        %v1407 = vpop.f32.mrf.mxu0
        %1408 = vmatprep.mubr.bf16.mxu0 0
        %1409 = vmatmul.mubr.bf16.gmra.mxu0 %v1261
        %v1410 = vpop.f32.mrf.mxu0
        %v1411 = vadd.f32 0.0, %v1410
        %v1412 = vpop.f32.mrf.mxu0
        %v1413 = vpop.f32.mrf.mxu0
        %v1414 = vadd.f32 0.0, %v1413
        %v1415 = vpop.f32.mrf.mxu0
        %1416 = vmatprep.mubr.bf16.mxu0 0
        %1417 = vmatmul.mubr.bf16.gmra.mxu0 %v1262
        %v1418 = vpop.f32.mrf.mxu0
        %v1419 = vadd.f32 0.0, %v1418
        %v1420 = vpop.f32.mrf.mxu0
        %v1421 = vpop.f32.mrf.mxu0
        %v1422 = vadd.f32 0.0, %v1421
        %v1423 = vpop.f32.mrf.mxu0
        %1424 = vmatprep.mubr.bf16.mxu0 0
        %1425 = vmatmul.mubr.bf16.gmra.mxu0 %v1263
        %v1426 = vpop.f32.mrf.mxu0
        %v1427 = vadd.f32 0.0, %v1426
        %v1428 = vpop.f32.mrf.mxu0
        %v1429 = vpop.f32.mrf.mxu0
        %v1430 = vadd.f32 0.0, %v1429
        %v1431 = vpop.f32.mrf.mxu0
        %1432 = vmatprep.mubr.bf16.mxu0 0
        %1433 = vmatmul.mubr.bf16.gmra.mxu0 %v1264
        %v1434 = vpop.f32.mrf.mxu0
        %v1435 = vadd.f32 0.0, %v1434
        %v1436 = vpop.f32.mrf.mxu0
        %v1437 = vpop.f32.mrf.mxu0
        %v1438 = vadd.f32 0.0, %v1437
        %v1439 = vpop.f32.mrf.mxu0
        %1440 = vmatprep.mubr.bf16.mxu0 0
        %1441 = vmatmul.mubr.bf16.gmra.mxu0 %v1265
        %v1442 = vpop.f32.mrf.mxu0
        %v1443 = vadd.f32 0.0, %v1442
        %v1444 = vpop.f32.mrf.mxu0
        %v1445 = vpop.f32.mrf.mxu0
        %v1446 = vadd.f32 0.0, %v1445
        %v1447 = vpop.f32.mrf.mxu0
        %1448 = vmatprep.mubr.bf16.mxu0 0
        %1449 = vmatmul.mubr.bf16.gmra.mxu0 %v1266
        %v1450 = vpop.f32.mrf.mxu0
        %v1451 = vadd.f32 0.0, %v1450
        %v1452 = vpop.f32.mrf.mxu0
        %v1453 = vpop.f32.mrf.mxu0
        %v1454 = vadd.f32 0.0, %v1453
        %v1455 = vpop.f32.mrf.mxu0
        %1456 = vmatprep.mubr.bf16.mxu0 0
        %1457 = vmatmul.mubr.bf16.gmra.mxu0 %v1267
        %v1458 = vpop.f32.mrf.mxu0
        %v1459 = vadd.f32 0.0, %v1458
        %v1460 = vpop.f32.mrf.mxu0
        %v1461 = vpop.f32.mrf.mxu0
        %v1462 = vadd.f32 0.0, %v1461
        %v1463 = vpop.f32.mrf.mxu0
        %1464 = vmatprep.mubr.bf16.mxu0 0
        %1465 = vmatmul.mubr.bf16.gmra.mxu0 %v1268
        %v1466 = vpop.f32.mrf.mxu0
        %v1467 = vadd.f32 0.0, %v1466
        %v1468 = vpop.f32.mrf.mxu0
        %v1469 = vpop.f32.mrf.mxu0
        %v1470 = vadd.f32 0.0, %v1469
        %v1471 = vpop.f32.mrf.mxu0
        %1472 = vmatprep.mubr.bf16.mxu0 0
        %1473 = vmatmul.mubr.bf16.gmra.mxu0 %v1269
        %v1474 = vpop.f32.mrf.mxu0
        %v1475 = vadd.f32 0.0, %v1474
        %v1476 = vpop.f32.mrf.mxu0
        %v1477 = vpop.f32.mrf.mxu0
        %v1478 = vadd.f32 0.0, %v1477
        %v1479 = vpop.f32.mrf.mxu0
        %1480 = vmatprep.mubr.bf16.mxu0 0
        %1481 = vmatmul.mubr.bf16.gmra.mxu0 %v1270
        %v1482 = vpop.f32.mrf.mxu0
        %v1483 = vadd.f32 0.0, %v1482
        %v1484 = vpop.f32.mrf.mxu0
        %v1485 = vpop.f32.mrf.mxu0
        %v1486 = vadd.f32 0.0, %v1485
        %v1487 = vpop.f32.mrf.mxu0
        %1488 = vmatprep.mubr.bf16.mxu0 0
        %1489 = vmatmul.mubr.bf16.gmra.mxu0 %v1271
        %v1490 = vpop.f32.mrf.mxu0
        %v1491 = vadd.f32 0.0, %v1490
        %v1492 = vpop.f32.mrf.mxu0
        %v1493 = vpop.f32.mrf.mxu0
        %v1494 = vadd.f32 0.0, %v1493
        %v1495 = vpop.f32.mrf.mxu0
        %1496 = vdwg.mxu0
        %v1497 = vadd.f32 %v1025, %v1371
        %v1498 = vadd.f32 %v1028, %v1374
        %v1499 = vadd.f32 %v1033, %v1379
        %v1500 = vadd.f32 %v1036, %v1382
        %v1501 = vadd.f32 %v1041, %v1387
        %v1502 = vadd.f32 %v1044, %v1390
        %v1503 = vadd.f32 %v1049, %v1395
        %v1504 = vadd.f32 %v1052, %v1398
        %v1505 = vadd.f32 %v1057, %v1403
        %v1506 = vadd.f32 %v1060, %v1406
        %v1507 = vadd.f32 %v1065, %v1411
        %v1508 = vadd.f32 %v1068, %v1414
        %v1509 = vadd.f32 %v1073, %v1419
        %v1510 = vadd.f32 %v1076, %v1422
        %v1511 = vadd.f32 %v1081, %v1427
        %v1512 = vadd.f32 %v1084, %v1430
        %v1513 = vadd.f32 %v1089, %v1435
        %v1514 = vadd.f32 %v1092, %v1438
        %v1515 = vadd.f32 %v1097, %v1443
        %v1516 = vadd.f32 %v1100, %v1446
        %v1517 = vadd.f32 %v1105, %v1451
        %v1518 = vadd.f32 %v1108, %v1454
        %v1519 = vadd.f32 %v1113, %v1459
        %v1520 = vadd.f32 %v1116, %v1462
        %v1521 = vadd.f32 %v1121, %v1467
        %v1522 = vadd.f32 %v1124, %v1470
        %v1523 = vadd.f32 %v1129, %v1475
        %v1524 = vadd.f32 %v1132, %v1478
        %v1525 = vadd.f32 %v1137, %v1483
        %v1526 = vadd.f32 %v1140, %v1486
        %v1527 = vadd.f32 %v1145, %v1491
        %v1528 = vadd.f32 %v1148, %v1494
        %v1529 = vpack.c.bf16 %v422, %v518
        %v1530 = vld [vmem:[%s1 + $0xc0] sm:$0xf]
        %v1531 = vld [vmem:[%s1 + $0xc4] sm:$0xf]
        %v1532 = vld [vmem:[%s1 + $0xc8] sm:$0xf]
        %v1533 = vld [vmem:[%s1 + $0xcc] sm:$0xf]
        %v1534 = vld [vmem:[%s1 + $0xd0] sm:$0xf]
        %v1535 = vld [vmem:[%s1 + $0xd4] sm:$0xf]
        %v1536 = vld [vmem:[%s1 + $0xd8] sm:$0xf]
        %v1537 = vld [vmem:[%s1 + $0xdc] sm:$0xf]
        %v1538 = vld [vmem:[%s1 + $0xe0] sm:$0xf]
        %v1539 = vld [vmem:[%s1 + $0xe4] sm:$0xf]
        %v1540 = vld [vmem:[%s1 + $0xe8] sm:$0xf]
        %v1541 = vld [vmem:[%s1 + $0xec] sm:$0xf]
        %v1542 = vld [vmem:[%s1 + $0xf0] sm:$0xf]
        %v1543 = vld [vmem:[%s1 + $0xf4] sm:$0xf]
        %v1544 = vld [vmem:[%s1 + $0xf8] sm:$0xf]
        %v1545 = vld [vmem:[%s1 + $0xfc] sm:$0xf]
        %v1562 = vunpack.c.l.b16 %v1530
        %v1563 = vunpack.c.l.b16 %v1531
        %v1564 = vunpack.c.l.b16 %v1532
        %v1565 = vunpack.c.l.b16 %v1533
        %v1566 = vunpack.c.l.b16 %v1534
        %v1567 = vunpack.c.l.b16 %v1535
        %v1568 = vunpack.c.l.b16 %v1536
        %v1569 = vunpack.c.l.b16 %v1537
        %v1570 = vunpack.c.l.b16 %v1538
        %v1571 = vunpack.c.l.b16 %v1539
        %v1572 = vunpack.c.l.b16 %v1540
        %v1573 = vunpack.c.l.b16 %v1541
        %v1574 = vunpack.c.l.b16 %v1542
        %v1575 = vunpack.c.l.b16 %v1543
        %v1576 = vunpack.c.l.b16 %v1544
        %v1577 = vunpack.c.l.b16 %v1545
        %v1578 = vpack.c.b16 %v1563, %v1562
        %v1579 = vpack.c.b16 %v1565, %v1564
        %v1580 = vpack.c.b16 %v1567, %v1566
        %v1581 = vpack.c.b16 %v1569, %v1568
        %v1582 = vpack.c.b16 %v1571, %v1570
        %v1583 = vpack.c.b16 %v1573, %v1572
        %v1584 = vpack.c.b16 %v1575, %v1574
        %v1585 = vpack.c.b16 %v1577, %v1576
        %1594 = vmatprep.subr.bf16.mxu0 0
        %1595 = vmatpush1.bf16.msra.mxu0 %v1585
        %1596 = vmatprep.subr.bf16.mxu0 0
        %1597 = vmatpush1.bf16.msra.mxu0 %v1584
        %1598 = vmatprep.subr.bf16.mxu0 0
        %1599 = vmatpush1.bf16.msra.mxu0 %v1583
        %1600 = vmatprep.subr.bf16.mxu0 0
        %1601 = vmatpush1.bf16.msra.mxu0 %v1582
        %1602 = vmatprep.subr.bf16.mxu0 0
        %1603 = vmatpush1.bf16.msra.mxu0 %v1581
        %1604 = vmatprep.subr.bf16.mxu0 0
        %1605 = vmatpush1.bf16.msra.mxu0 %v1580
        %1606 = vmatprep.subr.bf16.mxu0 0
        %1607 = vmatpush1.bf16.msra.mxu0 %v1579
        %1608 = vmatprep.subr.bf16.mxu0 0
        %1609 = vmatpush1.bf16.msra.mxu0 %v1578
        %1610 = vmatprep.subr.bf16.mxu0 0
        %1611 = vmatpush2.bf16.msra.mxu0 0
        %1612 = vmatprep.subr.bf16.mxu0 0
        %1613 = vmatpush2.bf16.msra.mxu0 0
        %1614 = vmatprep.subr.bf16.mxu0 0
        %1615 = vmatpush2.bf16.msra.mxu0 0
        %1616 = vmatprep.subr.bf16.mxu0 0
        %1617 = vmatpush2.bf16.msra.mxu0 0
        %1618 = vmatprep.subr.bf16.mxu0 0
        %1619 = vmatpush2.bf16.msra.mxu0 0
        %1620 = vmatprep.subr.bf16.mxu0 0
        %1621 = vmatpush2.bf16.msra.mxu0 0
        %1622 = vmatprep.subr.bf16.mxu0 0
        %1623 = vmatpush2.bf16.msra.mxu0 0
        %1624 = vmatprep.subr.bf16.mxu0 0
        %1625 = vmatpush2.bf16.msra.mxu0 0
        %1626 = vmatprep.mubr.bf16.mxu0 0
        %1627 = vmatmul.mubr.bf16.gmra.mxu0 %v536
        %v1628 = vpop.f32.mrf.mxu0
        %v1629 = vadd.f32 0.0, %v1628
        %v1630 = vpop.f32.mrf.mxu0
        %v1631 = vpop.f32.mrf.mxu0
        %v1632 = vadd.f32 0.0, %v1631
        %v1633 = vpop.f32.mrf.mxu0
        %1634 = vmatprep.mubr.bf16.mxu0 0
        %1635 = vmatmul.mubr.bf16.gmra.mxu0 %v535
        %v1636 = vpop.f32.mrf.mxu0
        %v1637 = vadd.f32 0.0, %v1636
        %v1638 = vpop.f32.mrf.mxu0
        %v1639 = vpop.f32.mrf.mxu0
        %v1640 = vadd.f32 0.0, %v1639
        %v1641 = vpop.f32.mrf.mxu0
        %1642 = vmatprep.mubr.bf16.mxu0 0
        %1643 = vmatmul.mubr.bf16.gmra.mxu0 %v537
        %v1644 = vpop.f32.mrf.mxu0
        %v1645 = vadd.f32 0.0, %v1644
        %v1646 = vpop.f32.mrf.mxu0
        %v1647 = vpop.f32.mrf.mxu0
        %v1648 = vadd.f32 0.0, %v1647
        %v1649 = vpop.f32.mrf.mxu0
        %1650 = vmatprep.mubr.bf16.mxu0 0
        %1651 = vmatmul.mubr.bf16.gmra.mxu0 %v538
        %v1652 = vpop.f32.mrf.mxu0
        %v1653 = vadd.f32 0.0, %v1652
        %v1654 = vpop.f32.mrf.mxu0
        %v1655 = vpop.f32.mrf.mxu0
        %v1656 = vadd.f32 0.0, %v1655
        %v1657 = vpop.f32.mrf.mxu0
        %1658 = vmatprep.mubr.bf16.mxu0 0
        %1659 = vmatmul.mubr.bf16.gmra.mxu0 %v539
        %v1660 = vpop.f32.mrf.mxu0
        %v1661 = vadd.f32 0.0, %v1660
        %v1662 = vpop.f32.mrf.mxu0
        %v1663 = vpop.f32.mrf.mxu0
        %v1664 = vadd.f32 0.0, %v1663
        %v1665 = vpop.f32.mrf.mxu0
        %1666 = vmatprep.mubr.bf16.mxu0 0
        %1667 = vmatmul.mubr.bf16.gmra.mxu0 %v540
        %v1668 = vpop.f32.mrf.mxu0
        %v1669 = vadd.f32 0.0, %v1668
        %v1670 = vpop.f32.mrf.mxu0
        %v1671 = vpop.f32.mrf.mxu0
        %v1672 = vadd.f32 0.0, %v1671
        %v1673 = vpop.f32.mrf.mxu0
        %1674 = vmatprep.mubr.bf16.mxu0 0
        %1675 = vmatmul.mubr.bf16.gmra.mxu0 %v541
        %v1676 = vpop.f32.mrf.mxu0
        %v1677 = vadd.f32 0.0, %v1676
        %v1678 = vpop.f32.mrf.mxu0
        %v1679 = vpop.f32.mrf.mxu0
        %v1680 = vadd.f32 0.0, %v1679
        %v1681 = vpop.f32.mrf.mxu0
        %1682 = vmatprep.mubr.bf16.mxu0 0
        %1683 = vmatmul.mubr.bf16.gmra.mxu0 %v542
        %v1684 = vpop.f32.mrf.mxu0
        %v1685 = vadd.f32 0.0, %v1684
        %v1686 = vpop.f32.mrf.mxu0
        %v1687 = vpop.f32.mrf.mxu0
        %v1688 = vadd.f32 0.0, %v1687
        %v1689 = vpop.f32.mrf.mxu0
        %1690 = vmatprep.mubr.bf16.mxu0 0
        %1691 = vmatmul.mubr.bf16.gmra.mxu0 %v543
        %v1692 = vpop.f32.mrf.mxu0
        %v1693 = vadd.f32 0.0, %v1692
        %v1694 = vpop.f32.mrf.mxu0
        %v1695 = vpop.f32.mrf.mxu0
        %v1696 = vadd.f32 0.0, %v1695
        %v1697 = vpop.f32.mrf.mxu0
        %1698 = vmatprep.mubr.bf16.mxu0 0
        %1699 = vmatmul.mubr.bf16.gmra.mxu0 %v544
        %v1700 = vpop.f32.mrf.mxu0
        %v1701 = vadd.f32 0.0, %v1700
        %v1702 = vpop.f32.mrf.mxu0
        %v1703 = vpop.f32.mrf.mxu0
        %v1704 = vadd.f32 0.0, %v1703
        %v1705 = vpop.f32.mrf.mxu0
        %1706 = vmatprep.mubr.bf16.mxu0 0
        %1707 = vmatmul.mubr.bf16.gmra.mxu0 %v545
        %v1708 = vpop.f32.mrf.mxu0
        %v1709 = vadd.f32 0.0, %v1708
        %v1710 = vpop.f32.mrf.mxu0
        %v1711 = vpop.f32.mrf.mxu0
        %v1712 = vadd.f32 0.0, %v1711
        %v1713 = vpop.f32.mrf.mxu0
        %1714 = vmatprep.mubr.bf16.mxu0 0
        %1715 = vmatmul.mubr.bf16.gmra.mxu0 %v546
        %v1716 = vpop.f32.mrf.mxu0
        %v1717 = vadd.f32 0.0, %v1716
        %v1718 = vpop.f32.mrf.mxu0
        %v1719 = vpop.f32.mrf.mxu0
        %v1720 = vadd.f32 0.0, %v1719
        %v1721 = vpop.f32.mrf.mxu0
        %1722 = vmatprep.mubr.bf16.mxu0 0
        %1723 = vmatmul.mubr.bf16.gmra.mxu0 %v547
        %v1724 = vpop.f32.mrf.mxu0
        %v1725 = vadd.f32 0.0, %v1724
        %v1726 = vpop.f32.mrf.mxu0
        %v1727 = vpop.f32.mrf.mxu0
        %v1728 = vadd.f32 0.0, %v1727
        %v1729 = vpop.f32.mrf.mxu0
        %1730 = vmatprep.mubr.bf16.mxu0 0
        %1731 = vmatmul.mubr.bf16.gmra.mxu0 %v548
        %v1732 = vpop.f32.mrf.mxu0
        %v1733 = vadd.f32 0.0, %v1732
        %v1734 = vpop.f32.mrf.mxu0
        %v1735 = vpop.f32.mrf.mxu0
        %v1736 = vadd.f32 0.0, %v1735
        %v1737 = vpop.f32.mrf.mxu0
        %1738 = vmatprep.mubr.bf16.mxu0 0
        %1739 = vmatmul.mubr.bf16.gmra.mxu0 %v549
        %v1740 = vpop.f32.mrf.mxu0
        %v1741 = vadd.f32 0.0, %v1740
        %v1742 = vpop.f32.mrf.mxu0
        %v1743 = vpop.f32.mrf.mxu0
        %v1744 = vadd.f32 0.0, %v1743
        %v1745 = vpop.f32.mrf.mxu0
        %1746 = vmatprep.mubr.bf16.mxu0 0
        %1747 = vmatmul.mubr.bf16.gmra.mxu0 %v1529
        %v1748 = vpop.f32.mrf.mxu0
        %v1749 = vadd.f32 0.0, %v1748
        %v1750 = vpop.f32.mrf.mxu0
        %v1751 = vpop.f32.mrf.mxu0
        %v1752 = vadd.f32 0.0, %v1751
        %v1753 = vpop.f32.mrf.mxu0
        %1754 = vdwg.mxu0
        %v1755 = vadd.f32 %v1497, %v1629
        %v1756 = vadd.f32 %v1498, %v1632
        %v1757 = vadd.f32 %v1499, %v1637
        %v1758 = vadd.f32 %v1500, %v1640
        %v1759 = vadd.f32 %v1501, %v1645
        %v1760 = vadd.f32 %v1502, %v1648
        %v1761 = vadd.f32 %v1503, %v1653
        %v1762 = vadd.f32 %v1504, %v1656
        %v1763 = vadd.f32 %v1505, %v1661
        %v1764 = vadd.f32 %v1506, %v1664
        %v1765 = vadd.f32 %v1507, %v1669
        %v1766 = vadd.f32 %v1508, %v1672
        %v1767 = vadd.f32 %v1509, %v1677
        %v1768 = vadd.f32 %v1510, %v1680
        %v1769 = vadd.f32 %v1511, %v1685
        %v1770 = vadd.f32 %v1512, %v1688
        %v1771 = vadd.f32 %v1513, %v1693
        %v1772 = vadd.f32 %v1514, %v1696
        %v1773 = vadd.f32 %v1515, %v1701
        %v1774 = vadd.f32 %v1516, %v1704
        %v1775 = vadd.f32 %v1517, %v1709
        %v1776 = vadd.f32 %v1518, %v1712
        %v1777 = vadd.f32 %v1519, %v1717
        %v1778 = vadd.f32 %v1520, %v1720
        %v1779 = vadd.f32 %v1521, %v1725
        %v1780 = vadd.f32 %v1522, %v1728
        %v1781 = vadd.f32 %v1523, %v1733
        %v1782 = vadd.f32 %v1524, %v1736
        %v1783 = vadd.f32 %v1525, %v1741
        %v1784 = vadd.f32 %v1526, %v1744
        %v1785 = vadd.f32 %v1527, %v1749
        %v1786 = vadd.f32 %v1528, %v1752
        %v1789 = vrot.slane %v518, 1
        %v1790 = vrot.slane %v422, 1
        %v1791 = vsel %vm596, %v1789, %v1790
        %v1792 = vrot.slane %v534, 1
        %v1793 = vsel %vm596, %v1790, %v1792
        %v1796 = vpack.c.bf16 %v1793, %v1791
        %v1797 = vld [vmem:[%s1 + $0x100] sm:$0xf]
        %v1798 = vld [vmem:[%s1 + $0x104] sm:$0xf]
        %v1799 = vld [vmem:[%s1 + $0x108] sm:$0xf]
        %v1800 = vld [vmem:[%s1 + $0x10c] sm:$0xf]
        %v1801 = vld [vmem:[%s1 + $0x110] sm:$0xf]
        %v1802 = vld [vmem:[%s1 + $0x114] sm:$0xf]
        %v1803 = vld [vmem:[%s1 + $0x118] sm:$0xf]
        %v1804 = vld [vmem:[%s1 + $0x11c] sm:$0xf]
        %v1805 = vld [vmem:[%s1 + $0x120] sm:$0xf]
        %v1806 = vld [vmem:[%s1 + $0x124] sm:$0xf]
        %v1807 = vld [vmem:[%s1 + $0x128] sm:$0xf]
        %v1808 = vld [vmem:[%s1 + $0x12c] sm:$0xf]
        %v1809 = vld [vmem:[%s1 + $0x130] sm:$0xf]
        %v1810 = vld [vmem:[%s1 + $0x134] sm:$0xf]
        %v1811 = vld [vmem:[%s1 + $0x138] sm:$0xf]
        %v1812 = vld [vmem:[%s1 + $0x13c] sm:$0xf]
        %v1829 = vunpack.c.l.b16 %v1797
        %v1830 = vunpack.c.l.b16 %v1798
        %v1831 = vunpack.c.l.b16 %v1799
        %v1832 = vunpack.c.l.b16 %v1800
        %v1833 = vunpack.c.l.b16 %v1801
        %v1834 = vunpack.c.l.b16 %v1802
        %v1835 = vunpack.c.l.b16 %v1803
        %v1836 = vunpack.c.l.b16 %v1804
        %v1837 = vunpack.c.l.b16 %v1805
        %v1838 = vunpack.c.l.b16 %v1806
        %v1839 = vunpack.c.l.b16 %v1807
        %v1840 = vunpack.c.l.b16 %v1808
        %v1841 = vunpack.c.l.b16 %v1809
        %v1842 = vunpack.c.l.b16 %v1810
        %v1843 = vunpack.c.l.b16 %v1811
        %v1844 = vunpack.c.l.b16 %v1812
        %v1845 = vpack.c.b16 %v1830, %v1829
        %v1846 = vpack.c.b16 %v1832, %v1831
        %v1847 = vpack.c.b16 %v1834, %v1833
        %v1848 = vpack.c.b16 %v1836, %v1835
        %v1849 = vpack.c.b16 %v1838, %v1837
        %v1850 = vpack.c.b16 %v1840, %v1839
        %v1851 = vpack.c.b16 %v1842, %v1841
        %v1852 = vpack.c.b16 %v1844, %v1843
        %1861 = vmatprep.subr.bf16.mxu0 0
        %1862 = vmatpush1.bf16.msra.mxu0 %v1852
        %1863 = vmatprep.subr.bf16.mxu0 0
        %1864 = vmatpush1.bf16.msra.mxu0 %v1851
        %1865 = vmatprep.subr.bf16.mxu0 0
        %1866 = vmatpush1.bf16.msra.mxu0 %v1850
        %1867 = vmatprep.subr.bf16.mxu0 0
        %1868 = vmatpush1.bf16.msra.mxu0 %v1849
        %1869 = vmatprep.subr.bf16.mxu0 0
        %1870 = vmatpush1.bf16.msra.mxu0 %v1848
        %1871 = vmatprep.subr.bf16.mxu0 0
        %1872 = vmatpush1.bf16.msra.mxu0 %v1847
        %1873 = vmatprep.subr.bf16.mxu0 0
        %1874 = vmatpush1.bf16.msra.mxu0 %v1846
        %1875 = vmatprep.subr.bf16.mxu0 0
        %1876 = vmatpush1.bf16.msra.mxu0 %v1845
        %1877 = vmatprep.subr.bf16.mxu0 0
        %1878 = vmatpush2.bf16.msra.mxu0 0
        %1879 = vmatprep.subr.bf16.mxu0 0
        %1880 = vmatpush2.bf16.msra.mxu0 0
        %1881 = vmatprep.subr.bf16.mxu0 0
        %1882 = vmatpush2.bf16.msra.mxu0 0
        %1883 = vmatprep.subr.bf16.mxu0 0
        %1884 = vmatpush2.bf16.msra.mxu0 0
        %1885 = vmatprep.subr.bf16.mxu0 0
        %1886 = vmatpush2.bf16.msra.mxu0 0
        %1887 = vmatprep.subr.bf16.mxu0 0
        %1888 = vmatpush2.bf16.msra.mxu0 0
        %1889 = vmatprep.subr.bf16.mxu0 0
        %1890 = vmatpush2.bf16.msra.mxu0 0
        %1891 = vmatprep.subr.bf16.mxu0 0
        %1892 = vmatpush2.bf16.msra.mxu0 0
        %1893 = vmatprep.mubr.bf16.mxu0 0
        %1894 = vmatmul.mubr.bf16.gmra.mxu0 %v703
        %v1895 = vpop.f32.mrf.mxu0
        %v1896 = vadd.f32 0.0, %v1895
        %v1897 = vpop.f32.mrf.mxu0
        %v1898 = vpop.f32.mrf.mxu0
        %v1899 = vadd.f32 0.0, %v1898
        %v1900 = vpop.f32.mrf.mxu0
        %1901 = vmatprep.mubr.bf16.mxu0 0
        %1902 = vmatmul.mubr.bf16.gmra.mxu0 %v702
        %v1903 = vpop.f32.mrf.mxu0
        %v1904 = vadd.f32 0.0, %v1903
        %v1905 = vpop.f32.mrf.mxu0
        %v1906 = vpop.f32.mrf.mxu0
        %v1907 = vadd.f32 0.0, %v1906
        %v1908 = vpop.f32.mrf.mxu0
        %1909 = vmatprep.mubr.bf16.mxu0 0
        %1910 = vmatmul.mubr.bf16.gmra.mxu0 %v704
        %v1911 = vpop.f32.mrf.mxu0
        %v1912 = vadd.f32 0.0, %v1911
        %v1913 = vpop.f32.mrf.mxu0
        %v1914 = vpop.f32.mrf.mxu0
        %v1915 = vadd.f32 0.0, %v1914
        %v1916 = vpop.f32.mrf.mxu0
        %1917 = vmatprep.mubr.bf16.mxu0 0
        %1918 = vmatmul.mubr.bf16.gmra.mxu0 %v705
        %v1919 = vpop.f32.mrf.mxu0
        %v1920 = vadd.f32 0.0, %v1919
        %v1921 = vpop.f32.mrf.mxu0
        %v1922 = vpop.f32.mrf.mxu0
        %v1923 = vadd.f32 0.0, %v1922
        %v1924 = vpop.f32.mrf.mxu0
        %1925 = vmatprep.mubr.bf16.mxu0 0
        %1926 = vmatmul.mubr.bf16.gmra.mxu0 %v706
        %v1927 = vpop.f32.mrf.mxu0
        %v1928 = vadd.f32 0.0, %v1927
        %v1929 = vpop.f32.mrf.mxu0
        %v1930 = vpop.f32.mrf.mxu0
        %v1931 = vadd.f32 0.0, %v1930
        %v1932 = vpop.f32.mrf.mxu0
        %1933 = vmatprep.mubr.bf16.mxu0 0
        %1934 = vmatmul.mubr.bf16.gmra.mxu0 %v707
        %v1935 = vpop.f32.mrf.mxu0
        %v1936 = vadd.f32 0.0, %v1935
        %v1937 = vpop.f32.mrf.mxu0
        %v1938 = vpop.f32.mrf.mxu0
        %v1939 = vadd.f32 0.0, %v1938
        %v1940 = vpop.f32.mrf.mxu0
        %1941 = vmatprep.mubr.bf16.mxu0 0
        %1942 = vmatmul.mubr.bf16.gmra.mxu0 %v708
        %v1943 = vpop.f32.mrf.mxu0
        %v1944 = vadd.f32 0.0, %v1943
        %v1945 = vpop.f32.mrf.mxu0
        %v1946 = vpop.f32.mrf.mxu0
        %v1947 = vadd.f32 0.0, %v1946
        %v1948 = vpop.f32.mrf.mxu0
        %1949 = vmatprep.mubr.bf16.mxu0 0
        %1950 = vmatmul.mubr.bf16.gmra.mxu0 %v709
        %v1951 = vpop.f32.mrf.mxu0
        %v1952 = vadd.f32 0.0, %v1951
        %v1953 = vpop.f32.mrf.mxu0
        %v1954 = vpop.f32.mrf.mxu0
        %v1955 = vadd.f32 0.0, %v1954
        %v1956 = vpop.f32.mrf.mxu0
        %1957 = vmatprep.mubr.bf16.mxu0 0
        %1958 = vmatmul.mubr.bf16.gmra.mxu0 %v710
        %v1959 = vpop.f32.mrf.mxu0
        %v1960 = vadd.f32 0.0, %v1959
        %v1961 = vpop.f32.mrf.mxu0
        %v1962 = vpop.f32.mrf.mxu0
        %v1963 = vadd.f32 0.0, %v1962
        %v1964 = vpop.f32.mrf.mxu0
        %1965 = vmatprep.mubr.bf16.mxu0 0
        %1966 = vmatmul.mubr.bf16.gmra.mxu0 %v711
        %v1967 = vpop.f32.mrf.mxu0
        %v1968 = vadd.f32 0.0, %v1967
        %v1969 = vpop.f32.mrf.mxu0
        %v1970 = vpop.f32.mrf.mxu0
        %v1971 = vadd.f32 0.0, %v1970
        %v1972 = vpop.f32.mrf.mxu0
        %1973 = vmatprep.mubr.bf16.mxu0 0
        %1974 = vmatmul.mubr.bf16.gmra.mxu0 %v712
        %v1975 = vpop.f32.mrf.mxu0
        %v1976 = vadd.f32 0.0, %v1975
        %v1977 = vpop.f32.mrf.mxu0
        %v1978 = vpop.f32.mrf.mxu0
        %v1979 = vadd.f32 0.0, %v1978
        %v1980 = vpop.f32.mrf.mxu0
        %1981 = vmatprep.mubr.bf16.mxu0 0
        %1982 = vmatmul.mubr.bf16.gmra.mxu0 %v713
        %v1983 = vpop.f32.mrf.mxu0
        %v1984 = vadd.f32 0.0, %v1983
        %v1985 = vpop.f32.mrf.mxu0
        %v1986 = vpop.f32.mrf.mxu0
        %v1987 = vadd.f32 0.0, %v1986
        %v1988 = vpop.f32.mrf.mxu0
        %1989 = vmatprep.mubr.bf16.mxu0 0
        %1990 = vmatmul.mubr.bf16.gmra.mxu0 %v714
        %v1991 = vpop.f32.mrf.mxu0
        %v1992 = vadd.f32 0.0, %v1991
        %v1993 = vpop.f32.mrf.mxu0
        %v1994 = vpop.f32.mrf.mxu0
        %v1995 = vadd.f32 0.0, %v1994
        %v1996 = vpop.f32.mrf.mxu0
        %1997 = vmatprep.mubr.bf16.mxu0 0
        %1998 = vmatmul.mubr.bf16.gmra.mxu0 %v715
        %v1999 = vpop.f32.mrf.mxu0
        %v2000 = vadd.f32 0.0, %v1999
        %v2001 = vpop.f32.mrf.mxu0
        %v2002 = vpop.f32.mrf.mxu0
        %v2003 = vadd.f32 0.0, %v2002
        %v2004 = vpop.f32.mrf.mxu0
        %2005 = vmatprep.mubr.bf16.mxu0 0
        %2006 = vmatmul.mubr.bf16.gmra.mxu0 %v716
        %v2007 = vpop.f32.mrf.mxu0
        %v2008 = vadd.f32 0.0, %v2007
        %v2009 = vpop.f32.mrf.mxu0
        %v2010 = vpop.f32.mrf.mxu0
        %v2011 = vadd.f32 0.0, %v2010
        %v2012 = vpop.f32.mrf.mxu0
        %2013 = vmatprep.mubr.bf16.mxu0 0
        %2014 = vmatmul.mubr.bf16.gmra.mxu0 %v1796
        %v2015 = vpop.f32.mrf.mxu0
        %v2016 = vadd.f32 0.0, %v2015
        %v2017 = vpop.f32.mrf.mxu0
        %v2018 = vpop.f32.mrf.mxu0
        %v2019 = vadd.f32 0.0, %v2018
        %v2020 = vpop.f32.mrf.mxu0
        %2021 = vdwg.mxu0
        %v2022 = vadd.f32 %v1755, %v1896
        %v2023 = vadd.f32 %v1756, %v1899
        %v2024 = vadd.f32 %v1757, %v1904
        %v2025 = vadd.f32 %v1758, %v1907
        %v2026 = vadd.f32 %v1759, %v1912
        %v2027 = vadd.f32 %v1760, %v1915
        %v2028 = vadd.f32 %v1761, %v1920
        %v2029 = vadd.f32 %v1762, %v1923
        %v2030 = vadd.f32 %v1763, %v1928
        %v2031 = vadd.f32 %v1764, %v1931
        %v2032 = vadd.f32 %v1765, %v1936
        %v2033 = vadd.f32 %v1766, %v1939
        %v2034 = vadd.f32 %v1767, %v1944
        %v2035 = vadd.f32 %v1768, %v1947
        %v2036 = vadd.f32 %v1769, %v1952
        %v2037 = vadd.f32 %v1770, %v1955
        %v2038 = vadd.f32 %v1771, %v1960
        %v2039 = vadd.f32 %v1772, %v1963
        %v2040 = vadd.f32 %v1773, %v1968
        %v2041 = vadd.f32 %v1774, %v1971
        %v2042 = vadd.f32 %v1775, %v1976
        %v2043 = vadd.f32 %v1776, %v1979
        %v2044 = vadd.f32 %v1777, %v1984
        %v2045 = vadd.f32 %v1778, %v1987
        %v2046 = vadd.f32 %v1779, %v1992
        %v2047 = vadd.f32 %v1780, %v1995
        %v2048 = vadd.f32 %v1781, %v2000
        %v2049 = vadd.f32 %v1782, %v2003
        %v2050 = vadd.f32 %v1783, %v2008
        %v2051 = vadd.f32 %v1784, %v2011
        %v2052 = vadd.f32 %v1785, %v2016
        %v2053 = vadd.f32 %v1786, %v2019
        %v2054 = vrot.slane %v518, 2
        %v2055 = vrot.slane %v422, 2
        %v2056 = vsel %vm1151, %v2054, %v2055
        %v2057 = vrot.slane %v534, 2
        %v2058 = vsel %vm1151, %v2055, %v2057
        %v2061 = vpack.c.bf16 %v2058, %v2056
        %v2062 = vld [vmem:[%s1 + $0x140] sm:$0xf]
        %v2063 = vld [vmem:[%s1 + $0x144] sm:$0xf]
        %v2064 = vld [vmem:[%s1 + $0x148] sm:$0xf]
        %v2065 = vld [vmem:[%s1 + $0x14c] sm:$0xf]
        %v2066 = vld [vmem:[%s1 + $0x150] sm:$0xf]
        %v2067 = vld [vmem:[%s1 + $0x154] sm:$0xf]
        %v2068 = vld [vmem:[%s1 + $0x158] sm:$0xf]
        %v2069 = vld [vmem:[%s1 + $0x15c] sm:$0xf]
        %v2070 = vld [vmem:[%s1 + $0x160] sm:$0xf]
        %v2071 = vld [vmem:[%s1 + $0x164] sm:$0xf]
        %v2072 = vld [vmem:[%s1 + $0x168] sm:$0xf]
        %v2073 = vld [vmem:[%s1 + $0x16c] sm:$0xf]
        %v2074 = vld [vmem:[%s1 + $0x170] sm:$0xf]
        %v2075 = vld [vmem:[%s1 + $0x174] sm:$0xf]
        %v2076 = vld [vmem:[%s1 + $0x178] sm:$0xf]
        %v2077 = vld [vmem:[%s1 + $0x17c] sm:$0xf]
        %v2094 = vunpack.c.l.b16 %v2062
        %v2095 = vunpack.c.l.b16 %v2063
        %v2096 = vunpack.c.l.b16 %v2064
        %v2097 = vunpack.c.l.b16 %v2065
        %v2098 = vunpack.c.l.b16 %v2066
        %v2099 = vunpack.c.l.b16 %v2067
        %v2100 = vunpack.c.l.b16 %v2068
        %v2101 = vunpack.c.l.b16 %v2069
        %v2102 = vunpack.c.l.b16 %v2070
        %v2103 = vunpack.c.l.b16 %v2071
        %v2104 = vunpack.c.l.b16 %v2072
        %v2105 = vunpack.c.l.b16 %v2073
        %v2106 = vunpack.c.l.b16 %v2074
        %v2107 = vunpack.c.l.b16 %v2075
        %v2108 = vunpack.c.l.b16 %v2076
        %v2109 = vunpack.c.l.b16 %v2077
        %v2110 = vpack.c.b16 %v2095, %v2094
        %v2111 = vpack.c.b16 %v2097, %v2096
        %v2112 = vpack.c.b16 %v2099, %v2098
        %v2113 = vpack.c.b16 %v2101, %v2100
        %v2114 = vpack.c.b16 %v2103, %v2102
        %v2115 = vpack.c.b16 %v2105, %v2104
        %v2116 = vpack.c.b16 %v2107, %v2106
        %v2117 = vpack.c.b16 %v2109, %v2108
        %2126 = vmatprep.subr.bf16.mxu0 0
        %2127 = vmatpush1.bf16.msra.mxu0 %v2117
        %2128 = vmatprep.subr.bf16.mxu0 0
        %2129 = vmatpush1.bf16.msra.mxu0 %v2116
        %2130 = vmatprep.subr.bf16.mxu0 0
        %2131 = vmatpush1.bf16.msra.mxu0 %v2115
        %2132 = vmatprep.subr.bf16.mxu0 0
        %2133 = vmatpush1.bf16.msra.mxu0 %v2114
        %2134 = vmatprep.subr.bf16.mxu0 0
        %2135 = vmatpush1.bf16.msra.mxu0 %v2113
        %2136 = vmatprep.subr.bf16.mxu0 0
        %2137 = vmatpush1.bf16.msra.mxu0 %v2112
        %2138 = vmatprep.subr.bf16.mxu0 0
        %2139 = vmatpush1.bf16.msra.mxu0 %v2111
        %2140 = vmatprep.subr.bf16.mxu0 0
        %2141 = vmatpush1.bf16.msra.mxu0 %v2110
        %2142 = vmatprep.subr.bf16.mxu0 0
        %2143 = vmatpush2.bf16.msra.mxu0 0
        %2144 = vmatprep.subr.bf16.mxu0 0
        %2145 = vmatpush2.bf16.msra.mxu0 0
        %2146 = vmatprep.subr.bf16.mxu0 0
        %2147 = vmatpush2.bf16.msra.mxu0 0
        %2148 = vmatprep.subr.bf16.mxu0 0
        %2149 = vmatpush2.bf16.msra.mxu0 0
        %2150 = vmatprep.subr.bf16.mxu0 0
        %2151 = vmatpush2.bf16.msra.mxu0 0
        %2152 = vmatprep.subr.bf16.mxu0 0
        %2153 = vmatpush2.bf16.msra.mxu0 0
        %2154 = vmatprep.subr.bf16.mxu0 0
        %2155 = vmatpush2.bf16.msra.mxu0 0
        %2156 = vmatprep.subr.bf16.mxu0 0
        %2157 = vmatpush2.bf16.msra.mxu0 0
        %2158 = vmatprep.mubr.bf16.mxu0 0
        %2159 = vmatmul.mubr.bf16.gmra.mxu0 %v1258
        %v2160 = vpop.f32.mrf.mxu0
        %v2161 = vadd.f32 0.0, %v2160
        %v2162 = vpop.f32.mrf.mxu0
        %v2163 = vpop.f32.mrf.mxu0
        %v2164 = vadd.f32 0.0, %v2163
        %v2165 = vpop.f32.mrf.mxu0
        %2166 = vmatprep.mubr.bf16.mxu0 0
        %2167 = vmatmul.mubr.bf16.gmra.mxu0 %v1257
        %v2168 = vpop.f32.mrf.mxu0
        %v2169 = vadd.f32 0.0, %v2168
        %v2170 = vpop.f32.mrf.mxu0
        %v2171 = vpop.f32.mrf.mxu0
        %v2172 = vadd.f32 0.0, %v2171
        %v2173 = vpop.f32.mrf.mxu0
        %2174 = vmatprep.mubr.bf16.mxu0 0
        %2175 = vmatmul.mubr.bf16.gmra.mxu0 %v1259
        %v2176 = vpop.f32.mrf.mxu0
        %v2177 = vadd.f32 0.0, %v2176
        %v2178 = vpop.f32.mrf.mxu0
        %v2179 = vpop.f32.mrf.mxu0
        %v2180 = vadd.f32 0.0, %v2179
        %v2181 = vpop.f32.mrf.mxu0
        %2182 = vmatprep.mubr.bf16.mxu0 0
        %2183 = vmatmul.mubr.bf16.gmra.mxu0 %v1260
        %v2184 = vpop.f32.mrf.mxu0
        %v2185 = vadd.f32 0.0, %v2184
        %v2186 = vpop.f32.mrf.mxu0
        %v2187 = vpop.f32.mrf.mxu0
        %v2188 = vadd.f32 0.0, %v2187
        %v2189 = vpop.f32.mrf.mxu0
        %2190 = vmatprep.mubr.bf16.mxu0 0
        %2191 = vmatmul.mubr.bf16.gmra.mxu0 %v1261
        %v2192 = vpop.f32.mrf.mxu0
        %v2193 = vadd.f32 0.0, %v2192
        %v2194 = vpop.f32.mrf.mxu0
        %v2195 = vpop.f32.mrf.mxu0
        %v2196 = vadd.f32 0.0, %v2195
        %v2197 = vpop.f32.mrf.mxu0
        %2198 = vmatprep.mubr.bf16.mxu0 0
        %2199 = vmatmul.mubr.bf16.gmra.mxu0 %v1262
        %v2200 = vpop.f32.mrf.mxu0
        %v2201 = vadd.f32 0.0, %v2200
        %v2202 = vpop.f32.mrf.mxu0
        %v2203 = vpop.f32.mrf.mxu0
        %v2204 = vadd.f32 0.0, %v2203
        %v2205 = vpop.f32.mrf.mxu0
        %2206 = vmatprep.mubr.bf16.mxu0 0
        %2207 = vmatmul.mubr.bf16.gmra.mxu0 %v1263
        %v2208 = vpop.f32.mrf.mxu0
        %v2209 = vadd.f32 0.0, %v2208
        %v2210 = vpop.f32.mrf.mxu0
        %v2211 = vpop.f32.mrf.mxu0
        %v2212 = vadd.f32 0.0, %v2211
        %v2213 = vpop.f32.mrf.mxu0
        %2214 = vmatprep.mubr.bf16.mxu0 0
        %2215 = vmatmul.mubr.bf16.gmra.mxu0 %v1264
        %v2216 = vpop.f32.mrf.mxu0
        %v2217 = vadd.f32 0.0, %v2216
        %v2218 = vpop.f32.mrf.mxu0
        %v2219 = vpop.f32.mrf.mxu0
        %v2220 = vadd.f32 0.0, %v2219
        %v2221 = vpop.f32.mrf.mxu0
        %2222 = vmatprep.mubr.bf16.mxu0 0
        %2223 = vmatmul.mubr.bf16.gmra.mxu0 %v1265
        %v2224 = vpop.f32.mrf.mxu0
        %v2225 = vadd.f32 0.0, %v2224
        %v2226 = vpop.f32.mrf.mxu0
        %v2227 = vpop.f32.mrf.mxu0
        %v2228 = vadd.f32 0.0, %v2227
        %v2229 = vpop.f32.mrf.mxu0
        %2230 = vmatprep.mubr.bf16.mxu0 0
        %2231 = vmatmul.mubr.bf16.gmra.mxu0 %v1266
        %v2232 = vpop.f32.mrf.mxu0
        %v2233 = vadd.f32 0.0, %v2232
        %v2234 = vpop.f32.mrf.mxu0
        %v2235 = vpop.f32.mrf.mxu0
        %v2236 = vadd.f32 0.0, %v2235
        %v2237 = vpop.f32.mrf.mxu0
        %2238 = vmatprep.mubr.bf16.mxu0 0
        %2239 = vmatmul.mubr.bf16.gmra.mxu0 %v1267
        %v2240 = vpop.f32.mrf.mxu0
        %v2241 = vadd.f32 0.0, %v2240
        %v2242 = vpop.f32.mrf.mxu0
        %v2243 = vpop.f32.mrf.mxu0
        %v2244 = vadd.f32 0.0, %v2243
        %v2245 = vpop.f32.mrf.mxu0
        %2246 = vmatprep.mubr.bf16.mxu0 0
        %2247 = vmatmul.mubr.bf16.gmra.mxu0 %v1268
        %v2248 = vpop.f32.mrf.mxu0
        %v2249 = vadd.f32 0.0, %v2248
        %v2250 = vpop.f32.mrf.mxu0
        %v2251 = vpop.f32.mrf.mxu0
        %v2252 = vadd.f32 0.0, %v2251
        %v2253 = vpop.f32.mrf.mxu0
        %2254 = vmatprep.mubr.bf16.mxu0 0
        %2255 = vmatmul.mubr.bf16.gmra.mxu0 %v1269
        %v2256 = vpop.f32.mrf.mxu0
        %v2257 = vadd.f32 0.0, %v2256
        %v2258 = vpop.f32.mrf.mxu0
        %v2259 = vpop.f32.mrf.mxu0
        %v2260 = vadd.f32 0.0, %v2259
        %v2261 = vpop.f32.mrf.mxu0
        %2262 = vmatprep.mubr.bf16.mxu0 0
        %2263 = vmatmul.mubr.bf16.gmra.mxu0 %v1270
        %v2264 = vpop.f32.mrf.mxu0
        %v2265 = vadd.f32 0.0, %v2264
        %v2266 = vpop.f32.mrf.mxu0
        %v2267 = vpop.f32.mrf.mxu0
        %v2268 = vadd.f32 0.0, %v2267
        %v2269 = vpop.f32.mrf.mxu0
        %2270 = vmatprep.mubr.bf16.mxu0 0
        %2271 = vmatmul.mubr.bf16.gmra.mxu0 %v1271
        %v2272 = vpop.f32.mrf.mxu0
        %v2273 = vadd.f32 0.0, %v2272
        %v2274 = vpop.f32.mrf.mxu0
        %v2275 = vpop.f32.mrf.mxu0
        %v2276 = vadd.f32 0.0, %v2275
        %v2277 = vpop.f32.mrf.mxu0
        %2278 = vmatprep.mubr.bf16.mxu0 0
        %2279 = vmatmul.mubr.bf16.gmra.mxu0 %v2061
        %v2280 = vpop.f32.mrf.mxu0
        %v2281 = vadd.f32 0.0, %v2280
        %v2282 = vpop.f32.mrf.mxu0
        %v2283 = vpop.f32.mrf.mxu0
        %v2284 = vadd.f32 0.0, %v2283
        %v2285 = vpop.f32.mrf.mxu0
        %2286 = vdwg.mxu0
        %v2287 = vadd.f32 %v2022, %v2161
        %v2288 = vadd.f32 %v2023, %v2164
        %v2289 = vadd.f32 %v2024, %v2169
        %v2290 = vadd.f32 %v2025, %v2172
        %v2291 = vadd.f32 %v2026, %v2177
        %v2292 = vadd.f32 %v2027, %v2180
        %v2293 = vadd.f32 %v2028, %v2185
        %v2294 = vadd.f32 %v2029, %v2188
        %v2295 = vadd.f32 %v2030, %v2193
        %v2296 = vadd.f32 %v2031, %v2196
        %v2297 = vadd.f32 %v2032, %v2201
        %v2298 = vadd.f32 %v2033, %v2204
        %v2299 = vadd.f32 %v2034, %v2209
        %v2300 = vadd.f32 %v2035, %v2212
        %v2301 = vadd.f32 %v2036, %v2217
        %v2302 = vadd.f32 %v2037, %v2220
        %v2303 = vadd.f32 %v2038, %v2225
        %v2304 = vadd.f32 %v2039, %v2228
        %v2305 = vadd.f32 %v2040, %v2233
        %v2306 = vadd.f32 %v2041, %v2236
        %v2307 = vadd.f32 %v2042, %v2241
        %v2308 = vadd.f32 %v2043, %v2244
        %v2309 = vadd.f32 %v2044, %v2249
        %v2310 = vadd.f32 %v2045, %v2252
        %v2311 = vadd.f32 %v2046, %v2257
        %v2312 = vadd.f32 %v2047, %v2260
        %v2313 = vadd.f32 %v2048, %v2265
        %v2314 = vadd.f32 %v2049, %v2268
        %v2315 = vadd.f32 %v2050, %v2273
        %v2316 = vadd.f32 %v2051, %v2276
        %v2317 = vadd.f32 %v2052, %v2281
        %v2318 = vadd.f32 %v2053, %v2284
        %v2319 = vld [vmem:[%s1 + $0x180] sm:$0xf]
        %v2320 = vld [vmem:[%s1 + $0x184] sm:$0xf]
        %v2321 = vld [vmem:[%s1 + $0x188] sm:$0xf]
        %v2322 = vld [vmem:[%s1 + $0x18c] sm:$0xf]
        %v2323 = vld [vmem:[%s1 + $0x190] sm:$0xf]
        %v2324 = vld [vmem:[%s1 + $0x194] sm:$0xf]
        %v2325 = vld [vmem:[%s1 + $0x198] sm:$0xf]
        %v2326 = vld [vmem:[%s1 + $0x19c] sm:$0xf]
        %v2327 = vld [vmem:[%s1 + $0x1a0] sm:$0xf]
        %v2328 = vld [vmem:[%s1 + $0x1a4] sm:$0xf]
        %v2329 = vld [vmem:[%s1 + $0x1a8] sm:$0xf]
        %v2330 = vld [vmem:[%s1 + $0x1ac] sm:$0xf]
        %v2331 = vld [vmem:[%s1 + $0x1b0] sm:$0xf]
        %v2332 = vld [vmem:[%s1 + $0x1b4] sm:$0xf]
        %v2333 = vld [vmem:[%s1 + $0x1b8] sm:$0xf]
        %v2334 = vld [vmem:[%s1 + $0x1bc] sm:$0xf]
        %v2351 = vunpack.c.l.b16 %v2319
        %v2352 = vunpack.c.l.b16 %v2320
        %v2353 = vunpack.c.l.b16 %v2321
        %v2354 = vunpack.c.l.b16 %v2322
        %v2355 = vunpack.c.l.b16 %v2323
        %v2356 = vunpack.c.l.b16 %v2324
        %v2357 = vunpack.c.l.b16 %v2325
        %v2358 = vunpack.c.l.b16 %v2326
        %v2359 = vunpack.c.l.b16 %v2327
        %v2360 = vunpack.c.l.b16 %v2328
        %v2361 = vunpack.c.l.b16 %v2329
        %v2362 = vunpack.c.l.b16 %v2330
        %v2363 = vunpack.c.l.b16 %v2331
        %v2364 = vunpack.c.l.b16 %v2332
        %v2365 = vunpack.c.l.b16 %v2333
        %v2366 = vunpack.c.l.b16 %v2334
        %v2367 = vpack.c.b16 %v2352, %v2351
        %v2368 = vpack.c.b16 %v2354, %v2353
        %v2369 = vpack.c.b16 %v2356, %v2355
        %v2370 = vpack.c.b16 %v2358, %v2357
        %v2371 = vpack.c.b16 %v2360, %v2359
        %v2372 = vpack.c.b16 %v2362, %v2361
        %v2373 = vpack.c.b16 %v2364, %v2363
        %v2374 = vpack.c.b16 %v2366, %v2365
        %2383 = vmatprep.subr.bf16.mxu0 0
        %2384 = vmatpush1.bf16.msra.mxu0 %v2374
        %2385 = vmatprep.subr.bf16.mxu0 0
        %2386 = vmatpush1.bf16.msra.mxu0 %v2373
        %2387 = vmatprep.subr.bf16.mxu0 0
        %2388 = vmatpush1.bf16.msra.mxu0 %v2372
        %2389 = vmatprep.subr.bf16.mxu0 0
        %2390 = vmatpush1.bf16.msra.mxu0 %v2371
        %2391 = vmatprep.subr.bf16.mxu0 0
        %2392 = vmatpush1.bf16.msra.mxu0 %v2370
        %2393 = vmatprep.subr.bf16.mxu0 0
        %2394 = vmatpush1.bf16.msra.mxu0 %v2369
        %2395 = vmatprep.subr.bf16.mxu0 0
        %2396 = vmatpush1.bf16.msra.mxu0 %v2368
        %2397 = vmatprep.subr.bf16.mxu0 0
        %2398 = vmatpush1.bf16.msra.mxu0 %v2367
        %2399 = vmatprep.subr.bf16.mxu0 0
        %2400 = vmatpush2.bf16.msra.mxu0 0
        %2401 = vmatprep.subr.bf16.mxu0 0
        %2402 = vmatpush2.bf16.msra.mxu0 0
        %2403 = vmatprep.subr.bf16.mxu0 0
        %2404 = vmatpush2.bf16.msra.mxu0 0
        %2405 = vmatprep.subr.bf16.mxu0 0
        %2406 = vmatpush2.bf16.msra.mxu0 0
        %2407 = vmatprep.subr.bf16.mxu0 0
        %2408 = vmatpush2.bf16.msra.mxu0 0
        %2409 = vmatprep.subr.bf16.mxu0 0
        %2410 = vmatpush2.bf16.msra.mxu0 0
        %2411 = vmatprep.subr.bf16.mxu0 0
        %2412 = vmatpush2.bf16.msra.mxu0 0
        %2413 = vmatprep.subr.bf16.mxu0 0
        %2414 = vmatpush2.bf16.msra.mxu0 0
        %2415 = vmatprep.mubr.bf16.mxu0 0
        %2416 = vmatmul.mubr.bf16.gmra.mxu0 %v535
        %v2417 = vpop.f32.mrf.mxu0
        %v2418 = vadd.f32 0.0, %v2417
        %v2419 = vpop.f32.mrf.mxu0
        %v2420 = vpop.f32.mrf.mxu0
        %v2421 = vadd.f32 0.0, %v2420
        %v2422 = vpop.f32.mrf.mxu0
        %2423 = vmatprep.mubr.bf16.mxu0 0
        %2424 = vmatmul.mubr.bf16.gmra.mxu0 %v537
        %v2425 = vpop.f32.mrf.mxu0
        %v2426 = vadd.f32 0.0, %v2425
        %v2427 = vpop.f32.mrf.mxu0
        %v2428 = vpop.f32.mrf.mxu0
        %v2429 = vadd.f32 0.0, %v2428
        %v2430 = vpop.f32.mrf.mxu0
        %2431 = vmatprep.mubr.bf16.mxu0 0
        %2432 = vmatmul.mubr.bf16.gmra.mxu0 %v538
        %v2433 = vpop.f32.mrf.mxu0
        %v2434 = vadd.f32 0.0, %v2433
        %v2435 = vpop.f32.mrf.mxu0
        %v2436 = vpop.f32.mrf.mxu0
        %v2437 = vadd.f32 0.0, %v2436
        %v2438 = vpop.f32.mrf.mxu0
        %2439 = vmatprep.mubr.bf16.mxu0 0
        %2440 = vmatmul.mubr.bf16.gmra.mxu0 %v539
        %v2441 = vpop.f32.mrf.mxu0
        %v2442 = vadd.f32 0.0, %v2441
        %v2443 = vpop.f32.mrf.mxu0
        %v2444 = vpop.f32.mrf.mxu0
        %v2445 = vadd.f32 0.0, %v2444
        %v2446 = vpop.f32.mrf.mxu0
        %2447 = vmatprep.mubr.bf16.mxu0 0
        %2448 = vmatmul.mubr.bf16.gmra.mxu0 %v540
        %v2449 = vpop.f32.mrf.mxu0
        %v2450 = vadd.f32 0.0, %v2449
        %v2451 = vpop.f32.mrf.mxu0
        %v2452 = vpop.f32.mrf.mxu0
        %v2453 = vadd.f32 0.0, %v2452
        %v2454 = vpop.f32.mrf.mxu0
        %2455 = vmatprep.mubr.bf16.mxu0 0
        %2456 = vmatmul.mubr.bf16.gmra.mxu0 %v541
        %v2457 = vpop.f32.mrf.mxu0
        %v2458 = vadd.f32 0.0, %v2457
        %v2459 = vpop.f32.mrf.mxu0
        %v2460 = vpop.f32.mrf.mxu0
        %v2461 = vadd.f32 0.0, %v2460
        %v2462 = vpop.f32.mrf.mxu0
        %2463 = vmatprep.mubr.bf16.mxu0 0
        %2464 = vmatmul.mubr.bf16.gmra.mxu0 %v542
        %v2465 = vpop.f32.mrf.mxu0
        %v2466 = vadd.f32 0.0, %v2465
        %v2467 = vpop.f32.mrf.mxu0
        %v2468 = vpop.f32.mrf.mxu0
        %v2469 = vadd.f32 0.0, %v2468
        %v2470 = vpop.f32.mrf.mxu0
        %2471 = vmatprep.mubr.bf16.mxu0 0
        %2472 = vmatmul.mubr.bf16.gmra.mxu0 %v543
        %v2473 = vpop.f32.mrf.mxu0
        %v2474 = vadd.f32 0.0, %v2473
        %v2475 = vpop.f32.mrf.mxu0
        %v2476 = vpop.f32.mrf.mxu0
        %v2477 = vadd.f32 0.0, %v2476
        %v2478 = vpop.f32.mrf.mxu0
        %2479 = vmatprep.mubr.bf16.mxu0 0
        %2480 = vmatmul.mubr.bf16.gmra.mxu0 %v544
        %v2481 = vpop.f32.mrf.mxu0
        %v2482 = vadd.f32 0.0, %v2481
        %v2483 = vpop.f32.mrf.mxu0
        %v2484 = vpop.f32.mrf.mxu0
        %v2485 = vadd.f32 0.0, %v2484
        %v2486 = vpop.f32.mrf.mxu0
        %2487 = vmatprep.mubr.bf16.mxu0 0
        %2488 = vmatmul.mubr.bf16.gmra.mxu0 %v545
        %v2489 = vpop.f32.mrf.mxu0
        %v2490 = vadd.f32 0.0, %v2489
        %v2491 = vpop.f32.mrf.mxu0
        %v2492 = vpop.f32.mrf.mxu0
        %v2493 = vadd.f32 0.0, %v2492
        %v2494 = vpop.f32.mrf.mxu0
        %2495 = vmatprep.mubr.bf16.mxu0 0
        %2496 = vmatmul.mubr.bf16.gmra.mxu0 %v546
        %v2497 = vpop.f32.mrf.mxu0
        %v2498 = vadd.f32 0.0, %v2497
        %v2499 = vpop.f32.mrf.mxu0
        %v2500 = vpop.f32.mrf.mxu0
        %v2501 = vadd.f32 0.0, %v2500
        %v2502 = vpop.f32.mrf.mxu0
        %2503 = vmatprep.mubr.bf16.mxu0 0
        %2504 = vmatmul.mubr.bf16.gmra.mxu0 %v547
        %v2505 = vpop.f32.mrf.mxu0
        %v2506 = vadd.f32 0.0, %v2505
        %v2507 = vpop.f32.mrf.mxu0
        %v2508 = vpop.f32.mrf.mxu0
        %v2509 = vadd.f32 0.0, %v2508
        %v2510 = vpop.f32.mrf.mxu0
        %2511 = vmatprep.mubr.bf16.mxu0 0
        %2512 = vmatmul.mubr.bf16.gmra.mxu0 %v548
        %v2513 = vpop.f32.mrf.mxu0
        %v2514 = vadd.f32 0.0, %v2513
        %v2515 = vpop.f32.mrf.mxu0
        %v2516 = vpop.f32.mrf.mxu0
        %v2517 = vadd.f32 0.0, %v2516
        %v2518 = vpop.f32.mrf.mxu0
        %2519 = vmatprep.mubr.bf16.mxu0 0
        %2520 = vmatmul.mubr.bf16.gmra.mxu0 %v549
        %v2521 = vpop.f32.mrf.mxu0
        %v2522 = vadd.f32 0.0, %v2521
        %v2523 = vpop.f32.mrf.mxu0
        %v2524 = vpop.f32.mrf.mxu0
        %v2525 = vadd.f32 0.0, %v2524
        %v2526 = vpop.f32.mrf.mxu0
        %2527 = vmatprep.mubr.bf16.mxu0 0
        %2528 = vmatmul.mubr.bf16.gmra.mxu0 %v1529
        %v2529 = vpop.f32.mrf.mxu0
        %v2530 = vadd.f32 0.0, %v2529
        %v2531 = vpop.f32.mrf.mxu0
        %v2532 = vpop.f32.mrf.mxu0
        %v2533 = vadd.f32 0.0, %v2532
        %v2534 = vpop.f32.mrf.mxu0
        %2535 = vmatprep.mubr.bf16.mxu0 0
        %2536 = vmatmul.mubr.bf16.gmra.mxu0 %v549
        %v2537 = vpop.f32.mrf.mxu0
        %v2538 = vadd.f32 0.0, %v2537
        %v2539 = vpop.f32.mrf.mxu0
        %v2540 = vpop.f32.mrf.mxu0
        %v2541 = vadd.f32 0.0, %v2540
        %v2542 = vpop.f32.mrf.mxu0
        %2543 = vdwg.mxu0
        %v2544 = vadd.f32 %v2287, %v2418
        %v2545 = vadd.f32 %v2288, %v2421
        %v2546 = vadd.f32 %v2289, %v2426
        %v2547 = vadd.f32 %v2290, %v2429
        %v2548 = vadd.f32 %v2291, %v2434
        %v2549 = vadd.f32 %v2292, %v2437
        %v2550 = vadd.f32 %v2293, %v2442
        %v2551 = vadd.f32 %v2294, %v2445
        %v2552 = vadd.f32 %v2295, %v2450
        %v2553 = vadd.f32 %v2296, %v2453
        %v2554 = vadd.f32 %v2297, %v2458
        %v2555 = vadd.f32 %v2298, %v2461
        %v2556 = vadd.f32 %v2299, %v2466
        %v2557 = vadd.f32 %v2300, %v2469
        %v2558 = vadd.f32 %v2301, %v2474
        %v2559 = vadd.f32 %v2302, %v2477
        %v2560 = vadd.f32 %v2303, %v2482
        %v2561 = vadd.f32 %v2304, %v2485
        %v2562 = vadd.f32 %v2305, %v2490
        %v2563 = vadd.f32 %v2306, %v2493
        %v2564 = vadd.f32 %v2307, %v2498
        %v2565 = vadd.f32 %v2308, %v2501
        %v2566 = vadd.f32 %v2309, %v2506
        %v2567 = vadd.f32 %v2310, %v2509
        %v2568 = vadd.f32 %v2311, %v2514
        %v2569 = vadd.f32 %v2312, %v2517
        %v2570 = vadd.f32 %v2313, %v2522
        %v2571 = vadd.f32 %v2314, %v2525
        %v2572 = vadd.f32 %v2315, %v2530
        %v2573 = vadd.f32 %v2316, %v2533
        %v2574 = vadd.f32 %v2317, %v2538
        %v2575 = vadd.f32 %v2318, %v2541
        %v2576 = vld [vmem:[%s1 + $0x1c0] sm:$0xf]
        %v2577 = vld [vmem:[%s1 + $0x1c4] sm:$0xf]
        %v2578 = vld [vmem:[%s1 + $0x1c8] sm:$0xf]
        %v2579 = vld [vmem:[%s1 + $0x1cc] sm:$0xf]
        %v2580 = vld [vmem:[%s1 + $0x1d0] sm:$0xf]
        %v2581 = vld [vmem:[%s1 + $0x1d4] sm:$0xf]
        %v2582 = vld [vmem:[%s1 + $0x1d8] sm:$0xf]
        %v2583 = vld [vmem:[%s1 + $0x1dc] sm:$0xf]
        %v2584 = vld [vmem:[%s1 + $0x1e0] sm:$0xf]
        %v2585 = vld [vmem:[%s1 + $0x1e4] sm:$0xf]
        %v2586 = vld [vmem:[%s1 + $0x1e8] sm:$0xf]
        %v2587 = vld [vmem:[%s1 + $0x1ec] sm:$0xf]
        %v2588 = vld [vmem:[%s1 + $0x1f0] sm:$0xf]
        %v2589 = vld [vmem:[%s1 + $0x1f4] sm:$0xf]
        %v2590 = vld [vmem:[%s1 + $0x1f8] sm:$0xf]
        %v2591 = vld [vmem:[%s1 + $0x1fc] sm:$0xf]
        %v2608 = vunpack.c.l.b16 %v2576
        %v2609 = vunpack.c.l.b16 %v2577
        %v2610 = vunpack.c.l.b16 %v2578
        %v2611 = vunpack.c.l.b16 %v2579
        %v2612 = vunpack.c.l.b16 %v2580
        %v2613 = vunpack.c.l.b16 %v2581
        %v2614 = vunpack.c.l.b16 %v2582
        %v2615 = vunpack.c.l.b16 %v2583
        %v2616 = vunpack.c.l.b16 %v2584
        %v2617 = vunpack.c.l.b16 %v2585
        %v2618 = vunpack.c.l.b16 %v2586
        %v2619 = vunpack.c.l.b16 %v2587
        %v2620 = vunpack.c.l.b16 %v2588
        %v2621 = vunpack.c.l.b16 %v2589
        %v2622 = vunpack.c.l.b16 %v2590
        %v2623 = vunpack.c.l.b16 %v2591
        %v2624 = vpack.c.b16 %v2609, %v2608
        %v2625 = vpack.c.b16 %v2611, %v2610
        %v2626 = vpack.c.b16 %v2613, %v2612
        %v2627 = vpack.c.b16 %v2615, %v2614
        %v2628 = vpack.c.b16 %v2617, %v2616
        %v2629 = vpack.c.b16 %v2619, %v2618
        %v2630 = vpack.c.b16 %v2621, %v2620
        %v2631 = vpack.c.b16 %v2623, %v2622
        %2640 = vmatprep.subr.bf16.mxu0 0
        %2641 = vmatpush1.bf16.msra.mxu0 %v2631
        %2642 = vmatprep.subr.bf16.mxu0 0
        %2643 = vmatpush1.bf16.msra.mxu0 %v2630
        %2644 = vmatprep.subr.bf16.mxu0 0
        %2645 = vmatpush1.bf16.msra.mxu0 %v2629
        %2646 = vmatprep.subr.bf16.mxu0 0
        %2647 = vmatpush1.bf16.msra.mxu0 %v2628
        %2648 = vmatprep.subr.bf16.mxu0 0
        %2649 = vmatpush1.bf16.msra.mxu0 %v2627
        %2650 = vmatprep.subr.bf16.mxu0 0
        %2651 = vmatpush1.bf16.msra.mxu0 %v2626
        %2652 = vmatprep.subr.bf16.mxu0 0
        %2653 = vmatpush1.bf16.msra.mxu0 %v2625
        %2654 = vmatprep.subr.bf16.mxu0 0
        %2655 = vmatpush1.bf16.msra.mxu0 %v2624
        %2656 = vmatprep.subr.bf16.mxu0 0
        %2657 = vmatpush2.bf16.msra.mxu0 0
        %2658 = vmatprep.subr.bf16.mxu0 0
        %2659 = vmatpush2.bf16.msra.mxu0 0
        %2660 = vmatprep.subr.bf16.mxu0 0
        %2661 = vmatpush2.bf16.msra.mxu0 0
        %2662 = vmatprep.subr.bf16.mxu0 0
        %2663 = vmatpush2.bf16.msra.mxu0 0
        %2664 = vmatprep.subr.bf16.mxu0 0
        %2665 = vmatpush2.bf16.msra.mxu0 0
        %2666 = vmatprep.subr.bf16.mxu0 0
        %2667 = vmatpush2.bf16.msra.mxu0 0
        %2668 = vmatprep.subr.bf16.mxu0 0
        %2669 = vmatpush2.bf16.msra.mxu0 0
        %2670 = vmatprep.subr.bf16.mxu0 0
        %2671 = vmatpush2.bf16.msra.mxu0 0
        %2672 = vmatprep.mubr.bf16.mxu0 0
        %2673 = vmatmul.mubr.bf16.gmra.mxu0 %v702
        %v2674 = vpop.f32.mrf.mxu0
        %v2675 = vadd.f32 0.0, %v2674
        %v2676 = vpop.f32.mrf.mxu0
        %v2677 = vpop.f32.mrf.mxu0
        %v2678 = vadd.f32 0.0, %v2677
        %v2679 = vpop.f32.mrf.mxu0
        %2680 = vmatprep.mubr.bf16.mxu0 0
        %2681 = vmatmul.mubr.bf16.gmra.mxu0 %v704
        %v2682 = vpop.f32.mrf.mxu0
        %v2683 = vadd.f32 0.0, %v2682
        %v2684 = vpop.f32.mrf.mxu0
        %v2685 = vpop.f32.mrf.mxu0
        %v2686 = vadd.f32 0.0, %v2685
        %v2687 = vpop.f32.mrf.mxu0
        %2688 = vmatprep.mubr.bf16.mxu0 0
        %2689 = vmatmul.mubr.bf16.gmra.mxu0 %v705
        %v2690 = vpop.f32.mrf.mxu0
        %v2691 = vadd.f32 0.0, %v2690
        %v2692 = vpop.f32.mrf.mxu0
        %v2693 = vpop.f32.mrf.mxu0
        %v2694 = vadd.f32 0.0, %v2693
        %v2695 = vpop.f32.mrf.mxu0
        %2696 = vmatprep.mubr.bf16.mxu0 0
        %2697 = vmatmul.mubr.bf16.gmra.mxu0 %v706
        %v2698 = vpop.f32.mrf.mxu0
        %v2699 = vadd.f32 0.0, %v2698
        %v2700 = vpop.f32.mrf.mxu0
        %v2701 = vpop.f32.mrf.mxu0
        %v2702 = vadd.f32 0.0, %v2701
        %v2703 = vpop.f32.mrf.mxu0
        %2704 = vmatprep.mubr.bf16.mxu0 0
        %2705 = vmatmul.mubr.bf16.gmra.mxu0 %v707
        %v2706 = vpop.f32.mrf.mxu0
        %v2707 = vadd.f32 0.0, %v2706
        %v2708 = vpop.f32.mrf.mxu0
        %v2709 = vpop.f32.mrf.mxu0
        %v2710 = vadd.f32 0.0, %v2709
        %v2711 = vpop.f32.mrf.mxu0
        %2712 = vmatprep.mubr.bf16.mxu0 0
        %2713 = vmatmul.mubr.bf16.gmra.mxu0 %v708
        %v2714 = vpop.f32.mrf.mxu0
        %v2715 = vadd.f32 0.0, %v2714
        %v2716 = vpop.f32.mrf.mxu0
        %v2717 = vpop.f32.mrf.mxu0
        %v2718 = vadd.f32 0.0, %v2717
        %v2719 = vpop.f32.mrf.mxu0
        %2720 = vmatprep.mubr.bf16.mxu0 0
        %2721 = vmatmul.mubr.bf16.gmra.mxu0 %v709
        %v2722 = vpop.f32.mrf.mxu0
        %v2723 = vadd.f32 0.0, %v2722
        %v2724 = vpop.f32.mrf.mxu0
        %v2725 = vpop.f32.mrf.mxu0
        %v2726 = vadd.f32 0.0, %v2725
        %v2727 = vpop.f32.mrf.mxu0
        %2728 = vmatprep.mubr.bf16.mxu0 0
        %2729 = vmatmul.mubr.bf16.gmra.mxu0 %v710
        %v2730 = vpop.f32.mrf.mxu0
        %v2731 = vadd.f32 0.0, %v2730
        %v2732 = vpop.f32.mrf.mxu0
        %v2733 = vpop.f32.mrf.mxu0
        %v2734 = vadd.f32 0.0, %v2733
        %v2735 = vpop.f32.mrf.mxu0
        %2736 = vmatprep.mubr.bf16.mxu0 0
        %2737 = vmatmul.mubr.bf16.gmra.mxu0 %v711
        %v2738 = vpop.f32.mrf.mxu0
        %v2739 = vadd.f32 0.0, %v2738
        %v2740 = vpop.f32.mrf.mxu0
        %v2741 = vpop.f32.mrf.mxu0
        %v2742 = vadd.f32 0.0, %v2741
        %v2743 = vpop.f32.mrf.mxu0
        %2744 = vmatprep.mubr.bf16.mxu0 0
        %2745 = vmatmul.mubr.bf16.gmra.mxu0 %v712
        %v2746 = vpop.f32.mrf.mxu0
        %v2747 = vadd.f32 0.0, %v2746
        %v2748 = vpop.f32.mrf.mxu0
        %v2749 = vpop.f32.mrf.mxu0
        %v2750 = vadd.f32 0.0, %v2749
        %v2751 = vpop.f32.mrf.mxu0
        %2752 = vmatprep.mubr.bf16.mxu0 0
        %2753 = vmatmul.mubr.bf16.gmra.mxu0 %v713
        %v2754 = vpop.f32.mrf.mxu0
        %v2755 = vadd.f32 0.0, %v2754
        %v2756 = vpop.f32.mrf.mxu0
        %v2757 = vpop.f32.mrf.mxu0
        %v2758 = vadd.f32 0.0, %v2757
        %v2759 = vpop.f32.mrf.mxu0
        %2760 = vmatprep.mubr.bf16.mxu0 0
        %2761 = vmatmul.mubr.bf16.gmra.mxu0 %v714
        %v2762 = vpop.f32.mrf.mxu0
        %v2763 = vadd.f32 0.0, %v2762
        %v2764 = vpop.f32.mrf.mxu0
        %v2765 = vpop.f32.mrf.mxu0
        %v2766 = vadd.f32 0.0, %v2765
        %v2767 = vpop.f32.mrf.mxu0
        %2768 = vmatprep.mubr.bf16.mxu0 0
        %2769 = vmatmul.mubr.bf16.gmra.mxu0 %v715
        %v2770 = vpop.f32.mrf.mxu0
        %v2771 = vadd.f32 0.0, %v2770
        %v2772 = vpop.f32.mrf.mxu0
        %v2773 = vpop.f32.mrf.mxu0
        %v2774 = vadd.f32 0.0, %v2773
        %v2775 = vpop.f32.mrf.mxu0
        %2776 = vmatprep.mubr.bf16.mxu0 0
        %2777 = vmatmul.mubr.bf16.gmra.mxu0 %v716
        %v2778 = vpop.f32.mrf.mxu0
        %v2779 = vadd.f32 0.0, %v2778
        %v2780 = vpop.f32.mrf.mxu0
        %v2781 = vpop.f32.mrf.mxu0
        %v2782 = vadd.f32 0.0, %v2781
        %v2783 = vpop.f32.mrf.mxu0
        %2784 = vmatprep.mubr.bf16.mxu0 0
        %2785 = vmatmul.mubr.bf16.gmra.mxu0 %v1796
        %v2786 = vpop.f32.mrf.mxu0
        %v2787 = vadd.f32 0.0, %v2786
        %v2788 = vpop.f32.mrf.mxu0
        %v2789 = vpop.f32.mrf.mxu0
        %v2790 = vadd.f32 0.0, %v2789
        %v2791 = vpop.f32.mrf.mxu0
        %2792 = vmatprep.mubr.bf16.mxu0 0
        %2793 = vmatmul.mubr.bf16.gmra.mxu0 %v716
        %v2794 = vpop.f32.mrf.mxu0
        %v2795 = vadd.f32 0.0, %v2794
        %v2796 = vpop.f32.mrf.mxu0
        %v2797 = vpop.f32.mrf.mxu0
        %v2798 = vadd.f32 0.0, %v2797
        %v2799 = vpop.f32.mrf.mxu0
        %2800 = vdwg.mxu0
        %v2801 = vadd.f32 %v2544, %v2675
        %v2802 = vadd.f32 %v2545, %v2678
        %v2803 = vadd.f32 %v2546, %v2683
        %v2804 = vadd.f32 %v2547, %v2686
        %v2805 = vadd.f32 %v2548, %v2691
        %v2806 = vadd.f32 %v2549, %v2694
        %v2807 = vadd.f32 %v2550, %v2699
        %v2808 = vadd.f32 %v2551, %v2702
        %v2809 = vadd.f32 %v2552, %v2707
        %v2810 = vadd.f32 %v2553, %v2710
        %v2811 = vadd.f32 %v2554, %v2715
        %v2812 = vadd.f32 %v2555, %v2718
        %v2813 = vadd.f32 %v2556, %v2723
        %v2814 = vadd.f32 %v2557, %v2726
        %v2815 = vadd.f32 %v2558, %v2731
        %v2816 = vadd.f32 %v2559, %v2734
        %v2817 = vadd.f32 %v2560, %v2739
        %v2818 = vadd.f32 %v2561, %v2742
        %v2819 = vadd.f32 %v2562, %v2747
        %v2820 = vadd.f32 %v2563, %v2750
        %v2821 = vadd.f32 %v2564, %v2755
        %v2822 = vadd.f32 %v2565, %v2758
        %v2823 = vadd.f32 %v2566, %v2763
        %v2824 = vadd.f32 %v2567, %v2766
        %v2825 = vadd.f32 %v2568, %v2771
        %v2826 = vadd.f32 %v2569, %v2774
        %v2827 = vadd.f32 %v2570, %v2779
        %v2828 = vadd.f32 %v2571, %v2782
        %v2829 = vadd.f32 %v2572, %v2787
        %v2830 = vadd.f32 %v2573, %v2790
        %v2831 = vadd.f32 %v2574, %v2795
        %v2832 = vadd.f32 %v2575, %v2798
        %v2833 = vld [vmem:[%s1 + $0x200] sm:$0xf]
        %v2834 = vld [vmem:[%s1 + $0x204] sm:$0xf]
        %v2835 = vld [vmem:[%s1 + $0x208] sm:$0xf]
        %v2836 = vld [vmem:[%s1 + $0x20c] sm:$0xf]
        %v2837 = vld [vmem:[%s1 + $0x210] sm:$0xf]
        %v2838 = vld [vmem:[%s1 + $0x214] sm:$0xf]
        %v2839 = vld [vmem:[%s1 + $0x218] sm:$0xf]
        %v2840 = vld [vmem:[%s1 + $0x21c] sm:$0xf]
        %v2841 = vld [vmem:[%s1 + $0x220] sm:$0xf]
        %v2842 = vld [vmem:[%s1 + $0x224] sm:$0xf]
        %v2843 = vld [vmem:[%s1 + $0x228] sm:$0xf]
        %v2844 = vld [vmem:[%s1 + $0x22c] sm:$0xf]
        %v2845 = vld [vmem:[%s1 + $0x230] sm:$0xf]
        %v2846 = vld [vmem:[%s1 + $0x234] sm:$0xf]
        %v2847 = vld [vmem:[%s1 + $0x238] sm:$0xf]
        %v2848 = vld [vmem:[%s1 + $0x23c] sm:$0xf]
        %v2865 = vunpack.c.l.b16 %v2833
        %v2866 = vunpack.c.l.b16 %v2834
        %v2867 = vunpack.c.l.b16 %v2835
        %v2868 = vunpack.c.l.b16 %v2836
        %v2869 = vunpack.c.l.b16 %v2837
        %v2870 = vunpack.c.l.b16 %v2838
        %v2871 = vunpack.c.l.b16 %v2839
        %v2872 = vunpack.c.l.b16 %v2840
        %v2873 = vunpack.c.l.b16 %v2841
        %v2874 = vunpack.c.l.b16 %v2842
        %v2875 = vunpack.c.l.b16 %v2843
        %v2876 = vunpack.c.l.b16 %v2844
        %v2877 = vunpack.c.l.b16 %v2845
        %v2878 = vunpack.c.l.b16 %v2846
        %v2879 = vunpack.c.l.b16 %v2847
        %v2880 = vunpack.c.l.b16 %v2848
        %v2881 = vpack.c.b16 %v2866, %v2865
        %v2882 = vpack.c.b16 %v2868, %v2867
        %v2883 = vpack.c.b16 %v2870, %v2869
        %v2884 = vpack.c.b16 %v2872, %v2871
        %v2885 = vpack.c.b16 %v2874, %v2873
        %v2886 = vpack.c.b16 %v2876, %v2875
        %v2887 = vpack.c.b16 %v2878, %v2877
        %v2888 = vpack.c.b16 %v2880, %v2879
        %2897 = vmatprep.subr.bf16.mxu0 0
        %2898 = vmatpush1.bf16.msra.mxu0 %v2888
        %2899 = vmatprep.subr.bf16.mxu0 0
        %2900 = vmatpush1.bf16.msra.mxu0 %v2887
        %2901 = vmatprep.subr.bf16.mxu0 0
        %2902 = vmatpush1.bf16.msra.mxu0 %v2886
        %2903 = vmatprep.subr.bf16.mxu0 0
        %2904 = vmatpush1.bf16.msra.mxu0 %v2885
        %2905 = vmatprep.subr.bf16.mxu0 0
        %2906 = vmatpush1.bf16.msra.mxu0 %v2884
        %2907 = vmatprep.subr.bf16.mxu0 0
        %2908 = vmatpush1.bf16.msra.mxu0 %v2883
        %2909 = vmatprep.subr.bf16.mxu0 0
        %2910 = vmatpush1.bf16.msra.mxu0 %v2882
        %2911 = vmatprep.subr.bf16.mxu0 0
        %2912 = vmatpush1.bf16.msra.mxu0 %v2881
        %2913 = vmatprep.subr.bf16.mxu0 0
        %2914 = vmatpush2.bf16.msra.mxu0 0
        %2915 = vmatprep.subr.bf16.mxu0 0
        %2916 = vmatpush2.bf16.msra.mxu0 0
        %2917 = vmatprep.subr.bf16.mxu0 0
        %2918 = vmatpush2.bf16.msra.mxu0 0
        %2919 = vmatprep.subr.bf16.mxu0 0
        %2920 = vmatpush2.bf16.msra.mxu0 0
        %2921 = vmatprep.subr.bf16.mxu0 0
        %2922 = vmatpush2.bf16.msra.mxu0 0
        %2923 = vmatprep.subr.bf16.mxu0 0
        %2924 = vmatpush2.bf16.msra.mxu0 0
        %2925 = vmatprep.subr.bf16.mxu0 0
        %2926 = vmatpush2.bf16.msra.mxu0 0
        %2927 = vmatprep.subr.bf16.mxu0 0
        %2928 = vmatpush2.bf16.msra.mxu0 0
        %2929 = vmatprep.mubr.bf16.mxu0 0
        %2930 = vmatmul.mubr.bf16.gmra.mxu0 %v1257
        %v2931 = vpop.f32.mrf.mxu0
        %v2932 = vadd.f32 0.0, %v2931
        %v2933 = vpop.f32.mrf.mxu0
        %v2934 = vpop.f32.mrf.mxu0
        %v2935 = vadd.f32 0.0, %v2934
        %v2936 = vpop.f32.mrf.mxu0
        %2937 = vmatprep.mubr.bf16.mxu0 0
        %2938 = vmatmul.mubr.bf16.gmra.mxu0 %v1259
        %v2939 = vpop.f32.mrf.mxu0
        %v2940 = vadd.f32 0.0, %v2939
        %v2941 = vpop.f32.mrf.mxu0
        %v2942 = vpop.f32.mrf.mxu0
        %v2943 = vadd.f32 0.0, %v2942
        %v2944 = vpop.f32.mrf.mxu0
        %2945 = vmatprep.mubr.bf16.mxu0 0
        %2946 = vmatmul.mubr.bf16.gmra.mxu0 %v1260
        %v2947 = vpop.f32.mrf.mxu0
        %v2948 = vadd.f32 0.0, %v2947
        %v2949 = vpop.f32.mrf.mxu0
        %v2950 = vpop.f32.mrf.mxu0
        %v2951 = vadd.f32 0.0, %v2950
        %v2952 = vpop.f32.mrf.mxu0
        %2953 = vmatprep.mubr.bf16.mxu0 0
        %2954 = vmatmul.mubr.bf16.gmra.mxu0 %v1261
        %v2955 = vpop.f32.mrf.mxu0
        %v2956 = vadd.f32 0.0, %v2955
        %v2957 = vpop.f32.mrf.mxu0
        %v2958 = vpop.f32.mrf.mxu0
        %v2959 = vadd.f32 0.0, %v2958
        %v2960 = vpop.f32.mrf.mxu0
        %2961 = vmatprep.mubr.bf16.mxu0 0
        %2962 = vmatmul.mubr.bf16.gmra.mxu0 %v1262
        %v2963 = vpop.f32.mrf.mxu0
        %v2964 = vadd.f32 0.0, %v2963
        %v2965 = vpop.f32.mrf.mxu0
        %v2966 = vpop.f32.mrf.mxu0
        %v2967 = vadd.f32 0.0, %v2966
        %v2968 = vpop.f32.mrf.mxu0
        %2969 = vmatprep.mubr.bf16.mxu0 0
        %2970 = vmatmul.mubr.bf16.gmra.mxu0 %v1263
        %v2971 = vpop.f32.mrf.mxu0
        %v2972 = vadd.f32 0.0, %v2971
        %v2973 = vpop.f32.mrf.mxu0
        %v2974 = vpop.f32.mrf.mxu0
        %v2975 = vadd.f32 0.0, %v2974
        %v2976 = vpop.f32.mrf.mxu0
        %2977 = vmatprep.mubr.bf16.mxu0 0
        %2978 = vmatmul.mubr.bf16.gmra.mxu0 %v1264
        %v2979 = vpop.f32.mrf.mxu0
        %v2980 = vadd.f32 0.0, %v2979
        %v2981 = vpop.f32.mrf.mxu0
        %v2982 = vpop.f32.mrf.mxu0
        %v2983 = vadd.f32 0.0, %v2982
        %v2984 = vpop.f32.mrf.mxu0
        %2985 = vmatprep.mubr.bf16.mxu0 0
        %2986 = vmatmul.mubr.bf16.gmra.mxu0 %v1265
        %v2987 = vpop.f32.mrf.mxu0
        %v2988 = vadd.f32 0.0, %v2987
        %v2989 = vpop.f32.mrf.mxu0
        %v2990 = vpop.f32.mrf.mxu0
        %v2991 = vadd.f32 0.0, %v2990
        %v2992 = vpop.f32.mrf.mxu0
        %2993 = vmatprep.mubr.bf16.mxu0 0
        %2994 = vmatmul.mubr.bf16.gmra.mxu0 %v1266
        %v2995 = vpop.f32.mrf.mxu0
        %v2996 = vadd.f32 0.0, %v2995
        %v2997 = vpop.f32.mrf.mxu0
        %v2998 = vpop.f32.mrf.mxu0
        %v2999 = vadd.f32 0.0, %v2998
        %v3000 = vpop.f32.mrf.mxu0
        %3001 = vmatprep.mubr.bf16.mxu0 0
        %3002 = vmatmul.mubr.bf16.gmra.mxu0 %v1267
        %v3003 = vpop.f32.mrf.mxu0
        %v3004 = vadd.f32 0.0, %v3003
        %v3005 = vpop.f32.mrf.mxu0
        %v3006 = vpop.f32.mrf.mxu0
        %v3007 = vadd.f32 0.0, %v3006
        %v3008 = vpop.f32.mrf.mxu0
        %3009 = vmatprep.mubr.bf16.mxu0 0
        %3010 = vmatmul.mubr.bf16.gmra.mxu0 %v1268
        %v3011 = vpop.f32.mrf.mxu0
        %v3012 = vadd.f32 0.0, %v3011
        %v3013 = vpop.f32.mrf.mxu0
        %v3014 = vpop.f32.mrf.mxu0
        %v3015 = vadd.f32 0.0, %v3014
        %v3016 = vpop.f32.mrf.mxu0
        %3017 = vmatprep.mubr.bf16.mxu0 0
        %3018 = vmatmul.mubr.bf16.gmra.mxu0 %v1269
        %v3019 = vpop.f32.mrf.mxu0
        %v3020 = vadd.f32 0.0, %v3019
        %v3021 = vpop.f32.mrf.mxu0
        %v3022 = vpop.f32.mrf.mxu0
        %v3023 = vadd.f32 0.0, %v3022
        %v3024 = vpop.f32.mrf.mxu0
        %3025 = vmatprep.mubr.bf16.mxu0 0
        %3026 = vmatmul.mubr.bf16.gmra.mxu0 %v1270
        %v3027 = vpop.f32.mrf.mxu0
        %v3028 = vadd.f32 0.0, %v3027
        %v3029 = vpop.f32.mrf.mxu0
        %v3030 = vpop.f32.mrf.mxu0
        %v3031 = vadd.f32 0.0, %v3030
        %v3032 = vpop.f32.mrf.mxu0
        %3033 = vmatprep.mubr.bf16.mxu0 0
        %3034 = vmatmul.mubr.bf16.gmra.mxu0 %v1271
        %v3035 = vpop.f32.mrf.mxu0
        %v3036 = vadd.f32 0.0, %v3035
        %v3037 = vpop.f32.mrf.mxu0
        %v3038 = vpop.f32.mrf.mxu0
        %v3039 = vadd.f32 0.0, %v3038
        %v3040 = vpop.f32.mrf.mxu0
        %3041 = vmatprep.mubr.bf16.mxu0 0
        %3042 = vmatmul.mubr.bf16.gmra.mxu0 %v2061
        %v3043 = vpop.f32.mrf.mxu0
        %v3044 = vadd.f32 0.0, %v3043
        %v3045 = vpop.f32.mrf.mxu0
        %v3046 = vpop.f32.mrf.mxu0
        %v3047 = vadd.f32 0.0, %v3046
        %v3048 = vpop.f32.mrf.mxu0
        %3049 = vmatprep.mubr.bf16.mxu0 0
        %3050 = vmatmul.mubr.bf16.gmra.mxu0 %v1271
        %v3051 = vpop.f32.mrf.mxu0
        %v3052 = vadd.f32 0.0, %v3051
        %v3053 = vpop.f32.mrf.mxu0
        %v3054 = vpop.f32.mrf.mxu0
        %v3055 = vadd.f32 0.0, %v3054
        %v3056 = vpop.f32.mrf.mxu0
        %3057 = vdwg.mxu0
        %v3058 = vadd.f32 %v2801, %v2932
        %v3059 = vadd.f32 %v2802, %v2935
        %v3060 = vadd.f32 %v2803, %v2940
        %v3061 = vadd.f32 %v2804, %v2943
        %v3062 = vadd.f32 %v2805, %v2948
        %v3063 = vadd.f32 %v2806, %v2951
        %v3064 = vadd.f32 %v2807, %v2956
        %v3065 = vadd.f32 %v2808, %v2959
        %v3066 = vadd.f32 %v2809, %v2964
        %v3067 = vadd.f32 %v2810, %v2967
        %v3068 = vadd.f32 %v2811, %v2972
        %v3069 = vadd.f32 %v2812, %v2975
        %v3070 = vadd.f32 %v2813, %v2980
        %v3071 = vadd.f32 %v2814, %v2983
        %v3072 = vadd.f32 %v2815, %v2988
        %v3073 = vadd.f32 %v2816, %v2991
        %v3074 = vadd.f32 %v2817, %v2996
        %v3075 = vadd.f32 %v2818, %v2999
        %v3076 = vadd.f32 %v2819, %v3004
        %v3077 = vadd.f32 %v2820, %v3007
        %v3078 = vadd.f32 %v2821, %v3012
        %v3079 = vadd.f32 %v2822, %v3015
        %v3080 = vadd.f32 %v2823, %v3020
        %v3081 = vadd.f32 %v2824, %v3023
        %v3082 = vadd.f32 %v2825, %v3028
        %v3083 = vadd.f32 %v2826, %v3031
        %v3084 = vadd.f32 %v2827, %v3036
        %v3085 = vadd.f32 %v2828, %v3039
        %v3086 = vadd.f32 %v2829, %v3044
        %v3087 = vadd.f32 %v2830, %v3047
        %v3088 = vadd.f32 %v2831, %v3052
        %v3089 = vadd.f32 %v2832, %v3055
        %v3090 = vld [vmem:[%s3] sm:$0x1]
        %v3091 = vld [vmem:[%s4] sm:$0x1]
        %v3092 = vadd.f32 %v3058, %v3059
        %v3093 = vadd.f32 %v3092, %v3060
        %v3094 = vadd.f32 %v3093, %v3061
        %v3095 = vadd.f32 %v3094, %v3062
        %v3096 = vadd.f32 %v3095, %v3063
        %v3097 = vadd.f32 %v3096, %v3064
        %v3098 = vadd.f32 %v3097, %v3065
        %v3099 = vadd.f32 %v3098, %v3066
        %v3100 = vadd.f32 %v3099, %v3067
        %v3101 = vadd.f32 %v3100, %v3068
        %v3102 = vadd.f32 %v3101, %v3069
        %v3103 = vadd.f32 %v3102, %v3070
        %v3104 = vadd.f32 %v3103, %v3071
        %v3105 = vadd.f32 %v3104, %v3072
        %v3106 = vadd.f32 %v3105, %v3073
        %v3107 = vadd.f32 %v3106, %v3074
        %v3108 = vadd.f32 %v3107, %v3075
        %v3109 = vadd.f32 %v3108, %v3076
        %v3110 = vadd.f32 %v3109, %v3077
        %v3111 = vadd.f32 %v3110, %v3078
        %v3112 = vadd.f32 %v3111, %v3079
        %v3113 = vadd.f32 %v3112, %v3080
        %v3114 = vadd.f32 %v3113, %v3081
        %v3115 = vadd.f32 %v3114, %v3082
        %v3116 = vadd.f32 %v3115, %v3083
        %v3117 = vadd.f32 %v3116, %v3084
        %v3118 = vadd.f32 %v3117, %v3085
        %v3119 = vadd.f32 %v3118, %v3086
        %v3120 = vadd.f32 %v3119, %v3087
        %v3121 = vadd.f32 %v3120, %v3088
        %v3122 = vadd.f32 %v3121, %v3089
        %v3123 = vrot.slane %v3122, 4
        %v3124 = vadd.f32 %v3122, %v3123
        %v3125 = vrot.slane %v3124, 2
        %v3126 = vadd.f32 %v3124, %v3125
        %v3127 = vrot.slane %v3126, 1
        %v3128 = vadd.f32 %v3126, %v3127
        %v3129 = vmul.f32 %v3128, 0.00390625
        %v3130 = vmul.f32 %v3058, %v3058
        %v3131 = vmul.f32 %v3059, %v3059
        %v3132 = vmul.f32 %v3060, %v3060
        %v3133 = vmul.f32 %v3061, %v3061
        %v3134 = vmul.f32 %v3062, %v3062
        %v3135 = vmul.f32 %v3063, %v3063
        %v3136 = vmul.f32 %v3064, %v3064
        %v3137 = vmul.f32 %v3065, %v3065
        %v3138 = vmul.f32 %v3066, %v3066
        %v3139 = vmul.f32 %v3067, %v3067
        %v3140 = vmul.f32 %v3068, %v3068
        %v3141 = vmul.f32 %v3069, %v3069
        %v3142 = vmul.f32 %v3070, %v3070
        %v3143 = vmul.f32 %v3071, %v3071
        %v3144 = vmul.f32 %v3072, %v3072
        %v3145 = vmul.f32 %v3073, %v3073
        %v3146 = vmul.f32 %v3074, %v3074
        %v3147 = vmul.f32 %v3075, %v3075
        %v3148 = vmul.f32 %v3076, %v3076
        %v3149 = vmul.f32 %v3077, %v3077
        %v3150 = vmul.f32 %v3078, %v3078
        %v3151 = vmul.f32 %v3079, %v3079
        %v3152 = vmul.f32 %v3080, %v3080
        %v3153 = vmul.f32 %v3081, %v3081
        %v3154 = vmul.f32 %v3082, %v3082
        %v3155 = vmul.f32 %v3083, %v3083
        %v3156 = vmul.f32 %v3084, %v3084
        %v3157 = vmul.f32 %v3085, %v3085
        %v3158 = vmul.f32 %v3086, %v3086
        %v3159 = vmul.f32 %v3087, %v3087
        %v3160 = vmul.f32 %v3088, %v3088
        %v3161 = vmul.f32 %v3089, %v3089
        %v3162 = vadd.f32 %v3130, %v3131
        %v3163 = vadd.f32 %v3162, %v3132
        %v3164 = vadd.f32 %v3163, %v3133
        %v3165 = vadd.f32 %v3164, %v3134
        %v3166 = vadd.f32 %v3165, %v3135
        %v3167 = vadd.f32 %v3166, %v3136
        %v3168 = vadd.f32 %v3167, %v3137
        %v3169 = vadd.f32 %v3168, %v3138
        %v3170 = vadd.f32 %v3169, %v3139
        %v3171 = vadd.f32 %v3170, %v3140
        %v3172 = vadd.f32 %v3171, %v3141
        %v3173 = vadd.f32 %v3172, %v3142
        %v3174 = vadd.f32 %v3173, %v3143
        %v3175 = vadd.f32 %v3174, %v3144
        %v3176 = vadd.f32 %v3175, %v3145
        %v3177 = vadd.f32 %v3176, %v3146
        %v3178 = vadd.f32 %v3177, %v3147
        %v3179 = vadd.f32 %v3178, %v3148
        %v3180 = vadd.f32 %v3179, %v3149
        %v3181 = vadd.f32 %v3180, %v3150
        %v3182 = vadd.f32 %v3181, %v3151
        %v3183 = vadd.f32 %v3182, %v3152
        %v3184 = vadd.f32 %v3183, %v3153
        %v3185 = vadd.f32 %v3184, %v3154
        %v3186 = vadd.f32 %v3185, %v3155
        %v3187 = vadd.f32 %v3186, %v3156
        %v3188 = vadd.f32 %v3187, %v3157
        %v3189 = vadd.f32 %v3188, %v3158
        %v3190 = vadd.f32 %v3189, %v3159
        %v3191 = vadd.f32 %v3190, %v3160
        %v3192 = vadd.f32 %v3191, %v3161
        %v3193 = vrot.slane %v3192, 4
        %v3194 = vadd.f32 %v3192, %v3193
        %v3195 = vrot.slane %v3194, 2
        %v3196 = vadd.f32 %v3194, %v3195
        %v3197 = vrot.slane %v3196, 1
        %v3198 = vadd.f32 %v3196, %v3197
        %v3199 = vmul.f32 %v3198, 0.00390625
        %v3200 = vmul.f32 %v3129, %v3129
        %v3201 = vsub.f32 %v3199, %v3200
        %v3202 = vmax.f32 %v3201, 0.0
        %v3203 = vsub.f32 %v3058, %v3129
        %v3204 = vsub.f32 %v3059, %v3129
        %v3205 = vsub.f32 %v3060, %v3129
        %v3206 = vsub.f32 %v3061, %v3129
        %v3207 = vsub.f32 %v3062, %v3129
        %v3208 = vsub.f32 %v3063, %v3129
        %v3209 = vsub.f32 %v3064, %v3129
        %v3210 = vsub.f32 %v3065, %v3129
        %v3211 = vsub.f32 %v3066, %v3129
        %v3212 = vsub.f32 %v3067, %v3129
        %v3213 = vsub.f32 %v3068, %v3129
        %v3214 = vsub.f32 %v3069, %v3129
        %v3215 = vsub.f32 %v3070, %v3129
        %v3216 = vsub.f32 %v3071, %v3129
        %v3217 = vsub.f32 %v3072, %v3129
        %v3218 = vsub.f32 %v3073, %v3129
        %v3219 = vsub.f32 %v3074, %v3129
        %v3220 = vsub.f32 %v3075, %v3129
        %v3221 = vsub.f32 %v3076, %v3129
        %v3222 = vsub.f32 %v3077, %v3129
        %v3223 = vsub.f32 %v3078, %v3129
        %v3224 = vsub.f32 %v3079, %v3129
        %v3225 = vsub.f32 %v3080, %v3129
        %v3226 = vsub.f32 %v3081, %v3129
        %v3227 = vsub.f32 %v3082, %v3129
        %v3228 = vsub.f32 %v3083, %v3129
        %v3229 = vsub.f32 %v3084, %v3129
        %v3230 = vsub.f32 %v3085, %v3129
        %v3231 = vsub.f32 %v3086, %v3129
        %v3232 = vsub.f32 %v3087, %v3129
        %v3233 = vsub.f32 %v3088, %v3129
        %v3234 = vsub.f32 %v3089, %v3129
        %v3235 = vadd.f32 %v3202, 1e-09
        %v3236 = vrsqrt.pop %v3235
        %v3237 = vmul.f32 %v3203, %v3236
        %v3238 = vmul.f32 %v3204, %v3236
        %v3239 = vmul.f32 %v3205, %v3236
        %v3240 = vmul.f32 %v3206, %v3236
        %v3241 = vmul.f32 %v3207, %v3236
        %v3242 = vmul.f32 %v3208, %v3236
        %v3243 = vmul.f32 %v3209, %v3236
        %v3244 = vmul.f32 %v3210, %v3236
        %v3245 = vmul.f32 %v3211, %v3236
        %v3246 = vmul.f32 %v3212, %v3236
        %v3247 = vmul.f32 %v3213, %v3236
        %v3248 = vmul.f32 %v3214, %v3236
        %v3249 = vmul.f32 %v3215, %v3236
        %v3250 = vmul.f32 %v3216, %v3236
        %v3251 = vmul.f32 %v3217, %v3236
        %v3252 = vmul.f32 %v3218, %v3236
        %v3253 = vmul.f32 %v3219, %v3236
        %v3254 = vmul.f32 %v3220, %v3236
        %v3255 = vmul.f32 %v3221, %v3236
        %v3256 = vmul.f32 %v3222, %v3236
        %v3257 = vmul.f32 %v3223, %v3236
        %v3258 = vmul.f32 %v3224, %v3236
        %v3259 = vmul.f32 %v3225, %v3236
        %v3260 = vmul.f32 %v3226, %v3236
        %v3261 = vmul.f32 %v3227, %v3236
        %v3262 = vmul.f32 %v3228, %v3236
        %v3263 = vmul.f32 %v3229, %v3236
        %v3264 = vmul.f32 %v3230, %v3236
        %v3265 = vmul.f32 %v3231, %v3236
        %v3266 = vmul.f32 %v3232, %v3236
        %v3267 = vmul.f32 %v3233, %v3236
        %v3268 = vmul.f32 %v3234, %v3236
        %v3270 = vlaneseq
        %v3271 = vshrl.u32 %v3270, 7
        %v3272 = vsub.s32 0, %v3271
        %v3273 = vrot.slane %v3090, %v3272
        %v3275 = vmul.f32 %v3237, %v3273
        %v3276 = vmul.f32 %v3238, %v3273
        %v3277 = vmul.f32 %v3239, %v3273
        %v3278 = vmul.f32 %v3240, %v3273
        %v3279 = vmul.f32 %v3241, %v3273
        %v3280 = vmul.f32 %v3242, %v3273
        %v3281 = vmul.f32 %v3243, %v3273
        %v3282 = vmul.f32 %v3244, %v3273
        %v3283 = vmul.f32 %v3245, %v3273
        %v3284 = vmul.f32 %v3246, %v3273
        %v3285 = vmul.f32 %v3247, %v3273
        %v3286 = vmul.f32 %v3248, %v3273
        %v3287 = vmul.f32 %v3249, %v3273
        %v3288 = vmul.f32 %v3250, %v3273
        %v3289 = vmul.f32 %v3251, %v3273
        %v3290 = vmul.f32 %v3252, %v3273
        %v3291 = vmul.f32 %v3253, %v3273
        %v3292 = vmul.f32 %v3254, %v3273
        %v3293 = vmul.f32 %v3255, %v3273
        %v3294 = vmul.f32 %v3256, %v3273
        %v3295 = vmul.f32 %v3257, %v3273
        %v3296 = vmul.f32 %v3258, %v3273
        %v3297 = vmul.f32 %v3259, %v3273
        %v3298 = vmul.f32 %v3260, %v3273
        %v3299 = vmul.f32 %v3261, %v3273
        %v3300 = vmul.f32 %v3262, %v3273
        %v3301 = vmul.f32 %v3263, %v3273
        %v3302 = vmul.f32 %v3264, %v3273
        %v3303 = vmul.f32 %v3265, %v3273
        %v3304 = vmul.f32 %v3266, %v3273
        %v3305 = vmul.f32 %v3267, %v3273
        %v3306 = vmul.f32 %v3268, %v3273
        %v3308 = vlaneseq
        %v3309 = vshrl.u32 %v3308, 7
        %v3310 = vsub.s32 0, %v3309
        %v3311 = vrot.slane %v3091, %v3310
        %v3313 = vadd.f32 %v3275, %v3311
        %v3314 = vadd.f32 %v3276, %v3311
        %v3315 = vadd.f32 %v3277, %v3311
        %v3316 = vadd.f32 %v3278, %v3311
        %v3317 = vadd.f32 %v3279, %v3311
        %v3318 = vadd.f32 %v3280, %v3311
        %v3319 = vadd.f32 %v3281, %v3311
        %v3320 = vadd.f32 %v3282, %v3311
        %v3321 = vadd.f32 %v3283, %v3311
        %v3322 = vadd.f32 %v3284, %v3311
        %v3323 = vadd.f32 %v3285, %v3311
        %v3324 = vadd.f32 %v3286, %v3311
        %v3325 = vadd.f32 %v3287, %v3311
        %v3326 = vadd.f32 %v3288, %v3311
        %v3327 = vadd.f32 %v3289, %v3311
        %v3328 = vadd.f32 %v3290, %v3311
        %v3329 = vadd.f32 %v3291, %v3311
        %v3330 = vadd.f32 %v3292, %v3311
        %v3331 = vadd.f32 %v3293, %v3311
        %v3332 = vadd.f32 %v3294, %v3311
        %v3333 = vadd.f32 %v3295, %v3311
        %v3334 = vadd.f32 %v3296, %v3311
        %v3335 = vadd.f32 %v3297, %v3311
        %v3336 = vadd.f32 %v3298, %v3311
        %v3337 = vadd.f32 %v3299, %v3311
        %v3338 = vadd.f32 %v3300, %v3311
        %v3339 = vadd.f32 %v3301, %v3311
        %v3340 = vadd.f32 %v3302, %v3311
        %v3341 = vadd.f32 %v3303, %v3311
        %v3342 = vadd.f32 %v3304, %v3311
        %v3343 = vadd.f32 %v3305, %v3311
        %v3344 = vadd.f32 %v3306, %v3311
        %v3345 = vmax.f32 %v3313, 0.0
        %v3346 = vmax.f32 %v3314, 0.0
        %v3347 = vmax.f32 %v3315, 0.0
        %v3348 = vmax.f32 %v3316, 0.0
        %v3349 = vmax.f32 %v3317, 0.0
        %v3350 = vmax.f32 %v3318, 0.0
        %v3351 = vmax.f32 %v3319, 0.0
        %v3352 = vmax.f32 %v3320, 0.0
        %v3353 = vmax.f32 %v3321, 0.0
        %v3354 = vmax.f32 %v3322, 0.0
        %v3355 = vmax.f32 %v3323, 0.0
        %v3356 = vmax.f32 %v3324, 0.0
        %v3357 = vmax.f32 %v3325, 0.0
        %v3358 = vmax.f32 %v3326, 0.0
        %v3359 = vmax.f32 %v3327, 0.0
        %v3360 = vmax.f32 %v3328, 0.0
        %v3361 = vmax.f32 %v3329, 0.0
        %v3362 = vmax.f32 %v3330, 0.0
        %v3363 = vmax.f32 %v3331, 0.0
        %v3364 = vmax.f32 %v3332, 0.0
        %v3365 = vmax.f32 %v3333, 0.0
        %v3366 = vmax.f32 %v3334, 0.0
        %v3367 = vmax.f32 %v3335, 0.0
        %v3368 = vmax.f32 %v3336, 0.0
        %v3369 = vmax.f32 %v3337, 0.0
        %v3370 = vmax.f32 %v3338, 0.0
        %v3371 = vmax.f32 %v3339, 0.0
        %v3372 = vmax.f32 %v3340, 0.0
        %v3373 = vmax.f32 %v3341, 0.0
        %v3374 = vmax.f32 %v3342, 0.0
        %v3375 = vmax.f32 %v3343, 0.0
        %v3376 = vmax.f32 %v3344, 0.0
        %v3393 = vrot.slane %v3347, 1
        %v3394 = vrot.slane %v3345, 1
        %v3395 = vrot.slane %v3349, 1
        %v3396 = vrot.slane %v3351, 1
        %v3397 = vrot.slane %v3353, 1
        %v3398 = vrot.slane %v3355, 1
        %v3399 = vrot.slane %v3357, 1
        %v3400 = vrot.slane %v3359, 1
        %v3401 = vrot.slane %v3361, 1
        %v3402 = vrot.slane %v3363, 1
        %v3403 = vrot.slane %v3365, 1
        %v3404 = vrot.slane %v3367, 1
        %v3405 = vrot.slane %v3369, 1
        %v3406 = vrot.slane %v3371, 1
        %v3407 = vrot.slane %v3373, 1
        %v3408 = vrot.slane %v3375, 1
        %v3441 = vrot.slane %v3347, 7
        %v3442 = vrot.slane %v3348, 7
        %v3443 = vsel %vm374, %v3441, %v3442
        %v3444 = vrot.slane %v3345, 7
        %v3445 = vrot.slane %v3346, 7
        %v3446 = vsel %vm374, %v3444, %v3445
        %v3447 = vrot.slane %v3349, 7
        %v3448 = vrot.slane %v3350, 7
        %v3449 = vsel %vm374, %v3447, %v3448
        %v3450 = vrot.slane %v3351, 7
        %v3451 = vrot.slane %v3352, 7
        %v3452 = vsel %vm374, %v3450, %v3451
        %v3453 = vrot.slane %v3353, 7
        %v3454 = vrot.slane %v3354, 7
        %v3455 = vsel %vm374, %v3453, %v3454
        %v3456 = vrot.slane %v3355, 7
        %v3457 = vrot.slane %v3356, 7
        %v3458 = vsel %vm374, %v3456, %v3457
        %v3459 = vrot.slane %v3357, 7
        %v3460 = vrot.slane %v3358, 7
        %v3461 = vsel %vm374, %v3459, %v3460
        %v3462 = vrot.slane %v3359, 7
        %v3463 = vrot.slane %v3360, 7
        %v3464 = vsel %vm374, %v3462, %v3463
        %v3465 = vrot.slane %v3361, 7
        %v3466 = vrot.slane %v3362, 7
        %v3467 = vsel %vm374, %v3465, %v3466
        %v3468 = vrot.slane %v3363, 7
        %v3469 = vrot.slane %v3364, 7
        %v3470 = vsel %vm374, %v3468, %v3469
        %v3471 = vrot.slane %v3365, 7
        %v3472 = vrot.slane %v3366, 7
        %v3473 = vsel %vm374, %v3471, %v3472
        %v3474 = vrot.slane %v3367, 7
        %v3475 = vrot.slane %v3368, 7
        %v3476 = vsel %vm374, %v3474, %v3475
        %v3477 = vrot.slane %v3369, 7
        %v3478 = vrot.slane %v3370, 7
        %v3479 = vsel %vm374, %v3477, %v3478
        %v3480 = vrot.slane %v3371, 7
        %v3481 = vrot.slane %v3372, 7
        %v3482 = vsel %vm374, %v3480, %v3481
        %v3483 = vrot.slane %v3373, 7
        %v3484 = vrot.slane %v3374, 7
        %v3485 = vsel %vm374, %v3483, %v3484
        %v3486 = vrot.slane %v3375, 7
        %v3487 = vrot.slane %v3376, 7
        %v3488 = vsel %vm374, %v3486, %v3487
        %v3537 = vrot.slane %v3348, 5
        %v3538 = vrot.slane %v3346, 5
        %v3539 = vrot.slane %v3350, 5
        %v3540 = vrot.slane %v3352, 5
        %v3541 = vrot.slane %v3354, 5
        %v3542 = vrot.slane %v3356, 5
        %v3543 = vrot.slane %v3358, 5
        %v3544 = vrot.slane %v3360, 5
        %v3545 = vrot.slane %v3362, 5
        %v3546 = vrot.slane %v3364, 5
        %v3547 = vrot.slane %v3366, 5
        %v3548 = vrot.slane %v3368, 5
        %v3549 = vrot.slane %v3370, 5
        %v3550 = vrot.slane %v3372, 5
        %v3551 = vrot.slane %v3374, 5
        %v3552 = vrot.slane %v3376, 5
        %v3569 = vsel %vm374, %v3393, %v3441
        %v3570 = vsel %vm374, %v3394, %v3444
        %v3571 = vsel %vm374, %v3395, %v3447
        %v3572 = vsel %vm374, %v3396, %v3450
        %v3573 = vsel %vm374, %v3397, %v3453
        %v3574 = vsel %vm374, %v3398, %v3456
        %v3575 = vsel %vm374, %v3399, %v3459
        %v3576 = vsel %vm374, %v3400, %v3462
        %v3577 = vsel %vm374, %v3401, %v3465
        %v3578 = vsel %vm374, %v3402, %v3468
        %v3579 = vsel %vm374, %v3403, %v3471
        %v3580 = vsel %vm374, %v3404, %v3474
        %v3581 = vsel %vm374, %v3405, %v3477
        %v3582 = vsel %vm374, %v3406, %v3480
        %v3583 = vsel %vm374, %v3407, %v3483
        %v3584 = vsel %vm374, %v3408, %v3486
        %v3585 = vsel %vm374, %v3442, %v3537
        %v3586 = vsel %vm374, %v3445, %v3538
        %v3587 = vsel %vm374, %v3448, %v3539
        %v3588 = vsel %vm374, %v3451, %v3540
        %v3589 = vsel %vm374, %v3454, %v3541
        %v3590 = vsel %vm374, %v3457, %v3542
        %v3591 = vsel %vm374, %v3460, %v3543
        %v3592 = vsel %vm374, %v3463, %v3544
        %v3593 = vsel %vm374, %v3466, %v3545
        %v3594 = vsel %vm374, %v3469, %v3546
        %v3595 = vsel %vm374, %v3472, %v3547
        %v3596 = vsel %vm374, %v3475, %v3548
        %v3597 = vsel %vm374, %v3478, %v3549
        %v3598 = vsel %vm374, %v3481, %v3550
        %v3599 = vsel %vm374, %v3484, %v3551
        %v3600 = vsel %vm374, %v3487, %v3552
        %v3601 = vpack.c.bf16 %v3443, %v3569
        %v3602 = vpack.c.bf16 %v3446, %v3570
        %v3603 = vpack.c.bf16 %v3449, %v3571
        %v3604 = vpack.c.bf16 %v3452, %v3572
        %v3605 = vpack.c.bf16 %v3455, %v3573
        %v3606 = vpack.c.bf16 %v3458, %v3574
        %v3607 = vpack.c.bf16 %v3461, %v3575
        %v3608 = vpack.c.bf16 %v3464, %v3576
        %v3609 = vpack.c.bf16 %v3467, %v3577
        %v3610 = vpack.c.bf16 %v3470, %v3578
        %v3611 = vpack.c.bf16 %v3473, %v3579
        %v3612 = vpack.c.bf16 %v3476, %v3580
        %v3613 = vpack.c.bf16 %v3479, %v3581
        %v3614 = vpack.c.bf16 %v3482, %v3582
        %v3615 = vpack.c.bf16 %v3485, %v3583
        %v3616 = vld [vmem:[%s2] sm:$0xf]
        %v3617 = vld [vmem:[%s2 + $0x4] sm:$0xf]
        %v3618 = vld [vmem:[%s2 + $0x8] sm:$0xf]
        %v3619 = vld [vmem:[%s2 + $0xc] sm:$0xf]
        %v3620 = vld [vmem:[%s2 + $0x10] sm:$0xf]
        %v3621 = vld [vmem:[%s2 + $0x14] sm:$0xf]
        %v3622 = vld [vmem:[%s2 + $0x18] sm:$0xf]
        %v3623 = vld [vmem:[%s2 + $0x1c] sm:$0xf]
        %v3624 = vld [vmem:[%s2 + $0x20] sm:$0xf]
        %v3625 = vld [vmem:[%s2 + $0x24] sm:$0xf]
        %v3626 = vld [vmem:[%s2 + $0x28] sm:$0xf]
        %v3627 = vld [vmem:[%s2 + $0x2c] sm:$0xf]
        %v3628 = vld [vmem:[%s2 + $0x30] sm:$0xf]
        %v3629 = vld [vmem:[%s2 + $0x34] sm:$0xf]
        %v3630 = vld [vmem:[%s2 + $0x38] sm:$0xf]
        %v3631 = vld [vmem:[%s2 + $0x3c] sm:$0xf]
        %v3662 = vrot.slane %v3569, 1
        %v3663 = vrot.slane %v3443, 1
        %v3664 = vsel %vm596, %v3662, %v3663
        %v3665 = vrot.slane %v3585, 1
        %v3666 = vsel %vm596, %v3663, %v3665
        %v3667 = vrot.slane %v3570, 1
        %v3668 = vrot.slane %v3446, 1
        %v3669 = vsel %vm596, %v3667, %v3668
        %v3670 = vrot.slane %v3586, 1
        %v3671 = vsel %vm596, %v3668, %v3670
        %v3672 = vrot.slane %v3571, 1
        %v3673 = vrot.slane %v3449, 1
        %v3674 = vsel %vm596, %v3672, %v3673
        %v3675 = vrot.slane %v3587, 1
        %v3676 = vsel %vm596, %v3673, %v3675
        %v3677 = vrot.slane %v3572, 1
        %v3678 = vrot.slane %v3452, 1
        %v3679 = vsel %vm596, %v3677, %v3678
        %v3680 = vrot.slane %v3588, 1
        %v3681 = vsel %vm596, %v3678, %v3680
        %v3682 = vrot.slane %v3573, 1
        %v3683 = vrot.slane %v3455, 1
        %v3684 = vsel %vm596, %v3682, %v3683
        %v3685 = vrot.slane %v3589, 1
        %v3686 = vsel %vm596, %v3683, %v3685
        %v3687 = vrot.slane %v3574, 1
        %v3688 = vrot.slane %v3458, 1
        %v3689 = vsel %vm596, %v3687, %v3688
        %v3690 = vrot.slane %v3590, 1
        %v3691 = vsel %vm596, %v3688, %v3690
        %v3692 = vrot.slane %v3575, 1
        %v3693 = vrot.slane %v3461, 1
        %v3694 = vsel %vm596, %v3692, %v3693
        %v3695 = vrot.slane %v3591, 1
        %v3696 = vsel %vm596, %v3693, %v3695
        %v3697 = vrot.slane %v3576, 1
        %v3698 = vrot.slane %v3464, 1
        %v3699 = vsel %vm596, %v3697, %v3698
        %v3700 = vrot.slane %v3592, 1
        %v3701 = vsel %vm596, %v3698, %v3700
        %v3702 = vrot.slane %v3577, 1
        %v3703 = vrot.slane %v3467, 1
        %v3704 = vsel %vm596, %v3702, %v3703
        %v3705 = vrot.slane %v3593, 1
        %v3706 = vsel %vm596, %v3703, %v3705
        %v3707 = vrot.slane %v3578, 1
        %v3708 = vrot.slane %v3470, 1
        %v3709 = vsel %vm596, %v3707, %v3708
        %v3710 = vrot.slane %v3594, 1
        %v3711 = vsel %vm596, %v3708, %v3710
        %v3712 = vrot.slane %v3579, 1
        %v3713 = vrot.slane %v3473, 1
        %v3714 = vsel %vm596, %v3712, %v3713
        %v3715 = vrot.slane %v3595, 1
        %v3716 = vsel %vm596, %v3713, %v3715
        %v3717 = vrot.slane %v3580, 1
        %v3718 = vrot.slane %v3476, 1
        %v3719 = vsel %vm596, %v3717, %v3718
        %v3720 = vrot.slane %v3596, 1
        %v3721 = vsel %vm596, %v3718, %v3720
        %v3722 = vrot.slane %v3581, 1
        %v3723 = vrot.slane %v3479, 1
        %v3724 = vsel %vm596, %v3722, %v3723
        %v3725 = vrot.slane %v3597, 1
        %v3726 = vsel %vm596, %v3723, %v3725
        %v3727 = vrot.slane %v3582, 1
        %v3728 = vrot.slane %v3482, 1
        %v3729 = vsel %vm596, %v3727, %v3728
        %v3730 = vrot.slane %v3598, 1
        %v3731 = vsel %vm596, %v3728, %v3730
        %v3732 = vrot.slane %v3583, 1
        %v3733 = vrot.slane %v3485, 1
        %v3734 = vsel %vm596, %v3732, %v3733
        %v3735 = vrot.slane %v3599, 1
        %v3736 = vsel %vm596, %v3733, %v3735
        %v3767 = vpack.c.bf16 %v3666, %v3664
        %v3768 = vpack.c.bf16 %v3671, %v3669
        %v3769 = vpack.c.bf16 %v3676, %v3674
        %v3770 = vpack.c.bf16 %v3681, %v3679
        %v3771 = vpack.c.bf16 %v3686, %v3684
        %v3772 = vpack.c.bf16 %v3691, %v3689
        %v3773 = vpack.c.bf16 %v3696, %v3694
        %v3774 = vpack.c.bf16 %v3701, %v3699
        %v3775 = vpack.c.bf16 %v3706, %v3704
        %v3776 = vpack.c.bf16 %v3711, %v3709
        %v3777 = vpack.c.bf16 %v3716, %v3714
        %v3778 = vpack.c.bf16 %v3721, %v3719
        %v3779 = vpack.c.bf16 %v3726, %v3724
        %v3780 = vpack.c.bf16 %v3731, %v3729
        %v3781 = vpack.c.bf16 %v3736, %v3734
        %v3782 = vld [vmem:[%s2 + $0x40] sm:$0xf]
        %v3783 = vld [vmem:[%s2 + $0x44] sm:$0xf]
        %v3784 = vld [vmem:[%s2 + $0x48] sm:$0xf]
        %v3785 = vld [vmem:[%s2 + $0x4c] sm:$0xf]
        %v3786 = vld [vmem:[%s2 + $0x50] sm:$0xf]
        %v3787 = vld [vmem:[%s2 + $0x54] sm:$0xf]
        %v3788 = vld [vmem:[%s2 + $0x58] sm:$0xf]
        %v3789 = vld [vmem:[%s2 + $0x5c] sm:$0xf]
        %v3790 = vld [vmem:[%s2 + $0x60] sm:$0xf]
        %v3791 = vld [vmem:[%s2 + $0x64] sm:$0xf]
        %v3792 = vld [vmem:[%s2 + $0x68] sm:$0xf]
        %v3793 = vld [vmem:[%s2 + $0x6c] sm:$0xf]
        %v3794 = vld [vmem:[%s2 + $0x70] sm:$0xf]
        %v3795 = vld [vmem:[%s2 + $0x74] sm:$0xf]
        %v3796 = vld [vmem:[%s2 + $0x78] sm:$0xf]
        %v3797 = vld [vmem:[%s2 + $0x7c] sm:$0xf]
        %v3814 = vunpack.c.l.b16 %v3782
        %v3815 = vunpack.c.l.b16 %v3783
        %v3816 = vunpack.c.l.b16 %v3784
        %v3817 = vunpack.c.l.b16 %v3785
        %v3818 = vunpack.c.l.b16 %v3786
        %v3819 = vunpack.c.l.b16 %v3787
        %v3820 = vunpack.c.l.b16 %v3788
        %v3821 = vunpack.c.l.b16 %v3789
        %v3822 = vunpack.c.l.b16 %v3790
        %v3823 = vunpack.c.l.b16 %v3791
        %v3824 = vunpack.c.l.b16 %v3792
        %v3825 = vunpack.c.l.b16 %v3793
        %v3826 = vunpack.c.l.b16 %v3794
        %v3827 = vunpack.c.l.b16 %v3795
        %v3828 = vunpack.c.l.b16 %v3796
        %v3829 = vunpack.c.l.b16 %v3797
        %v3830 = vpack.c.b16 %v3815, %v3814
        %v3831 = vpack.c.b16 %v3817, %v3816
        %v3832 = vpack.c.b16 %v3819, %v3818
        %v3833 = vpack.c.b16 %v3821, %v3820
        %v3834 = vpack.c.b16 %v3823, %v3822
        %v3835 = vpack.c.b16 %v3825, %v3824
        %v3836 = vpack.c.b16 %v3827, %v3826
        %v3837 = vpack.c.b16 %v3829, %v3828
        %3846 = vmatprep.subr.bf16.mxu0 0
        %3847 = vmatpush1.bf16.msra.mxu0 %v3837
        %3848 = vmatprep.subr.bf16.mxu0 0
        %3849 = vmatpush1.bf16.msra.mxu0 %v3836
        %3850 = vmatprep.subr.bf16.mxu0 0
        %3851 = vmatpush1.bf16.msra.mxu0 %v3835
        %3852 = vmatprep.subr.bf16.mxu0 0
        %3853 = vmatpush1.bf16.msra.mxu0 %v3834
        %3854 = vmatprep.subr.bf16.mxu0 0
        %3855 = vmatpush1.bf16.msra.mxu0 %v3833
        %3856 = vmatprep.subr.bf16.mxu0 0
        %3857 = vmatpush1.bf16.msra.mxu0 %v3832
        %3858 = vmatprep.subr.bf16.mxu0 0
        %3859 = vmatpush1.bf16.msra.mxu0 %v3831
        %3860 = vmatprep.subr.bf16.mxu0 0
        %3861 = vmatpush1.bf16.msra.mxu0 %v3830
        %3862 = vmatprep.subr.bf16.mxu0 0
        %3863 = vmatpush2.bf16.msra.mxu0 0
        %3864 = vmatprep.subr.bf16.mxu0 0
        %3865 = vmatpush2.bf16.msra.mxu0 0
        %3866 = vmatprep.subr.bf16.mxu0 0
        %3867 = vmatpush2.bf16.msra.mxu0 0
        %3868 = vmatprep.subr.bf16.mxu0 0
        %3869 = vmatpush2.bf16.msra.mxu0 0
        %3870 = vmatprep.subr.bf16.mxu0 0
        %3871 = vmatpush2.bf16.msra.mxu0 0
        %3872 = vmatprep.subr.bf16.mxu0 0
        %3873 = vmatpush2.bf16.msra.mxu0 0
        %3874 = vmatprep.subr.bf16.mxu0 0
        %3875 = vmatpush2.bf16.msra.mxu0 0
        %3876 = vmatprep.subr.bf16.mxu0 0
        %3877 = vmatpush2.bf16.msra.mxu0 0
        %3878 = vmatprep.mubr.bf16.mxu0 0
        %3879 = vmatmul.mubr.bf16.gmra.mxu0 %v3767
        %v3880 = vpop.f32.mrf.mxu0
        %v3881 = vadd.f32 0.0, %v3880
        %v3882 = vpop.f32.mrf.mxu0
        %v3883 = vpop.f32.mrf.mxu0
        %v3884 = vadd.f32 0.0, %v3883
        %v3885 = vpop.f32.mrf.mxu0
        %3886 = vmatprep.mubr.bf16.mxu0 0
        %3887 = vmatmul.mubr.bf16.gmra.mxu0 %v3768
        %v3888 = vpop.f32.mrf.mxu0
        %v3889 = vadd.f32 0.0, %v3888
        %v3890 = vpop.f32.mrf.mxu0
        %v3891 = vpop.f32.mrf.mxu0
        %v3892 = vadd.f32 0.0, %v3891
        %v3893 = vpop.f32.mrf.mxu0
        %3894 = vmatprep.mubr.bf16.mxu0 0
        %3895 = vmatmul.mubr.bf16.gmra.mxu0 %v3767
        %v3896 = vpop.f32.mrf.mxu0
        %v3897 = vadd.f32 0.0, %v3896
        %v3898 = vpop.f32.mrf.mxu0
        %v3899 = vpop.f32.mrf.mxu0
        %v3900 = vadd.f32 0.0, %v3899
        %v3901 = vpop.f32.mrf.mxu0
        %3902 = vmatprep.mubr.bf16.mxu0 0
        %3903 = vmatmul.mubr.bf16.gmra.mxu0 %v3769
        %v3904 = vpop.f32.mrf.mxu0
        %v3905 = vadd.f32 0.0, %v3904
        %v3906 = vpop.f32.mrf.mxu0
        %v3907 = vpop.f32.mrf.mxu0
        %v3908 = vadd.f32 0.0, %v3907
        %v3909 = vpop.f32.mrf.mxu0
        %3910 = vmatprep.mubr.bf16.mxu0 0
        %3911 = vmatmul.mubr.bf16.gmra.mxu0 %v3770
        %v3912 = vpop.f32.mrf.mxu0
        %v3913 = vadd.f32 0.0, %v3912
        %v3914 = vpop.f32.mrf.mxu0
        %v3915 = vpop.f32.mrf.mxu0
        %v3916 = vadd.f32 0.0, %v3915
        %v3917 = vpop.f32.mrf.mxu0
        %3918 = vmatprep.mubr.bf16.mxu0 0
        %3919 = vmatmul.mubr.bf16.gmra.mxu0 %v3771
        %v3920 = vpop.f32.mrf.mxu0
        %v3921 = vadd.f32 0.0, %v3920
        %v3922 = vpop.f32.mrf.mxu0
        %v3923 = vpop.f32.mrf.mxu0
        %v3924 = vadd.f32 0.0, %v3923
        %v3925 = vpop.f32.mrf.mxu0
        %3926 = vmatprep.mubr.bf16.mxu0 0
        %3927 = vmatmul.mubr.bf16.gmra.mxu0 %v3772
        %v3928 = vpop.f32.mrf.mxu0
        %v3929 = vadd.f32 0.0, %v3928
        %v3930 = vpop.f32.mrf.mxu0
        %v3931 = vpop.f32.mrf.mxu0
        %v3932 = vadd.f32 0.0, %v3931
        %v3933 = vpop.f32.mrf.mxu0
        %3934 = vmatprep.mubr.bf16.mxu0 0
        %3935 = vmatmul.mubr.bf16.gmra.mxu0 %v3773
        %v3936 = vpop.f32.mrf.mxu0
        %v3937 = vadd.f32 0.0, %v3936
        %v3938 = vpop.f32.mrf.mxu0
        %v3939 = vpop.f32.mrf.mxu0
        %v3940 = vadd.f32 0.0, %v3939
        %v3941 = vpop.f32.mrf.mxu0
        %3942 = vmatprep.mubr.bf16.mxu0 0
        %3943 = vmatmul.mubr.bf16.gmra.mxu0 %v3774
        %v3944 = vpop.f32.mrf.mxu0
        %v3945 = vadd.f32 0.0, %v3944
        %v3946 = vpop.f32.mrf.mxu0
        %v3947 = vpop.f32.mrf.mxu0
        %v3948 = vadd.f32 0.0, %v3947
        %v3949 = vpop.f32.mrf.mxu0
        %3950 = vmatprep.mubr.bf16.mxu0 0
        %3951 = vmatmul.mubr.bf16.gmra.mxu0 %v3775
        %v3952 = vpop.f32.mrf.mxu0
        %v3953 = vadd.f32 0.0, %v3952
        %v3954 = vpop.f32.mrf.mxu0
        %v3955 = vpop.f32.mrf.mxu0
        %v3956 = vadd.f32 0.0, %v3955
        %v3957 = vpop.f32.mrf.mxu0
        %3958 = vmatprep.mubr.bf16.mxu0 0
        %3959 = vmatmul.mubr.bf16.gmra.mxu0 %v3776
        %v3960 = vpop.f32.mrf.mxu0
        %v3961 = vadd.f32 0.0, %v3960
        %v3962 = vpop.f32.mrf.mxu0
        %v3963 = vpop.f32.mrf.mxu0
        %v3964 = vadd.f32 0.0, %v3963
        %v3965 = vpop.f32.mrf.mxu0
        %3966 = vmatprep.mubr.bf16.mxu0 0
        %3967 = vmatmul.mubr.bf16.gmra.mxu0 %v3777
        %v3968 = vpop.f32.mrf.mxu0
        %v3969 = vadd.f32 0.0, %v3968
        %v3970 = vpop.f32.mrf.mxu0
        %v3971 = vpop.f32.mrf.mxu0
        %v3972 = vadd.f32 0.0, %v3971
        %v3973 = vpop.f32.mrf.mxu0
        %3974 = vmatprep.mubr.bf16.mxu0 0
        %3975 = vmatmul.mubr.bf16.gmra.mxu0 %v3778
        %v3976 = vpop.f32.mrf.mxu0
        %v3977 = vadd.f32 0.0, %v3976
        %v3978 = vpop.f32.mrf.mxu0
        %v3979 = vpop.f32.mrf.mxu0
        %v3980 = vadd.f32 0.0, %v3979
        %v3981 = vpop.f32.mrf.mxu0
        %3982 = vmatprep.mubr.bf16.mxu0 0
        %3983 = vmatmul.mubr.bf16.gmra.mxu0 %v3779
        %v3984 = vpop.f32.mrf.mxu0
        %v3985 = vadd.f32 0.0, %v3984
        %v3986 = vpop.f32.mrf.mxu0
        %v3987 = vpop.f32.mrf.mxu0
        %v3988 = vadd.f32 0.0, %v3987
        %v3989 = vpop.f32.mrf.mxu0
        %3990 = vmatprep.mubr.bf16.mxu0 0
        %3991 = vmatmul.mubr.bf16.gmra.mxu0 %v3780
        %v3992 = vpop.f32.mrf.mxu0
        %v3993 = vadd.f32 0.0, %v3992
        %v3994 = vpop.f32.mrf.mxu0
        %v3995 = vpop.f32.mrf.mxu0
        %v3996 = vadd.f32 0.0, %v3995
        %v3997 = vpop.f32.mrf.mxu0
        %3998 = vmatprep.mubr.bf16.mxu0 0
        %3999 = vmatmul.mubr.bf16.gmra.mxu0 %v3781
        %v4000 = vpop.f32.mrf.mxu0
        %v4001 = vadd.f32 0.0, %v4000
        %v4002 = vpop.f32.mrf.mxu0
        %v4003 = vpop.f32.mrf.mxu0
        %v4004 = vadd.f32 0.0, %v4003
        %v4005 = vpop.f32.mrf.mxu0
        %4006 = vdwg.mxu0
        %v4023 = vunpack.c.l.b16 %v3616
        %v4024 = vunpack.c.l.b16 %v3617
        %v4025 = vunpack.c.l.b16 %v3618
        %v4026 = vunpack.c.l.b16 %v3619
        %v4027 = vunpack.c.l.b16 %v3620
        %v4028 = vunpack.c.l.b16 %v3621
        %v4029 = vunpack.c.l.b16 %v3622
        %v4030 = vunpack.c.l.b16 %v3623
        %v4031 = vunpack.c.l.b16 %v3624
        %v4032 = vunpack.c.l.b16 %v3625
        %v4033 = vunpack.c.l.b16 %v3626
        %v4034 = vunpack.c.l.b16 %v3627
        %v4035 = vunpack.c.l.b16 %v3628
        %v4036 = vunpack.c.l.b16 %v3629
        %v4037 = vunpack.c.l.b16 %v3630
        %v4038 = vunpack.c.l.b16 %v3631
        %v4039 = vpack.c.b16 %v4024, %v4023
        %v4040 = vpack.c.b16 %v4026, %v4025
        %v4041 = vpack.c.b16 %v4028, %v4027
        %v4042 = vpack.c.b16 %v4030, %v4029
        %v4043 = vpack.c.b16 %v4032, %v4031
        %v4044 = vpack.c.b16 %v4034, %v4033
        %v4045 = vpack.c.b16 %v4036, %v4035
        %v4046 = vpack.c.b16 %v4038, %v4037
        %4055 = vmatprep.subr.bf16.mxu0 0
        %4056 = vmatpush1.bf16.msra.mxu0 %v4046
        %4057 = vmatprep.subr.bf16.mxu0 0
        %4058 = vmatpush1.bf16.msra.mxu0 %v4045
        %4059 = vmatprep.subr.bf16.mxu0 0
        %4060 = vmatpush1.bf16.msra.mxu0 %v4044
        %4061 = vmatprep.subr.bf16.mxu0 0
        %4062 = vmatpush1.bf16.msra.mxu0 %v4043
        %4063 = vmatprep.subr.bf16.mxu0 0
        %4064 = vmatpush1.bf16.msra.mxu0 %v4042
        %4065 = vmatprep.subr.bf16.mxu0 0
        %4066 = vmatpush1.bf16.msra.mxu0 %v4041
        %4067 = vmatprep.subr.bf16.mxu0 0
        %4068 = vmatpush1.bf16.msra.mxu0 %v4040
        %4069 = vmatprep.subr.bf16.mxu0 0
        %4070 = vmatpush1.bf16.msra.mxu0 %v4039
        %4071 = vmatprep.subr.bf16.mxu0 0
        %4072 = vmatpush2.bf16.msra.mxu0 0
        %4073 = vmatprep.subr.bf16.mxu0 0
        %4074 = vmatpush2.bf16.msra.mxu0 0
        %4075 = vmatprep.subr.bf16.mxu0 0
        %4076 = vmatpush2.bf16.msra.mxu0 0
        %4077 = vmatprep.subr.bf16.mxu0 0
        %4078 = vmatpush2.bf16.msra.mxu0 0
        %4079 = vmatprep.subr.bf16.mxu0 0
        %4080 = vmatpush2.bf16.msra.mxu0 0
        %4081 = vmatprep.subr.bf16.mxu0 0
        %4082 = vmatpush2.bf16.msra.mxu0 0
        %4083 = vmatprep.subr.bf16.mxu0 0
        %4084 = vmatpush2.bf16.msra.mxu0 0
        %4085 = vmatprep.subr.bf16.mxu0 0
        %4086 = vmatpush2.bf16.msra.mxu0 0
        %4087 = vmatprep.mubr.bf16.mxu0 0
        %4088 = vmatmul.mubr.bf16.gmra.mxu0 %v3601
        %v4089 = vpop.f32.mrf.mxu0
        %v4090 = vadd.f32 %v3881, %v4089
        %v4091 = vpop.f32.mrf.mxu0
        %v4092 = vpop.f32.mrf.mxu0
        %v4093 = vadd.f32 %v3884, %v4092
        %v4094 = vpop.f32.mrf.mxu0
        %4095 = vmatprep.mubr.bf16.mxu0 0
        %4096 = vmatmul.mubr.bf16.gmra.mxu0 %v3602
        %v4097 = vpop.f32.mrf.mxu0
        %v4098 = vadd.f32 %v3889, %v4097
        %v4099 = vpop.f32.mrf.mxu0
        %v4100 = vpop.f32.mrf.mxu0
        %v4101 = vadd.f32 %v3892, %v4100
        %v4102 = vpop.f32.mrf.mxu0
        %4103 = vmatprep.mubr.bf16.mxu0 0
        %4104 = vmatmul.mubr.bf16.gmra.mxu0 %v3601
        %v4105 = vpop.f32.mrf.mxu0
        %v4106 = vadd.f32 %v3897, %v4105
        %v4107 = vpop.f32.mrf.mxu0
        %v4108 = vpop.f32.mrf.mxu0
        %v4109 = vadd.f32 %v3900, %v4108
        %v4110 = vpop.f32.mrf.mxu0
        %4111 = vmatprep.mubr.bf16.mxu0 0
        %4112 = vmatmul.mubr.bf16.gmra.mxu0 %v3603
        %v4113 = vpop.f32.mrf.mxu0
        %v4114 = vadd.f32 %v3905, %v4113
        %v4115 = vpop.f32.mrf.mxu0
        %v4116 = vpop.f32.mrf.mxu0
        %v4117 = vadd.f32 %v3908, %v4116
        %v4118 = vpop.f32.mrf.mxu0
        %4119 = vmatprep.mubr.bf16.mxu0 0
        %4120 = vmatmul.mubr.bf16.gmra.mxu0 %v3604
        %v4121 = vpop.f32.mrf.mxu0
        %v4122 = vadd.f32 %v3913, %v4121
        %v4123 = vpop.f32.mrf.mxu0
        %v4124 = vpop.f32.mrf.mxu0
        %v4125 = vadd.f32 %v3916, %v4124
        %v4126 = vpop.f32.mrf.mxu0
        %4127 = vmatprep.mubr.bf16.mxu0 0
        %4128 = vmatmul.mubr.bf16.gmra.mxu0 %v3605
        %v4129 = vpop.f32.mrf.mxu0
        %v4130 = vadd.f32 %v3921, %v4129
        %v4131 = vpop.f32.mrf.mxu0
        %v4132 = vpop.f32.mrf.mxu0
        %v4133 = vadd.f32 %v3924, %v4132
        %v4134 = vpop.f32.mrf.mxu0
        %4135 = vmatprep.mubr.bf16.mxu0 0
        %4136 = vmatmul.mubr.bf16.gmra.mxu0 %v3606
        %v4137 = vpop.f32.mrf.mxu0
        %v4138 = vadd.f32 %v3929, %v4137
        %v4139 = vpop.f32.mrf.mxu0
        %v4140 = vpop.f32.mrf.mxu0
        %v4141 = vadd.f32 %v3932, %v4140
        %v4142 = vpop.f32.mrf.mxu0
        %4143 = vmatprep.mubr.bf16.mxu0 0
        %4144 = vmatmul.mubr.bf16.gmra.mxu0 %v3607
        %v4145 = vpop.f32.mrf.mxu0
        %v4146 = vadd.f32 %v3937, %v4145
        %v4147 = vpop.f32.mrf.mxu0
        %v4148 = vpop.f32.mrf.mxu0
        %v4149 = vadd.f32 %v3940, %v4148
        %v4150 = vpop.f32.mrf.mxu0
        %4151 = vmatprep.mubr.bf16.mxu0 0
        %4152 = vmatmul.mubr.bf16.gmra.mxu0 %v3608
        %v4153 = vpop.f32.mrf.mxu0
        %v4154 = vadd.f32 %v3945, %v4153
        %v4155 = vpop.f32.mrf.mxu0
        %v4156 = vpop.f32.mrf.mxu0
        %v4157 = vadd.f32 %v3948, %v4156
        %v4158 = vpop.f32.mrf.mxu0
        %4159 = vmatprep.mubr.bf16.mxu0 0
        %4160 = vmatmul.mubr.bf16.gmra.mxu0 %v3609
        %v4161 = vpop.f32.mrf.mxu0
        %v4162 = vadd.f32 %v3953, %v4161
        %v4163 = vpop.f32.mrf.mxu0
        %v4164 = vpop.f32.mrf.mxu0
        %v4165 = vadd.f32 %v3956, %v4164
        %v4166 = vpop.f32.mrf.mxu0
        %4167 = vmatprep.mubr.bf16.mxu0 0
        %4168 = vmatmul.mubr.bf16.gmra.mxu0 %v3610
        %v4169 = vpop.f32.mrf.mxu0
        %v4170 = vadd.f32 %v3961, %v4169
        %v4171 = vpop.f32.mrf.mxu0
        %v4172 = vpop.f32.mrf.mxu0
        %v4173 = vadd.f32 %v3964, %v4172
        %v4174 = vpop.f32.mrf.mxu0
        %4175 = vmatprep.mubr.bf16.mxu0 0
        %4176 = vmatmul.mubr.bf16.gmra.mxu0 %v3611
        %v4177 = vpop.f32.mrf.mxu0
        %v4178 = vadd.f32 %v3969, %v4177
        %v4179 = vpop.f32.mrf.mxu0
        %v4180 = vpop.f32.mrf.mxu0
        %v4181 = vadd.f32 %v3972, %v4180
        %v4182 = vpop.f32.mrf.mxu0
        %4183 = vmatprep.mubr.bf16.mxu0 0
        %4184 = vmatmul.mubr.bf16.gmra.mxu0 %v3612
        %v4185 = vpop.f32.mrf.mxu0
        %v4186 = vadd.f32 %v3977, %v4185
        %v4187 = vpop.f32.mrf.mxu0
        %v4188 = vpop.f32.mrf.mxu0
        %v4189 = vadd.f32 %v3980, %v4188
        %v4190 = vpop.f32.mrf.mxu0
        %4191 = vmatprep.mubr.bf16.mxu0 0
        %4192 = vmatmul.mubr.bf16.gmra.mxu0 %v3613
        %v4193 = vpop.f32.mrf.mxu0
        %v4194 = vadd.f32 %v3985, %v4193
        %v4195 = vpop.f32.mrf.mxu0
        %v4196 = vpop.f32.mrf.mxu0
        %v4197 = vadd.f32 %v3988, %v4196
        %v4198 = vpop.f32.mrf.mxu0
        %4199 = vmatprep.mubr.bf16.mxu0 0
        %4200 = vmatmul.mubr.bf16.gmra.mxu0 %v3614
        %v4201 = vpop.f32.mrf.mxu0
        %v4202 = vadd.f32 %v3993, %v4201
        %v4203 = vpop.f32.mrf.mxu0
        %v4204 = vpop.f32.mrf.mxu0
        %v4205 = vadd.f32 %v3996, %v4204
        %v4206 = vpop.f32.mrf.mxu0
        %4207 = vmatprep.mubr.bf16.mxu0 0
        %4208 = vmatmul.mubr.bf16.gmra.mxu0 %v3615
        %v4209 = vpop.f32.mrf.mxu0
        %v4210 = vadd.f32 %v4001, %v4209
        %v4211 = vpop.f32.mrf.mxu0
        %v4212 = vpop.f32.mrf.mxu0
        %v4213 = vadd.f32 %v4004, %v4212
        %v4214 = vpop.f32.mrf.mxu0
        %4215 = vdwg.mxu0
        %v4216 = vrot.slane %v3569, 2
        %v4217 = vrot.slane %v3443, 2
        %v4218 = vsel %vm1151, %v4216, %v4217
        %v4219 = vrot.slane %v3585, 2
        %v4220 = vsel %vm1151, %v4217, %v4219
        %v4221 = vrot.slane %v3570, 2
        %v4222 = vrot.slane %v3446, 2
        %v4223 = vsel %vm1151, %v4221, %v4222
        %v4224 = vrot.slane %v3586, 2
        %v4225 = vsel %vm1151, %v4222, %v4224
        %v4226 = vrot.slane %v3571, 2
        %v4227 = vrot.slane %v3449, 2
        %v4228 = vsel %vm1151, %v4226, %v4227
        %v4229 = vrot.slane %v3587, 2
        %v4230 = vsel %vm1151, %v4227, %v4229
        %v4231 = vrot.slane %v3572, 2
        %v4232 = vrot.slane %v3452, 2
        %v4233 = vsel %vm1151, %v4231, %v4232
        %v4234 = vrot.slane %v3588, 2
        %v4235 = vsel %vm1151, %v4232, %v4234
        %v4236 = vrot.slane %v3573, 2
        %v4237 = vrot.slane %v3455, 2
        %v4238 = vsel %vm1151, %v4236, %v4237
        %v4239 = vrot.slane %v3589, 2
        %v4240 = vsel %vm1151, %v4237, %v4239
        %v4241 = vrot.slane %v3574, 2
        %v4242 = vrot.slane %v3458, 2
        %v4243 = vsel %vm1151, %v4241, %v4242
        %v4244 = vrot.slane %v3590, 2
        %v4245 = vsel %vm1151, %v4242, %v4244
        %v4246 = vrot.slane %v3575, 2
        %v4247 = vrot.slane %v3461, 2
        %v4248 = vsel %vm1151, %v4246, %v4247
        %v4249 = vrot.slane %v3591, 2
        %v4250 = vsel %vm1151, %v4247, %v4249
        %v4251 = vrot.slane %v3576, 2
        %v4252 = vrot.slane %v3464, 2
        %v4253 = vsel %vm1151, %v4251, %v4252
        %v4254 = vrot.slane %v3592, 2
        %v4255 = vsel %vm1151, %v4252, %v4254
        %v4256 = vrot.slane %v3577, 2
        %v4257 = vrot.slane %v3467, 2
        %v4258 = vsel %vm1151, %v4256, %v4257
        %v4259 = vrot.slane %v3593, 2
        %v4260 = vsel %vm1151, %v4257, %v4259
        %v4261 = vrot.slane %v3578, 2
        %v4262 = vrot.slane %v3470, 2
        %v4263 = vsel %vm1151, %v4261, %v4262
        %v4264 = vrot.slane %v3594, 2
        %v4265 = vsel %vm1151, %v4262, %v4264
        %v4266 = vrot.slane %v3579, 2
        %v4267 = vrot.slane %v3473, 2
        %v4268 = vsel %vm1151, %v4266, %v4267
        %v4269 = vrot.slane %v3595, 2
        %v4270 = vsel %vm1151, %v4267, %v4269
        %v4271 = vrot.slane %v3580, 2
        %v4272 = vrot.slane %v3476, 2
        %v4273 = vsel %vm1151, %v4271, %v4272
        %v4274 = vrot.slane %v3596, 2
        %v4275 = vsel %vm1151, %v4272, %v4274
        %v4276 = vrot.slane %v3581, 2
        %v4277 = vrot.slane %v3479, 2
        %v4278 = vsel %vm1151, %v4276, %v4277
        %v4279 = vrot.slane %v3597, 2
        %v4280 = vsel %vm1151, %v4277, %v4279
        %v4281 = vrot.slane %v3582, 2
        %v4282 = vrot.slane %v3482, 2
        %v4283 = vsel %vm1151, %v4281, %v4282
        %v4284 = vrot.slane %v3598, 2
        %v4285 = vsel %vm1151, %v4282, %v4284
        %v4286 = vrot.slane %v3583, 2
        %v4287 = vrot.slane %v3485, 2
        %v4288 = vsel %vm1151, %v4286, %v4287
        %v4289 = vrot.slane %v3599, 2
        %v4290 = vsel %vm1151, %v4287, %v4289
        %v4321 = vpack.c.bf16 %v4220, %v4218
        %v4322 = vpack.c.bf16 %v4225, %v4223
        %v4323 = vpack.c.bf16 %v4230, %v4228
        %v4324 = vpack.c.bf16 %v4235, %v4233
        %v4325 = vpack.c.bf16 %v4240, %v4238
        %v4326 = vpack.c.bf16 %v4245, %v4243
        %v4327 = vpack.c.bf16 %v4250, %v4248
        %v4328 = vpack.c.bf16 %v4255, %v4253
        %v4329 = vpack.c.bf16 %v4260, %v4258
        %v4330 = vpack.c.bf16 %v4265, %v4263
        %v4331 = vpack.c.bf16 %v4270, %v4268
        %v4332 = vpack.c.bf16 %v4275, %v4273
        %v4333 = vpack.c.bf16 %v4280, %v4278
        %v4334 = vpack.c.bf16 %v4285, %v4283
        %v4335 = vpack.c.bf16 %v4290, %v4288
        %v4336 = vld [vmem:[%s2 + $0x80] sm:$0xf]
        %v4337 = vld [vmem:[%s2 + $0x84] sm:$0xf]
        %v4338 = vld [vmem:[%s2 + $0x88] sm:$0xf]
        %v4339 = vld [vmem:[%s2 + $0x8c] sm:$0xf]
        %v4340 = vld [vmem:[%s2 + $0x90] sm:$0xf]
        %v4341 = vld [vmem:[%s2 + $0x94] sm:$0xf]
        %v4342 = vld [vmem:[%s2 + $0x98] sm:$0xf]
        %v4343 = vld [vmem:[%s2 + $0x9c] sm:$0xf]
        %v4344 = vld [vmem:[%s2 + $0xa0] sm:$0xf]
        %v4345 = vld [vmem:[%s2 + $0xa4] sm:$0xf]
        %v4346 = vld [vmem:[%s2 + $0xa8] sm:$0xf]
        %v4347 = vld [vmem:[%s2 + $0xac] sm:$0xf]
        %v4348 = vld [vmem:[%s2 + $0xb0] sm:$0xf]
        %v4349 = vld [vmem:[%s2 + $0xb4] sm:$0xf]
        %v4350 = vld [vmem:[%s2 + $0xb8] sm:$0xf]
        %v4351 = vld [vmem:[%s2 + $0xbc] sm:$0xf]
        %v4368 = vunpack.c.l.b16 %v4336
        %v4369 = vunpack.c.l.b16 %v4337
        %v4370 = vunpack.c.l.b16 %v4338
        %v4371 = vunpack.c.l.b16 %v4339
        %v4372 = vunpack.c.l.b16 %v4340
        %v4373 = vunpack.c.l.b16 %v4341
        %v4374 = vunpack.c.l.b16 %v4342
        %v4375 = vunpack.c.l.b16 %v4343
        %v4376 = vunpack.c.l.b16 %v4344
        %v4377 = vunpack.c.l.b16 %v4345
        %v4378 = vunpack.c.l.b16 %v4346
        %v4379 = vunpack.c.l.b16 %v4347
        %v4380 = vunpack.c.l.b16 %v4348
        %v4381 = vunpack.c.l.b16 %v4349
        %v4382 = vunpack.c.l.b16 %v4350
        %v4383 = vunpack.c.l.b16 %v4351
        %v4384 = vpack.c.b16 %v4369, %v4368
        %v4385 = vpack.c.b16 %v4371, %v4370
        %v4386 = vpack.c.b16 %v4373, %v4372
        %v4387 = vpack.c.b16 %v4375, %v4374
        %v4388 = vpack.c.b16 %v4377, %v4376
        %v4389 = vpack.c.b16 %v4379, %v4378
        %v4390 = vpack.c.b16 %v4381, %v4380
        %v4391 = vpack.c.b16 %v4383, %v4382
        %4400 = vmatprep.subr.bf16.mxu0 0
        %4401 = vmatpush1.bf16.msra.mxu0 %v4391
        %4402 = vmatprep.subr.bf16.mxu0 0
        %4403 = vmatpush1.bf16.msra.mxu0 %v4390
        %4404 = vmatprep.subr.bf16.mxu0 0
        %4405 = vmatpush1.bf16.msra.mxu0 %v4389
        %4406 = vmatprep.subr.bf16.mxu0 0
        %4407 = vmatpush1.bf16.msra.mxu0 %v4388
        %4408 = vmatprep.subr.bf16.mxu0 0
        %4409 = vmatpush1.bf16.msra.mxu0 %v4387
        %4410 = vmatprep.subr.bf16.mxu0 0
        %4411 = vmatpush1.bf16.msra.mxu0 %v4386
        %4412 = vmatprep.subr.bf16.mxu0 0
        %4413 = vmatpush1.bf16.msra.mxu0 %v4385
        %4414 = vmatprep.subr.bf16.mxu0 0
        %4415 = vmatpush1.bf16.msra.mxu0 %v4384
        %4416 = vmatprep.subr.bf16.mxu0 0
        %4417 = vmatpush2.bf16.msra.mxu0 0
        %4418 = vmatprep.subr.bf16.mxu0 0
        %4419 = vmatpush2.bf16.msra.mxu0 0
        %4420 = vmatprep.subr.bf16.mxu0 0
        %4421 = vmatpush2.bf16.msra.mxu0 0
        %4422 = vmatprep.subr.bf16.mxu0 0
        %4423 = vmatpush2.bf16.msra.mxu0 0
        %4424 = vmatprep.subr.bf16.mxu0 0
        %4425 = vmatpush2.bf16.msra.mxu0 0
        %4426 = vmatprep.subr.bf16.mxu0 0
        %4427 = vmatpush2.bf16.msra.mxu0 0
        %4428 = vmatprep.subr.bf16.mxu0 0
        %4429 = vmatpush2.bf16.msra.mxu0 0
        %4430 = vmatprep.subr.bf16.mxu0 0
        %4431 = vmatpush2.bf16.msra.mxu0 0
        %4432 = vmatprep.mubr.bf16.mxu0 0
        %4433 = vmatmul.mubr.bf16.gmra.mxu0 %v4321
        %v4434 = vpop.f32.mrf.mxu0
        %v4435 = vadd.f32 0.0, %v4434
        %v4436 = vpop.f32.mrf.mxu0
        %v4437 = vpop.f32.mrf.mxu0
        %v4438 = vadd.f32 0.0, %v4437
        %v4439 = vpop.f32.mrf.mxu0
        %4440 = vmatprep.mubr.bf16.mxu0 0
        %4441 = vmatmul.mubr.bf16.gmra.mxu0 %v4322
        %v4442 = vpop.f32.mrf.mxu0
        %v4443 = vadd.f32 0.0, %v4442
        %v4444 = vpop.f32.mrf.mxu0
        %v4445 = vpop.f32.mrf.mxu0
        %v4446 = vadd.f32 0.0, %v4445
        %v4447 = vpop.f32.mrf.mxu0
        %4448 = vmatprep.mubr.bf16.mxu0 0
        %4449 = vmatmul.mubr.bf16.gmra.mxu0 %v4321
        %v4450 = vpop.f32.mrf.mxu0
        %v4451 = vadd.f32 0.0, %v4450
        %v4452 = vpop.f32.mrf.mxu0
        %v4453 = vpop.f32.mrf.mxu0
        %v4454 = vadd.f32 0.0, %v4453
        %v4455 = vpop.f32.mrf.mxu0
        %4456 = vmatprep.mubr.bf16.mxu0 0
        %4457 = vmatmul.mubr.bf16.gmra.mxu0 %v4323
        %v4458 = vpop.f32.mrf.mxu0
        %v4459 = vadd.f32 0.0, %v4458
        %v4460 = vpop.f32.mrf.mxu0
        %v4461 = vpop.f32.mrf.mxu0
        %v4462 = vadd.f32 0.0, %v4461
        %v4463 = vpop.f32.mrf.mxu0
        %4464 = vmatprep.mubr.bf16.mxu0 0
        %4465 = vmatmul.mubr.bf16.gmra.mxu0 %v4324
        %v4466 = vpop.f32.mrf.mxu0
        %v4467 = vadd.f32 0.0, %v4466
        %v4468 = vpop.f32.mrf.mxu0
        %v4469 = vpop.f32.mrf.mxu0
        %v4470 = vadd.f32 0.0, %v4469
        %v4471 = vpop.f32.mrf.mxu0
        %4472 = vmatprep.mubr.bf16.mxu0 0
        %4473 = vmatmul.mubr.bf16.gmra.mxu0 %v4325
        %v4474 = vpop.f32.mrf.mxu0
        %v4475 = vadd.f32 0.0, %v4474
        %v4476 = vpop.f32.mrf.mxu0
        %v4477 = vpop.f32.mrf.mxu0
        %v4478 = vadd.f32 0.0, %v4477
        %v4479 = vpop.f32.mrf.mxu0
        %4480 = vmatprep.mubr.bf16.mxu0 0
        %4481 = vmatmul.mubr.bf16.gmra.mxu0 %v4326
        %v4482 = vpop.f32.mrf.mxu0
        %v4483 = vadd.f32 0.0, %v4482
        %v4484 = vpop.f32.mrf.mxu0
        %v4485 = vpop.f32.mrf.mxu0
        %v4486 = vadd.f32 0.0, %v4485
        %v4487 = vpop.f32.mrf.mxu0
        %4488 = vmatprep.mubr.bf16.mxu0 0
        %4489 = vmatmul.mubr.bf16.gmra.mxu0 %v4327
        %v4490 = vpop.f32.mrf.mxu0
        %v4491 = vadd.f32 0.0, %v4490
        %v4492 = vpop.f32.mrf.mxu0
        %v4493 = vpop.f32.mrf.mxu0
        %v4494 = vadd.f32 0.0, %v4493
        %v4495 = vpop.f32.mrf.mxu0
        %4496 = vmatprep.mubr.bf16.mxu0 0
        %4497 = vmatmul.mubr.bf16.gmra.mxu0 %v4328
        %v4498 = vpop.f32.mrf.mxu0
        %v4499 = vadd.f32 0.0, %v4498
        %v4500 = vpop.f32.mrf.mxu0
        %v4501 = vpop.f32.mrf.mxu0
        %v4502 = vadd.f32 0.0, %v4501
        %v4503 = vpop.f32.mrf.mxu0
        %4504 = vmatprep.mubr.bf16.mxu0 0
        %4505 = vmatmul.mubr.bf16.gmra.mxu0 %v4329
        %v4506 = vpop.f32.mrf.mxu0
        %v4507 = vadd.f32 0.0, %v4506
        %v4508 = vpop.f32.mrf.mxu0
        %v4509 = vpop.f32.mrf.mxu0
        %v4510 = vadd.f32 0.0, %v4509
        %v4511 = vpop.f32.mrf.mxu0
        %4512 = vmatprep.mubr.bf16.mxu0 0
        %4513 = vmatmul.mubr.bf16.gmra.mxu0 %v4330
        %v4514 = vpop.f32.mrf.mxu0
        %v4515 = vadd.f32 0.0, %v4514
        %v4516 = vpop.f32.mrf.mxu0
        %v4517 = vpop.f32.mrf.mxu0
        %v4518 = vadd.f32 0.0, %v4517
        %v4519 = vpop.f32.mrf.mxu0
        %4520 = vmatprep.mubr.bf16.mxu0 0
        %4521 = vmatmul.mubr.bf16.gmra.mxu0 %v4331
        %v4522 = vpop.f32.mrf.mxu0
        %v4523 = vadd.f32 0.0, %v4522
        %v4524 = vpop.f32.mrf.mxu0
        %v4525 = vpop.f32.mrf.mxu0
        %v4526 = vadd.f32 0.0, %v4525
        %v4527 = vpop.f32.mrf.mxu0
        %4528 = vmatprep.mubr.bf16.mxu0 0
        %4529 = vmatmul.mubr.bf16.gmra.mxu0 %v4332
        %v4530 = vpop.f32.mrf.mxu0
        %v4531 = vadd.f32 0.0, %v4530
        %v4532 = vpop.f32.mrf.mxu0
        %v4533 = vpop.f32.mrf.mxu0
        %v4534 = vadd.f32 0.0, %v4533
        %v4535 = vpop.f32.mrf.mxu0
        %4536 = vmatprep.mubr.bf16.mxu0 0
        %4537 = vmatmul.mubr.bf16.gmra.mxu0 %v4333
        %v4538 = vpop.f32.mrf.mxu0
        %v4539 = vadd.f32 0.0, %v4538
        %v4540 = vpop.f32.mrf.mxu0
        %v4541 = vpop.f32.mrf.mxu0
        %v4542 = vadd.f32 0.0, %v4541
        %v4543 = vpop.f32.mrf.mxu0
        %4544 = vmatprep.mubr.bf16.mxu0 0
        %4545 = vmatmul.mubr.bf16.gmra.mxu0 %v4334
        %v4546 = vpop.f32.mrf.mxu0
        %v4547 = vadd.f32 0.0, %v4546
        %v4548 = vpop.f32.mrf.mxu0
        %v4549 = vpop.f32.mrf.mxu0
        %v4550 = vadd.f32 0.0, %v4549
        %v4551 = vpop.f32.mrf.mxu0
        %4552 = vmatprep.mubr.bf16.mxu0 0
        %4553 = vmatmul.mubr.bf16.gmra.mxu0 %v4335
        %v4554 = vpop.f32.mrf.mxu0
        %v4555 = vadd.f32 0.0, %v4554
        %v4556 = vpop.f32.mrf.mxu0
        %v4557 = vpop.f32.mrf.mxu0
        %v4558 = vadd.f32 0.0, %v4557
        %v4559 = vpop.f32.mrf.mxu0
        %4560 = vdwg.mxu0
        %v4561 = vadd.f32 %v4090, %v4435
        %v4562 = vadd.f32 %v4093, %v4438
        %v4563 = vadd.f32 %v4098, %v4443
        %v4564 = vadd.f32 %v4101, %v4446
        %v4565 = vadd.f32 %v4106, %v4451
        %v4566 = vadd.f32 %v4109, %v4454
        %v4567 = vadd.f32 %v4114, %v4459
        %v4568 = vadd.f32 %v4117, %v4462
        %v4569 = vadd.f32 %v4122, %v4467
        %v4570 = vadd.f32 %v4125, %v4470
        %v4571 = vadd.f32 %v4130, %v4475
        %v4572 = vadd.f32 %v4133, %v4478
        %v4573 = vadd.f32 %v4138, %v4483
        %v4574 = vadd.f32 %v4141, %v4486
        %v4575 = vadd.f32 %v4146, %v4491
        %v4576 = vadd.f32 %v4149, %v4494
        %v4577 = vadd.f32 %v4154, %v4499
        %v4578 = vadd.f32 %v4157, %v4502
        %v4579 = vadd.f32 %v4162, %v4507
        %v4580 = vadd.f32 %v4165, %v4510
        %v4581 = vadd.f32 %v4170, %v4515
        %v4582 = vadd.f32 %v4173, %v4518
        %v4583 = vadd.f32 %v4178, %v4523
        %v4584 = vadd.f32 %v4181, %v4526
        %v4585 = vadd.f32 %v4186, %v4531
        %v4586 = vadd.f32 %v4189, %v4534
        %v4587 = vadd.f32 %v4194, %v4539
        %v4588 = vadd.f32 %v4197, %v4542
        %v4589 = vadd.f32 %v4202, %v4547
        %v4590 = vadd.f32 %v4205, %v4550
        %v4591 = vadd.f32 %v4210, %v4555
        %v4592 = vadd.f32 %v4213, %v4558
        %v4593 = vpack.c.bf16 %v3488, %v3584
        %v4594 = vld [vmem:[%s2 + $0xc0] sm:$0xf]
        %v4595 = vld [vmem:[%s2 + $0xc4] sm:$0xf]
        %v4596 = vld [vmem:[%s2 + $0xc8] sm:$0xf]
        %v4597 = vld [vmem:[%s2 + $0xcc] sm:$0xf]
        %v4598 = vld [vmem:[%s2 + $0xd0] sm:$0xf]
        %v4599 = vld [vmem:[%s2 + $0xd4] sm:$0xf]
        %v4600 = vld [vmem:[%s2 + $0xd8] sm:$0xf]
        %v4601 = vld [vmem:[%s2 + $0xdc] sm:$0xf]
        %v4602 = vld [vmem:[%s2 + $0xe0] sm:$0xf]
        %v4603 = vld [vmem:[%s2 + $0xe4] sm:$0xf]
        %v4604 = vld [vmem:[%s2 + $0xe8] sm:$0xf]
        %v4605 = vld [vmem:[%s2 + $0xec] sm:$0xf]
        %v4606 = vld [vmem:[%s2 + $0xf0] sm:$0xf]
        %v4607 = vld [vmem:[%s2 + $0xf4] sm:$0xf]
        %v4608 = vld [vmem:[%s2 + $0xf8] sm:$0xf]
        %v4609 = vld [vmem:[%s2 + $0xfc] sm:$0xf]
        %v4626 = vunpack.c.l.b16 %v4594
        %v4627 = vunpack.c.l.b16 %v4595
        %v4628 = vunpack.c.l.b16 %v4596
        %v4629 = vunpack.c.l.b16 %v4597
        %v4630 = vunpack.c.l.b16 %v4598
        %v4631 = vunpack.c.l.b16 %v4599
        %v4632 = vunpack.c.l.b16 %v4600
        %v4633 = vunpack.c.l.b16 %v4601
        %v4634 = vunpack.c.l.b16 %v4602
        %v4635 = vunpack.c.l.b16 %v4603
        %v4636 = vunpack.c.l.b16 %v4604
        %v4637 = vunpack.c.l.b16 %v4605
        %v4638 = vunpack.c.l.b16 %v4606
        %v4639 = vunpack.c.l.b16 %v4607
        %v4640 = vunpack.c.l.b16 %v4608
        %v4641 = vunpack.c.l.b16 %v4609
        %v4642 = vpack.c.b16 %v4627, %v4626
        %v4643 = vpack.c.b16 %v4629, %v4628
        %v4644 = vpack.c.b16 %v4631, %v4630
        %v4645 = vpack.c.b16 %v4633, %v4632
        %v4646 = vpack.c.b16 %v4635, %v4634
        %v4647 = vpack.c.b16 %v4637, %v4636
        %v4648 = vpack.c.b16 %v4639, %v4638
        %v4649 = vpack.c.b16 %v4641, %v4640
        %4658 = vmatprep.subr.bf16.mxu0 0
        %4659 = vmatpush1.bf16.msra.mxu0 %v4649
        %4660 = vmatprep.subr.bf16.mxu0 0
        %4661 = vmatpush1.bf16.msra.mxu0 %v4648
        %4662 = vmatprep.subr.bf16.mxu0 0
        %4663 = vmatpush1.bf16.msra.mxu0 %v4647
        %4664 = vmatprep.subr.bf16.mxu0 0
        %4665 = vmatpush1.bf16.msra.mxu0 %v4646
        %4666 = vmatprep.subr.bf16.mxu0 0
        %4667 = vmatpush1.bf16.msra.mxu0 %v4645
        %4668 = vmatprep.subr.bf16.mxu0 0
        %4669 = vmatpush1.bf16.msra.mxu0 %v4644
        %4670 = vmatprep.subr.bf16.mxu0 0
        %4671 = vmatpush1.bf16.msra.mxu0 %v4643
        %4672 = vmatprep.subr.bf16.mxu0 0
        %4673 = vmatpush1.bf16.msra.mxu0 %v4642
        %4674 = vmatprep.subr.bf16.mxu0 0
        %4675 = vmatpush2.bf16.msra.mxu0 0
        %4676 = vmatprep.subr.bf16.mxu0 0
        %4677 = vmatpush2.bf16.msra.mxu0 0
        %4678 = vmatprep.subr.bf16.mxu0 0
        %4679 = vmatpush2.bf16.msra.mxu0 0
        %4680 = vmatprep.subr.bf16.mxu0 0
        %4681 = vmatpush2.bf16.msra.mxu0 0
        %4682 = vmatprep.subr.bf16.mxu0 0
        %4683 = vmatpush2.bf16.msra.mxu0 0
        %4684 = vmatprep.subr.bf16.mxu0 0
        %4685 = vmatpush2.bf16.msra.mxu0 0
        %4686 = vmatprep.subr.bf16.mxu0 0
        %4687 = vmatpush2.bf16.msra.mxu0 0
        %4688 = vmatprep.subr.bf16.mxu0 0
        %4689 = vmatpush2.bf16.msra.mxu0 0
        %4690 = vmatprep.mubr.bf16.mxu0 0
        %4691 = vmatmul.mubr.bf16.gmra.mxu0 %v3602
        %v4692 = vpop.f32.mrf.mxu0
        %v4693 = vadd.f32 0.0, %v4692
        %v4694 = vpop.f32.mrf.mxu0
        %v4695 = vpop.f32.mrf.mxu0
        %v4696 = vadd.f32 0.0, %v4695
        %v4697 = vpop.f32.mrf.mxu0
        %4698 = vmatprep.mubr.bf16.mxu0 0
        %4699 = vmatmul.mubr.bf16.gmra.mxu0 %v3601
        %v4700 = vpop.f32.mrf.mxu0
        %v4701 = vadd.f32 0.0, %v4700
        %v4702 = vpop.f32.mrf.mxu0
        %v4703 = vpop.f32.mrf.mxu0
        %v4704 = vadd.f32 0.0, %v4703
        %v4705 = vpop.f32.mrf.mxu0
        %4706 = vmatprep.mubr.bf16.mxu0 0
        %4707 = vmatmul.mubr.bf16.gmra.mxu0 %v3603
        %v4708 = vpop.f32.mrf.mxu0
        %v4709 = vadd.f32 0.0, %v4708
        %v4710 = vpop.f32.mrf.mxu0
        %v4711 = vpop.f32.mrf.mxu0
        %v4712 = vadd.f32 0.0, %v4711
        %v4713 = vpop.f32.mrf.mxu0
        %4714 = vmatprep.mubr.bf16.mxu0 0
        %4715 = vmatmul.mubr.bf16.gmra.mxu0 %v3604
        %v4716 = vpop.f32.mrf.mxu0
        %v4717 = vadd.f32 0.0, %v4716
        %v4718 = vpop.f32.mrf.mxu0
        %v4719 = vpop.f32.mrf.mxu0
        %v4720 = vadd.f32 0.0, %v4719
        %v4721 = vpop.f32.mrf.mxu0
        %4722 = vmatprep.mubr.bf16.mxu0 0
        %4723 = vmatmul.mubr.bf16.gmra.mxu0 %v3605
        %v4724 = vpop.f32.mrf.mxu0
        %v4725 = vadd.f32 0.0, %v4724
        %v4726 = vpop.f32.mrf.mxu0
        %v4727 = vpop.f32.mrf.mxu0
        %v4728 = vadd.f32 0.0, %v4727
        %v4729 = vpop.f32.mrf.mxu0
        %4730 = vmatprep.mubr.bf16.mxu0 0
        %4731 = vmatmul.mubr.bf16.gmra.mxu0 %v3606
        %v4732 = vpop.f32.mrf.mxu0
        %v4733 = vadd.f32 0.0, %v4732
        %v4734 = vpop.f32.mrf.mxu0
        %v4735 = vpop.f32.mrf.mxu0
        %v4736 = vadd.f32 0.0, %v4735
        %v4737 = vpop.f32.mrf.mxu0
        %4738 = vmatprep.mubr.bf16.mxu0 0
        %4739 = vmatmul.mubr.bf16.gmra.mxu0 %v3607
        %v4740 = vpop.f32.mrf.mxu0
        %v4741 = vadd.f32 0.0, %v4740
        %v4742 = vpop.f32.mrf.mxu0
        %v4743 = vpop.f32.mrf.mxu0
        %v4744 = vadd.f32 0.0, %v4743
        %v4745 = vpop.f32.mrf.mxu0
        %4746 = vmatprep.mubr.bf16.mxu0 0
        %4747 = vmatmul.mubr.bf16.gmra.mxu0 %v3608
        %v4748 = vpop.f32.mrf.mxu0
        %v4749 = vadd.f32 0.0, %v4748
        %v4750 = vpop.f32.mrf.mxu0
        %v4751 = vpop.f32.mrf.mxu0
        %v4752 = vadd.f32 0.0, %v4751
        %v4753 = vpop.f32.mrf.mxu0
        %4754 = vmatprep.mubr.bf16.mxu0 0
        %4755 = vmatmul.mubr.bf16.gmra.mxu0 %v3609
        %v4756 = vpop.f32.mrf.mxu0
        %v4757 = vadd.f32 0.0, %v4756
        %v4758 = vpop.f32.mrf.mxu0
        %v4759 = vpop.f32.mrf.mxu0
        %v4760 = vadd.f32 0.0, %v4759
        %v4761 = vpop.f32.mrf.mxu0
        %4762 = vmatprep.mubr.bf16.mxu0 0
        %4763 = vmatmul.mubr.bf16.gmra.mxu0 %v3610
        %v4764 = vpop.f32.mrf.mxu0
        %v4765 = vadd.f32 0.0, %v4764
        %v4766 = vpop.f32.mrf.mxu0
        %v4767 = vpop.f32.mrf.mxu0
        %v4768 = vadd.f32 0.0, %v4767
        %v4769 = vpop.f32.mrf.mxu0
        %4770 = vmatprep.mubr.bf16.mxu0 0
        %4771 = vmatmul.mubr.bf16.gmra.mxu0 %v3611
        %v4772 = vpop.f32.mrf.mxu0
        %v4773 = vadd.f32 0.0, %v4772
        %v4774 = vpop.f32.mrf.mxu0
        %v4775 = vpop.f32.mrf.mxu0
        %v4776 = vadd.f32 0.0, %v4775
        %v4777 = vpop.f32.mrf.mxu0
        %4778 = vmatprep.mubr.bf16.mxu0 0
        %4779 = vmatmul.mubr.bf16.gmra.mxu0 %v3612
        %v4780 = vpop.f32.mrf.mxu0
        %v4781 = vadd.f32 0.0, %v4780
        %v4782 = vpop.f32.mrf.mxu0
        %v4783 = vpop.f32.mrf.mxu0
        %v4784 = vadd.f32 0.0, %v4783
        %v4785 = vpop.f32.mrf.mxu0
        %4786 = vmatprep.mubr.bf16.mxu0 0
        %4787 = vmatmul.mubr.bf16.gmra.mxu0 %v3613
        %v4788 = vpop.f32.mrf.mxu0
        %v4789 = vadd.f32 0.0, %v4788
        %v4790 = vpop.f32.mrf.mxu0
        %v4791 = vpop.f32.mrf.mxu0
        %v4792 = vadd.f32 0.0, %v4791
        %v4793 = vpop.f32.mrf.mxu0
        %4794 = vmatprep.mubr.bf16.mxu0 0
        %4795 = vmatmul.mubr.bf16.gmra.mxu0 %v3614
        %v4796 = vpop.f32.mrf.mxu0
        %v4797 = vadd.f32 0.0, %v4796
        %v4798 = vpop.f32.mrf.mxu0
        %v4799 = vpop.f32.mrf.mxu0
        %v4800 = vadd.f32 0.0, %v4799
        %v4801 = vpop.f32.mrf.mxu0
        %4802 = vmatprep.mubr.bf16.mxu0 0
        %4803 = vmatmul.mubr.bf16.gmra.mxu0 %v3615
        %v4804 = vpop.f32.mrf.mxu0
        %v4805 = vadd.f32 0.0, %v4804
        %v4806 = vpop.f32.mrf.mxu0
        %v4807 = vpop.f32.mrf.mxu0
        %v4808 = vadd.f32 0.0, %v4807
        %v4809 = vpop.f32.mrf.mxu0
        %4810 = vmatprep.mubr.bf16.mxu0 0
        %4811 = vmatmul.mubr.bf16.gmra.mxu0 %v4593
        %v4812 = vpop.f32.mrf.mxu0
        %v4813 = vadd.f32 0.0, %v4812
        %v4814 = vpop.f32.mrf.mxu0
        %v4815 = vpop.f32.mrf.mxu0
        %v4816 = vadd.f32 0.0, %v4815
        %v4817 = vpop.f32.mrf.mxu0
        %4818 = vdwg.mxu0
        %v4819 = vadd.f32 %v4561, %v4693
        %v4820 = vadd.f32 %v4562, %v4696
        %v4821 = vadd.f32 %v4563, %v4701
        %v4822 = vadd.f32 %v4564, %v4704
        %v4823 = vadd.f32 %v4565, %v4709
        %v4824 = vadd.f32 %v4566, %v4712
        %v4825 = vadd.f32 %v4567, %v4717
        %v4826 = vadd.f32 %v4568, %v4720
        %v4827 = vadd.f32 %v4569, %v4725
        %v4828 = vadd.f32 %v4570, %v4728
        %v4829 = vadd.f32 %v4571, %v4733
        %v4830 = vadd.f32 %v4572, %v4736
        %v4831 = vadd.f32 %v4573, %v4741
        %v4832 = vadd.f32 %v4574, %v4744
        %v4833 = vadd.f32 %v4575, %v4749
        %v4834 = vadd.f32 %v4576, %v4752
        %v4835 = vadd.f32 %v4577, %v4757
        %v4836 = vadd.f32 %v4578, %v4760
        %v4837 = vadd.f32 %v4579, %v4765
        %v4838 = vadd.f32 %v4580, %v4768
        %v4839 = vadd.f32 %v4581, %v4773
        %v4840 = vadd.f32 %v4582, %v4776
        %v4841 = vadd.f32 %v4583, %v4781
        %v4842 = vadd.f32 %v4584, %v4784
        %v4843 = vadd.f32 %v4585, %v4789
        %v4844 = vadd.f32 %v4586, %v4792
        %v4845 = vadd.f32 %v4587, %v4797
        %v4846 = vadd.f32 %v4588, %v4800
        %v4847 = vadd.f32 %v4589, %v4805
        %v4848 = vadd.f32 %v4590, %v4808
        %v4849 = vadd.f32 %v4591, %v4813
        %v4850 = vadd.f32 %v4592, %v4816
        %v4853 = vrot.slane %v3584, 1
        %v4854 = vrot.slane %v3488, 1
        %v4855 = vsel %vm596, %v4853, %v4854
        %v4856 = vrot.slane %v3600, 1
        %v4857 = vsel %vm596, %v4854, %v4856
        %v4860 = vpack.c.bf16 %v4857, %v4855
        %v4861 = vld [vmem:[%s2 + $0x100] sm:$0xf]
        %v4862 = vld [vmem:[%s2 + $0x104] sm:$0xf]
        %v4863 = vld [vmem:[%s2 + $0x108] sm:$0xf]
        %v4864 = vld [vmem:[%s2 + $0x10c] sm:$0xf]
        %v4865 = vld [vmem:[%s2 + $0x110] sm:$0xf]
        %v4866 = vld [vmem:[%s2 + $0x114] sm:$0xf]
        %v4867 = vld [vmem:[%s2 + $0x118] sm:$0xf]
        %v4868 = vld [vmem:[%s2 + $0x11c] sm:$0xf]
        %v4869 = vld [vmem:[%s2 + $0x120] sm:$0xf]
        %v4870 = vld [vmem:[%s2 + $0x124] sm:$0xf]
        %v4871 = vld [vmem:[%s2 + $0x128] sm:$0xf]
        %v4872 = vld [vmem:[%s2 + $0x12c] sm:$0xf]
        %v4873 = vld [vmem:[%s2 + $0x130] sm:$0xf]
        %v4874 = vld [vmem:[%s2 + $0x134] sm:$0xf]
        %v4875 = vld [vmem:[%s2 + $0x138] sm:$0xf]
        %v4876 = vld [vmem:[%s2 + $0x13c] sm:$0xf]
        %v4893 = vunpack.c.l.b16 %v4861
        %v4894 = vunpack.c.l.b16 %v4862
        %v4895 = vunpack.c.l.b16 %v4863
        %v4896 = vunpack.c.l.b16 %v4864
        %v4897 = vunpack.c.l.b16 %v4865
        %v4898 = vunpack.c.l.b16 %v4866
        %v4899 = vunpack.c.l.b16 %v4867
        %v4900 = vunpack.c.l.b16 %v4868
        %v4901 = vunpack.c.l.b16 %v4869
        %v4902 = vunpack.c.l.b16 %v4870
        %v4903 = vunpack.c.l.b16 %v4871
        %v4904 = vunpack.c.l.b16 %v4872
        %v4905 = vunpack.c.l.b16 %v4873
        %v4906 = vunpack.c.l.b16 %v4874
        %v4907 = vunpack.c.l.b16 %v4875
        %v4908 = vunpack.c.l.b16 %v4876
        %v4909 = vpack.c.b16 %v4894, %v4893
        %v4910 = vpack.c.b16 %v4896, %v4895
        %v4911 = vpack.c.b16 %v4898, %v4897
        %v4912 = vpack.c.b16 %v4900, %v4899
        %v4913 = vpack.c.b16 %v4902, %v4901
        %v4914 = vpack.c.b16 %v4904, %v4903
        %v4915 = vpack.c.b16 %v4906, %v4905
        %v4916 = vpack.c.b16 %v4908, %v4907
        %4925 = vmatprep.subr.bf16.mxu0 0
        %4926 = vmatpush1.bf16.msra.mxu0 %v4916
        %4927 = vmatprep.subr.bf16.mxu0 0
        %4928 = vmatpush1.bf16.msra.mxu0 %v4915
        %4929 = vmatprep.subr.bf16.mxu0 0
        %4930 = vmatpush1.bf16.msra.mxu0 %v4914
        %4931 = vmatprep.subr.bf16.mxu0 0
        %4932 = vmatpush1.bf16.msra.mxu0 %v4913
        %4933 = vmatprep.subr.bf16.mxu0 0
        %4934 = vmatpush1.bf16.msra.mxu0 %v4912
        %4935 = vmatprep.subr.bf16.mxu0 0
        %4936 = vmatpush1.bf16.msra.mxu0 %v4911
        %4937 = vmatprep.subr.bf16.mxu0 0
        %4938 = vmatpush1.bf16.msra.mxu0 %v4910
        %4939 = vmatprep.subr.bf16.mxu0 0
        %4940 = vmatpush1.bf16.msra.mxu0 %v4909
        %4941 = vmatprep.subr.bf16.mxu0 0
        %4942 = vmatpush2.bf16.msra.mxu0 0
        %4943 = vmatprep.subr.bf16.mxu0 0
        %4944 = vmatpush2.bf16.msra.mxu0 0
        %4945 = vmatprep.subr.bf16.mxu0 0
        %4946 = vmatpush2.bf16.msra.mxu0 0
        %4947 = vmatprep.subr.bf16.mxu0 0
        %4948 = vmatpush2.bf16.msra.mxu0 0
        %4949 = vmatprep.subr.bf16.mxu0 0
        %4950 = vmatpush2.bf16.msra.mxu0 0
        %4951 = vmatprep.subr.bf16.mxu0 0
        %4952 = vmatpush2.bf16.msra.mxu0 0
        %4953 = vmatprep.subr.bf16.mxu0 0
        %4954 = vmatpush2.bf16.msra.mxu0 0
        %4955 = vmatprep.subr.bf16.mxu0 0
        %4956 = vmatpush2.bf16.msra.mxu0 0
        %4957 = vmatprep.mubr.bf16.mxu0 0
        %4958 = vmatmul.mubr.bf16.gmra.mxu0 %v3768
        %v4959 = vpop.f32.mrf.mxu0
        %v4960 = vadd.f32 0.0, %v4959
        %v4961 = vpop.f32.mrf.mxu0
        %v4962 = vpop.f32.mrf.mxu0
        %v4963 = vadd.f32 0.0, %v4962
        %v4964 = vpop.f32.mrf.mxu0
        %4965 = vmatprep.mubr.bf16.mxu0 0
        %4966 = vmatmul.mubr.bf16.gmra.mxu0 %v3767
        %v4967 = vpop.f32.mrf.mxu0
        %v4968 = vadd.f32 0.0, %v4967
        %v4969 = vpop.f32.mrf.mxu0
        %v4970 = vpop.f32.mrf.mxu0
        %v4971 = vadd.f32 0.0, %v4970
        %v4972 = vpop.f32.mrf.mxu0
        %4973 = vmatprep.mubr.bf16.mxu0 0
        %4974 = vmatmul.mubr.bf16.gmra.mxu0 %v3769
        %v4975 = vpop.f32.mrf.mxu0
        %v4976 = vadd.f32 0.0, %v4975
        %v4977 = vpop.f32.mrf.mxu0
        %v4978 = vpop.f32.mrf.mxu0
        %v4979 = vadd.f32 0.0, %v4978
        %v4980 = vpop.f32.mrf.mxu0
        %4981 = vmatprep.mubr.bf16.mxu0 0
        %4982 = vmatmul.mubr.bf16.gmra.mxu0 %v3770
        %v4983 = vpop.f32.mrf.mxu0
        %v4984 = vadd.f32 0.0, %v4983
        %v4985 = vpop.f32.mrf.mxu0
        %v4986 = vpop.f32.mrf.mxu0
        %v4987 = vadd.f32 0.0, %v4986
        %v4988 = vpop.f32.mrf.mxu0
        %4989 = vmatprep.mubr.bf16.mxu0 0
        %4990 = vmatmul.mubr.bf16.gmra.mxu0 %v3771
        %v4991 = vpop.f32.mrf.mxu0
        %v4992 = vadd.f32 0.0, %v4991
        %v4993 = vpop.f32.mrf.mxu0
        %v4994 = vpop.f32.mrf.mxu0
        %v4995 = vadd.f32 0.0, %v4994
        %v4996 = vpop.f32.mrf.mxu0
        %4997 = vmatprep.mubr.bf16.mxu0 0
        %4998 = vmatmul.mubr.bf16.gmra.mxu0 %v3772
        %v4999 = vpop.f32.mrf.mxu0
        %v5000 = vadd.f32 0.0, %v4999
        %v5001 = vpop.f32.mrf.mxu0
        %v5002 = vpop.f32.mrf.mxu0
        %v5003 = vadd.f32 0.0, %v5002
        %v5004 = vpop.f32.mrf.mxu0
        %5005 = vmatprep.mubr.bf16.mxu0 0
        %5006 = vmatmul.mubr.bf16.gmra.mxu0 %v3773
        %v5007 = vpop.f32.mrf.mxu0
        %v5008 = vadd.f32 0.0, %v5007
        %v5009 = vpop.f32.mrf.mxu0
        %v5010 = vpop.f32.mrf.mxu0
        %v5011 = vadd.f32 0.0, %v5010
        %v5012 = vpop.f32.mrf.mxu0
        %5013 = vmatprep.mubr.bf16.mxu0 0
        %5014 = vmatmul.mubr.bf16.gmra.mxu0 %v3774
        %v5015 = vpop.f32.mrf.mxu0
        %v5016 = vadd.f32 0.0, %v5015
        %v5017 = vpop.f32.mrf.mxu0
        %v5018 = vpop.f32.mrf.mxu0
        %v5019 = vadd.f32 0.0, %v5018
        %v5020 = vpop.f32.mrf.mxu0
        %5021 = vmatprep.mubr.bf16.mxu0 0
        %5022 = vmatmul.mubr.bf16.gmra.mxu0 %v3775
        %v5023 = vpop.f32.mrf.mxu0
        %v5024 = vadd.f32 0.0, %v5023
        %v5025 = vpop.f32.mrf.mxu0
        %v5026 = vpop.f32.mrf.mxu0
        %v5027 = vadd.f32 0.0, %v5026
        %v5028 = vpop.f32.mrf.mxu0
        %5029 = vmatprep.mubr.bf16.mxu0 0
        %5030 = vmatmul.mubr.bf16.gmra.mxu0 %v3776
        %v5031 = vpop.f32.mrf.mxu0
        %v5032 = vadd.f32 0.0, %v5031
        %v5033 = vpop.f32.mrf.mxu0
        %v5034 = vpop.f32.mrf.mxu0
        %v5035 = vadd.f32 0.0, %v5034
        %v5036 = vpop.f32.mrf.mxu0
        %5037 = vmatprep.mubr.bf16.mxu0 0
        %5038 = vmatmul.mubr.bf16.gmra.mxu0 %v3777
        %v5039 = vpop.f32.mrf.mxu0
        %v5040 = vadd.f32 0.0, %v5039
        %v5041 = vpop.f32.mrf.mxu0
        %v5042 = vpop.f32.mrf.mxu0
        %v5043 = vadd.f32 0.0, %v5042
        %v5044 = vpop.f32.mrf.mxu0
        %5045 = vmatprep.mubr.bf16.mxu0 0
        %5046 = vmatmul.mubr.bf16.gmra.mxu0 %v3778
        %v5047 = vpop.f32.mrf.mxu0
        %v5048 = vadd.f32 0.0, %v5047
        %v5049 = vpop.f32.mrf.mxu0
        %v5050 = vpop.f32.mrf.mxu0
        %v5051 = vadd.f32 0.0, %v5050
        %v5052 = vpop.f32.mrf.mxu0
        %5053 = vmatprep.mubr.bf16.mxu0 0
        %5054 = vmatmul.mubr.bf16.gmra.mxu0 %v3779
        %v5055 = vpop.f32.mrf.mxu0
        %v5056 = vadd.f32 0.0, %v5055
        %v5057 = vpop.f32.mrf.mxu0
        %v5058 = vpop.f32.mrf.mxu0
        %v5059 = vadd.f32 0.0, %v5058
        %v5060 = vpop.f32.mrf.mxu0
        %5061 = vmatprep.mubr.bf16.mxu0 0
        %5062 = vmatmul.mubr.bf16.gmra.mxu0 %v3780
        %v5063 = vpop.f32.mrf.mxu0
        %v5064 = vadd.f32 0.0, %v5063
        %v5065 = vpop.f32.mrf.mxu0
        %v5066 = vpop.f32.mrf.mxu0
        %v5067 = vadd.f32 0.0, %v5066
        %v5068 = vpop.f32.mrf.mxu0
        %5069 = vmatprep.mubr.bf16.mxu0 0
        %5070 = vmatmul.mubr.bf16.gmra.mxu0 %v3781
        %v5071 = vpop.f32.mrf.mxu0
        %v5072 = vadd.f32 0.0, %v5071
        %v5073 = vpop.f32.mrf.mxu0
        %v5074 = vpop.f32.mrf.mxu0
        %v5075 = vadd.f32 0.0, %v5074
        %v5076 = vpop.f32.mrf.mxu0
        %5077 = vmatprep.mubr.bf16.mxu0 0
        %5078 = vmatmul.mubr.bf16.gmra.mxu0 %v4860
        %v5079 = vpop.f32.mrf.mxu0
        %v5080 = vadd.f32 0.0, %v5079
        %v5081 = vpop.f32.mrf.mxu0
        %v5082 = vpop.f32.mrf.mxu0
        %v5083 = vadd.f32 0.0, %v5082
        %v5084 = vpop.f32.mrf.mxu0
        %5085 = vdwg.mxu0
        %v5086 = vadd.f32 %v4819, %v4960
        %v5087 = vadd.f32 %v4820, %v4963
        %v5088 = vadd.f32 %v4821, %v4968
        %v5089 = vadd.f32 %v4822, %v4971
        %v5090 = vadd.f32 %v4823, %v4976
        %v5091 = vadd.f32 %v4824, %v4979
        %v5092 = vadd.f32 %v4825, %v4984
        %v5093 = vadd.f32 %v4826, %v4987
        %v5094 = vadd.f32 %v4827, %v4992
        %v5095 = vadd.f32 %v4828, %v4995
        %v5096 = vadd.f32 %v4829, %v5000
        %v5097 = vadd.f32 %v4830, %v5003
        %v5098 = vadd.f32 %v4831, %v5008
        %v5099 = vadd.f32 %v4832, %v5011
        %v5100 = vadd.f32 %v4833, %v5016
        %v5101 = vadd.f32 %v4834, %v5019
        %v5102 = vadd.f32 %v4835, %v5024
        %v5103 = vadd.f32 %v4836, %v5027
        %v5104 = vadd.f32 %v4837, %v5032
        %v5105 = vadd.f32 %v4838, %v5035
        %v5106 = vadd.f32 %v4839, %v5040
        %v5107 = vadd.f32 %v4840, %v5043
        %v5108 = vadd.f32 %v4841, %v5048
        %v5109 = vadd.f32 %v4842, %v5051
        %v5110 = vadd.f32 %v4843, %v5056
        %v5111 = vadd.f32 %v4844, %v5059
        %v5112 = vadd.f32 %v4845, %v5064
        %v5113 = vadd.f32 %v4846, %v5067
        %v5114 = vadd.f32 %v4847, %v5072
        %v5115 = vadd.f32 %v4848, %v5075
        %v5116 = vadd.f32 %v4849, %v5080
        %v5117 = vadd.f32 %v4850, %v5083
        %v5118 = vrot.slane %v3584, 2
        %v5119 = vrot.slane %v3488, 2
        %v5120 = vsel %vm1151, %v5118, %v5119
        %v5121 = vrot.slane %v3600, 2
        %v5122 = vsel %vm1151, %v5119, %v5121
        %v5125 = vpack.c.bf16 %v5122, %v5120
        %v5126 = vld [vmem:[%s2 + $0x140] sm:$0xf]
        %v5127 = vld [vmem:[%s2 + $0x144] sm:$0xf]
        %v5128 = vld [vmem:[%s2 + $0x148] sm:$0xf]
        %v5129 = vld [vmem:[%s2 + $0x14c] sm:$0xf]
        %v5130 = vld [vmem:[%s2 + $0x150] sm:$0xf]
        %v5131 = vld [vmem:[%s2 + $0x154] sm:$0xf]
        %v5132 = vld [vmem:[%s2 + $0x158] sm:$0xf]
        %v5133 = vld [vmem:[%s2 + $0x15c] sm:$0xf]
        %v5134 = vld [vmem:[%s2 + $0x160] sm:$0xf]
        %v5135 = vld [vmem:[%s2 + $0x164] sm:$0xf]
        %v5136 = vld [vmem:[%s2 + $0x168] sm:$0xf]
        %v5137 = vld [vmem:[%s2 + $0x16c] sm:$0xf]
        %v5138 = vld [vmem:[%s2 + $0x170] sm:$0xf]
        %v5139 = vld [vmem:[%s2 + $0x174] sm:$0xf]
        %v5140 = vld [vmem:[%s2 + $0x178] sm:$0xf]
        %v5141 = vld [vmem:[%s2 + $0x17c] sm:$0xf]
        %v5158 = vunpack.c.l.b16 %v5126
        %v5159 = vunpack.c.l.b16 %v5127
        %v5160 = vunpack.c.l.b16 %v5128
        %v5161 = vunpack.c.l.b16 %v5129
        %v5162 = vunpack.c.l.b16 %v5130
        %v5163 = vunpack.c.l.b16 %v5131
        %v5164 = vunpack.c.l.b16 %v5132
        %v5165 = vunpack.c.l.b16 %v5133
        %v5166 = vunpack.c.l.b16 %v5134
        %v5167 = vunpack.c.l.b16 %v5135
        %v5168 = vunpack.c.l.b16 %v5136
        %v5169 = vunpack.c.l.b16 %v5137
        %v5170 = vunpack.c.l.b16 %v5138
        %v5171 = vunpack.c.l.b16 %v5139
        %v5172 = vunpack.c.l.b16 %v5140
        %v5173 = vunpack.c.l.b16 %v5141
        %v5174 = vpack.c.b16 %v5159, %v5158
        %v5175 = vpack.c.b16 %v5161, %v5160
        %v5176 = vpack.c.b16 %v5163, %v5162
        %v5177 = vpack.c.b16 %v5165, %v5164
        %v5178 = vpack.c.b16 %v5167, %v5166
        %v5179 = vpack.c.b16 %v5169, %v5168
        %v5180 = vpack.c.b16 %v5171, %v5170
        %v5181 = vpack.c.b16 %v5173, %v5172
        %5190 = vmatprep.subr.bf16.mxu0 0
        %5191 = vmatpush1.bf16.msra.mxu0 %v5181
        %5192 = vmatprep.subr.bf16.mxu0 0
        %5193 = vmatpush1.bf16.msra.mxu0 %v5180
        %5194 = vmatprep.subr.bf16.mxu0 0
        %5195 = vmatpush1.bf16.msra.mxu0 %v5179
        %5196 = vmatprep.subr.bf16.mxu0 0
        %5197 = vmatpush1.bf16.msra.mxu0 %v5178
        %5198 = vmatprep.subr.bf16.mxu0 0
        %5199 = vmatpush1.bf16.msra.mxu0 %v5177
        %5200 = vmatprep.subr.bf16.mxu0 0
        %5201 = vmatpush1.bf16.msra.mxu0 %v5176
        %5202 = vmatprep.subr.bf16.mxu0 0
        %5203 = vmatpush1.bf16.msra.mxu0 %v5175
        %5204 = vmatprep.subr.bf16.mxu0 0
        %5205 = vmatpush1.bf16.msra.mxu0 %v5174
        %5206 = vmatprep.subr.bf16.mxu0 0
        %5207 = vmatpush2.bf16.msra.mxu0 0
        %5208 = vmatprep.subr.bf16.mxu0 0
        %5209 = vmatpush2.bf16.msra.mxu0 0
        %5210 = vmatprep.subr.bf16.mxu0 0
        %5211 = vmatpush2.bf16.msra.mxu0 0
        %5212 = vmatprep.subr.bf16.mxu0 0
        %5213 = vmatpush2.bf16.msra.mxu0 0
        %5214 = vmatprep.subr.bf16.mxu0 0
        %5215 = vmatpush2.bf16.msra.mxu0 0
        %5216 = vmatprep.subr.bf16.mxu0 0
        %5217 = vmatpush2.bf16.msra.mxu0 0
        %5218 = vmatprep.subr.bf16.mxu0 0
        %5219 = vmatpush2.bf16.msra.mxu0 0
        %5220 = vmatprep.subr.bf16.mxu0 0
        %5221 = vmatpush2.bf16.msra.mxu0 0
        %5222 = vmatprep.mubr.bf16.mxu0 0
        %5223 = vmatmul.mubr.bf16.gmra.mxu0 %v4322
        %v5224 = vpop.f32.mrf.mxu0
        %v5225 = vadd.f32 0.0, %v5224
        %v5226 = vpop.f32.mrf.mxu0
        %v5227 = vpop.f32.mrf.mxu0
        %v5228 = vadd.f32 0.0, %v5227
        %v5229 = vpop.f32.mrf.mxu0
        %5230 = vmatprep.mubr.bf16.mxu0 0
        %5231 = vmatmul.mubr.bf16.gmra.mxu0 %v4321
        %v5232 = vpop.f32.mrf.mxu0
        %v5233 = vadd.f32 0.0, %v5232
        %v5234 = vpop.f32.mrf.mxu0
        %v5235 = vpop.f32.mrf.mxu0
        %v5236 = vadd.f32 0.0, %v5235
        %v5237 = vpop.f32.mrf.mxu0
        %5238 = vmatprep.mubr.bf16.mxu0 0
        %5239 = vmatmul.mubr.bf16.gmra.mxu0 %v4323
        %v5240 = vpop.f32.mrf.mxu0
        %v5241 = vadd.f32 0.0, %v5240
        %v5242 = vpop.f32.mrf.mxu0
        %v5243 = vpop.f32.mrf.mxu0
        %v5244 = vadd.f32 0.0, %v5243
        %v5245 = vpop.f32.mrf.mxu0
        %5246 = vmatprep.mubr.bf16.mxu0 0
        %5247 = vmatmul.mubr.bf16.gmra.mxu0 %v4324
        %v5248 = vpop.f32.mrf.mxu0
        %v5249 = vadd.f32 0.0, %v5248
        %v5250 = vpop.f32.mrf.mxu0
        %v5251 = vpop.f32.mrf.mxu0
        %v5252 = vadd.f32 0.0, %v5251
        %v5253 = vpop.f32.mrf.mxu0
        %5254 = vmatprep.mubr.bf16.mxu0 0
        %5255 = vmatmul.mubr.bf16.gmra.mxu0 %v4325
        %v5256 = vpop.f32.mrf.mxu0
        %v5257 = vadd.f32 0.0, %v5256
        %v5258 = vpop.f32.mrf.mxu0
        %v5259 = vpop.f32.mrf.mxu0
        %v5260 = vadd.f32 0.0, %v5259
        %v5261 = vpop.f32.mrf.mxu0
        %5262 = vmatprep.mubr.bf16.mxu0 0
        %5263 = vmatmul.mubr.bf16.gmra.mxu0 %v4326
        %v5264 = vpop.f32.mrf.mxu0
        %v5265 = vadd.f32 0.0, %v5264
        %v5266 = vpop.f32.mrf.mxu0
        %v5267 = vpop.f32.mrf.mxu0
        %v5268 = vadd.f32 0.0, %v5267
        %v5269 = vpop.f32.mrf.mxu0
        %5270 = vmatprep.mubr.bf16.mxu0 0
        %5271 = vmatmul.mubr.bf16.gmra.mxu0 %v4327
        %v5272 = vpop.f32.mrf.mxu0
        %v5273 = vadd.f32 0.0, %v5272
        %v5274 = vpop.f32.mrf.mxu0
        %v5275 = vpop.f32.mrf.mxu0
        %v5276 = vadd.f32 0.0, %v5275
        %v5277 = vpop.f32.mrf.mxu0
        %5278 = vmatprep.mubr.bf16.mxu0 0
        %5279 = vmatmul.mubr.bf16.gmra.mxu0 %v4328
        %v5280 = vpop.f32.mrf.mxu0
        %v5281 = vadd.f32 0.0, %v5280
        %v5282 = vpop.f32.mrf.mxu0
        %v5283 = vpop.f32.mrf.mxu0
        %v5284 = vadd.f32 0.0, %v5283
        %v5285 = vpop.f32.mrf.mxu0
        %5286 = vmatprep.mubr.bf16.mxu0 0
        %5287 = vmatmul.mubr.bf16.gmra.mxu0 %v4329
        %v5288 = vpop.f32.mrf.mxu0
        %v5289 = vadd.f32 0.0, %v5288
        %v5290 = vpop.f32.mrf.mxu0
        %v5291 = vpop.f32.mrf.mxu0
        %v5292 = vadd.f32 0.0, %v5291
        %v5293 = vpop.f32.mrf.mxu0
        %5294 = vmatprep.mubr.bf16.mxu0 0
        %5295 = vmatmul.mubr.bf16.gmra.mxu0 %v4330
        %v5296 = vpop.f32.mrf.mxu0
        %v5297 = vadd.f32 0.0, %v5296
        %v5298 = vpop.f32.mrf.mxu0
        %v5299 = vpop.f32.mrf.mxu0
        %v5300 = vadd.f32 0.0, %v5299
        %v5301 = vpop.f32.mrf.mxu0
        %5302 = vmatprep.mubr.bf16.mxu0 0
        %5303 = vmatmul.mubr.bf16.gmra.mxu0 %v4331
        %v5304 = vpop.f32.mrf.mxu0
        %v5305 = vadd.f32 0.0, %v5304
        %v5306 = vpop.f32.mrf.mxu0
        %v5307 = vpop.f32.mrf.mxu0
        %v5308 = vadd.f32 0.0, %v5307
        %v5309 = vpop.f32.mrf.mxu0
        %5310 = vmatprep.mubr.bf16.mxu0 0
        %5311 = vmatmul.mubr.bf16.gmra.mxu0 %v4332
        %v5312 = vpop.f32.mrf.mxu0
        %v5313 = vadd.f32 0.0, %v5312
        %v5314 = vpop.f32.mrf.mxu0
        %v5315 = vpop.f32.mrf.mxu0
        %v5316 = vadd.f32 0.0, %v5315
        %v5317 = vpop.f32.mrf.mxu0
        %5318 = vmatprep.mubr.bf16.mxu0 0
        %5319 = vmatmul.mubr.bf16.gmra.mxu0 %v4333
        %v5320 = vpop.f32.mrf.mxu0
        %v5321 = vadd.f32 0.0, %v5320
        %v5322 = vpop.f32.mrf.mxu0
        %v5323 = vpop.f32.mrf.mxu0
        %v5324 = vadd.f32 0.0, %v5323
        %v5325 = vpop.f32.mrf.mxu0
        %5326 = vmatprep.mubr.bf16.mxu0 0
        %5327 = vmatmul.mubr.bf16.gmra.mxu0 %v4334
        %v5328 = vpop.f32.mrf.mxu0
        %v5329 = vadd.f32 0.0, %v5328
        %v5330 = vpop.f32.mrf.mxu0
        %v5331 = vpop.f32.mrf.mxu0
        %v5332 = vadd.f32 0.0, %v5331
        %v5333 = vpop.f32.mrf.mxu0
        %5334 = vmatprep.mubr.bf16.mxu0 0
        %5335 = vmatmul.mubr.bf16.gmra.mxu0 %v4335
        %v5336 = vpop.f32.mrf.mxu0
        %v5337 = vadd.f32 0.0, %v5336
        %v5338 = vpop.f32.mrf.mxu0
        %v5339 = vpop.f32.mrf.mxu0
        %v5340 = vadd.f32 0.0, %v5339
        %v5341 = vpop.f32.mrf.mxu0
        %5342 = vmatprep.mubr.bf16.mxu0 0
        %5343 = vmatmul.mubr.bf16.gmra.mxu0 %v5125
        %v5344 = vpop.f32.mrf.mxu0
        %v5345 = vadd.f32 0.0, %v5344
        %v5346 = vpop.f32.mrf.mxu0
        %v5347 = vpop.f32.mrf.mxu0
        %v5348 = vadd.f32 0.0, %v5347
        %v5349 = vpop.f32.mrf.mxu0
        %5350 = vdwg.mxu0
        %v5351 = vadd.f32 %v5086, %v5225
        %v5352 = vadd.f32 %v5087, %v5228
        %v5353 = vadd.f32 %v5088, %v5233
        %v5354 = vadd.f32 %v5089, %v5236
        %v5355 = vadd.f32 %v5090, %v5241
        %v5356 = vadd.f32 %v5091, %v5244
        %v5357 = vadd.f32 %v5092, %v5249
        %v5358 = vadd.f32 %v5093, %v5252
        %v5359 = vadd.f32 %v5094, %v5257
        %v5360 = vadd.f32 %v5095, %v5260
        %v5361 = vadd.f32 %v5096, %v5265
        %v5362 = vadd.f32 %v5097, %v5268
        %v5363 = vadd.f32 %v5098, %v5273
        %v5364 = vadd.f32 %v5099, %v5276
        %v5365 = vadd.f32 %v5100, %v5281
        %v5366 = vadd.f32 %v5101, %v5284
        %v5367 = vadd.f32 %v5102, %v5289
        %v5368 = vadd.f32 %v5103, %v5292
        %v5369 = vadd.f32 %v5104, %v5297
        %v5370 = vadd.f32 %v5105, %v5300
        %v5371 = vadd.f32 %v5106, %v5305
        %v5372 = vadd.f32 %v5107, %v5308
        %v5373 = vadd.f32 %v5108, %v5313
        %v5374 = vadd.f32 %v5109, %v5316
        %v5375 = vadd.f32 %v5110, %v5321
        %v5376 = vadd.f32 %v5111, %v5324
        %v5377 = vadd.f32 %v5112, %v5329
        %v5378 = vadd.f32 %v5113, %v5332
        %v5379 = vadd.f32 %v5114, %v5337
        %v5380 = vadd.f32 %v5115, %v5340
        %v5381 = vadd.f32 %v5116, %v5345
        %v5382 = vadd.f32 %v5117, %v5348
        %v5383 = vld [vmem:[%s2 + $0x180] sm:$0xf]
        %v5384 = vld [vmem:[%s2 + $0x184] sm:$0xf]
        %v5385 = vld [vmem:[%s2 + $0x188] sm:$0xf]
        %v5386 = vld [vmem:[%s2 + $0x18c] sm:$0xf]
        %v5387 = vld [vmem:[%s2 + $0x190] sm:$0xf]
        %v5388 = vld [vmem:[%s2 + $0x194] sm:$0xf]
        %v5389 = vld [vmem:[%s2 + $0x198] sm:$0xf]
        %v5390 = vld [vmem:[%s2 + $0x19c] sm:$0xf]
        %v5391 = vld [vmem:[%s2 + $0x1a0] sm:$0xf]
        %v5392 = vld [vmem:[%s2 + $0x1a4] sm:$0xf]
        %v5393 = vld [vmem:[%s2 + $0x1a8] sm:$0xf]
        %v5394 = vld [vmem:[%s2 + $0x1ac] sm:$0xf]
        %v5395 = vld [vmem:[%s2 + $0x1b0] sm:$0xf]
        %v5396 = vld [vmem:[%s2 + $0x1b4] sm:$0xf]
        %v5397 = vld [vmem:[%s2 + $0x1b8] sm:$0xf]
        %v5398 = vld [vmem:[%s2 + $0x1bc] sm:$0xf]
        %v5415 = vunpack.c.l.b16 %v5383
        %v5416 = vunpack.c.l.b16 %v5384
        %v5417 = vunpack.c.l.b16 %v5385
        %v5418 = vunpack.c.l.b16 %v5386
        %v5419 = vunpack.c.l.b16 %v5387
        %v5420 = vunpack.c.l.b16 %v5388
        %v5421 = vunpack.c.l.b16 %v5389
        %v5422 = vunpack.c.l.b16 %v5390
        %v5423 = vunpack.c.l.b16 %v5391
        %v5424 = vunpack.c.l.b16 %v5392
        %v5425 = vunpack.c.l.b16 %v5393
        %v5426 = vunpack.c.l.b16 %v5394
        %v5427 = vunpack.c.l.b16 %v5395
        %v5428 = vunpack.c.l.b16 %v5396
        %v5429 = vunpack.c.l.b16 %v5397
        %v5430 = vunpack.c.l.b16 %v5398
        %v5431 = vpack.c.b16 %v5416, %v5415
        %v5432 = vpack.c.b16 %v5418, %v5417
        %v5433 = vpack.c.b16 %v5420, %v5419
        %v5434 = vpack.c.b16 %v5422, %v5421
        %v5435 = vpack.c.b16 %v5424, %v5423
        %v5436 = vpack.c.b16 %v5426, %v5425
        %v5437 = vpack.c.b16 %v5428, %v5427
        %v5438 = vpack.c.b16 %v5430, %v5429
        %5447 = vmatprep.subr.bf16.mxu0 0
        %5448 = vmatpush1.bf16.msra.mxu0 %v5438
        %5449 = vmatprep.subr.bf16.mxu0 0
        %5450 = vmatpush1.bf16.msra.mxu0 %v5437
        %5451 = vmatprep.subr.bf16.mxu0 0
        %5452 = vmatpush1.bf16.msra.mxu0 %v5436
        %5453 = vmatprep.subr.bf16.mxu0 0
        %5454 = vmatpush1.bf16.msra.mxu0 %v5435
        %5455 = vmatprep.subr.bf16.mxu0 0
        %5456 = vmatpush1.bf16.msra.mxu0 %v5434
        %5457 = vmatprep.subr.bf16.mxu0 0
        %5458 = vmatpush1.bf16.msra.mxu0 %v5433
        %5459 = vmatprep.subr.bf16.mxu0 0
        %5460 = vmatpush1.bf16.msra.mxu0 %v5432
        %5461 = vmatprep.subr.bf16.mxu0 0
        %5462 = vmatpush1.bf16.msra.mxu0 %v5431
        %5463 = vmatprep.subr.bf16.mxu0 0
        %5464 = vmatpush2.bf16.msra.mxu0 0
        %5465 = vmatprep.subr.bf16.mxu0 0
        %5466 = vmatpush2.bf16.msra.mxu0 0
        %5467 = vmatprep.subr.bf16.mxu0 0
        %5468 = vmatpush2.bf16.msra.mxu0 0
        %5469 = vmatprep.subr.bf16.mxu0 0
        %5470 = vmatpush2.bf16.msra.mxu0 0
        %5471 = vmatprep.subr.bf16.mxu0 0
        %5472 = vmatpush2.bf16.msra.mxu0 0
        %5473 = vmatprep.subr.bf16.mxu0 0
        %5474 = vmatpush2.bf16.msra.mxu0 0
        %5475 = vmatprep.subr.bf16.mxu0 0
        %5476 = vmatpush2.bf16.msra.mxu0 0
        %5477 = vmatprep.subr.bf16.mxu0 0
        %5478 = vmatpush2.bf16.msra.mxu0 0
        %5479 = vmatprep.mubr.bf16.mxu0 0
        %5480 = vmatmul.mubr.bf16.gmra.mxu0 %v3601
        %v5481 = vpop.f32.mrf.mxu0
        %v5482 = vadd.f32 0.0, %v5481
        %v5483 = vpop.f32.mrf.mxu0
        %v5484 = vpop.f32.mrf.mxu0
        %v5485 = vadd.f32 0.0, %v5484
        %v5486 = vpop.f32.mrf.mxu0
        %5487 = vmatprep.mubr.bf16.mxu0 0
        %5488 = vmatmul.mubr.bf16.gmra.mxu0 %v3603
        %v5489 = vpop.f32.mrf.mxu0
        %v5490 = vadd.f32 0.0, %v5489
        %v5491 = vpop.f32.mrf.mxu0
        %v5492 = vpop.f32.mrf.mxu0
        %v5493 = vadd.f32 0.0, %v5492
        %v5494 = vpop.f32.mrf.mxu0
        %5495 = vmatprep.mubr.bf16.mxu0 0
        %5496 = vmatmul.mubr.bf16.gmra.mxu0 %v3604
        %v5497 = vpop.f32.mrf.mxu0
        %v5498 = vadd.f32 0.0, %v5497
        %v5499 = vpop.f32.mrf.mxu0
        %v5500 = vpop.f32.mrf.mxu0
        %v5501 = vadd.f32 0.0, %v5500
        %v5502 = vpop.f32.mrf.mxu0
        %5503 = vmatprep.mubr.bf16.mxu0 0
        %5504 = vmatmul.mubr.bf16.gmra.mxu0 %v3605
        %v5505 = vpop.f32.mrf.mxu0
        %v5506 = vadd.f32 0.0, %v5505
        %v5507 = vpop.f32.mrf.mxu0
        %v5508 = vpop.f32.mrf.mxu0
        %v5509 = vadd.f32 0.0, %v5508
        %v5510 = vpop.f32.mrf.mxu0
        %5511 = vmatprep.mubr.bf16.mxu0 0
        %5512 = vmatmul.mubr.bf16.gmra.mxu0 %v3606
        %v5513 = vpop.f32.mrf.mxu0
        %v5514 = vadd.f32 0.0, %v5513
        %v5515 = vpop.f32.mrf.mxu0
        %v5516 = vpop.f32.mrf.mxu0
        %v5517 = vadd.f32 0.0, %v5516
        %v5518 = vpop.f32.mrf.mxu0
        %5519 = vmatprep.mubr.bf16.mxu0 0
        %5520 = vmatmul.mubr.bf16.gmra.mxu0 %v3607
        %v5521 = vpop.f32.mrf.mxu0
        %v5522 = vadd.f32 0.0, %v5521
        %v5523 = vpop.f32.mrf.mxu0
        %v5524 = vpop.f32.mrf.mxu0
        %v5525 = vadd.f32 0.0, %v5524
        %v5526 = vpop.f32.mrf.mxu0
        %5527 = vmatprep.mubr.bf16.mxu0 0
        %5528 = vmatmul.mubr.bf16.gmra.mxu0 %v3608
        %v5529 = vpop.f32.mrf.mxu0
        %v5530 = vadd.f32 0.0, %v5529
        %v5531 = vpop.f32.mrf.mxu0
        %v5532 = vpop.f32.mrf.mxu0
        %v5533 = vadd.f32 0.0, %v5532
        %v5534 = vpop.f32.mrf.mxu0
        %5535 = vmatprep.mubr.bf16.mxu0 0
        %5536 = vmatmul.mubr.bf16.gmra.mxu0 %v3609
        %v5537 = vpop.f32.mrf.mxu0
        %v5538 = vadd.f32 0.0, %v5537
        %v5539 = vpop.f32.mrf.mxu0
        %v5540 = vpop.f32.mrf.mxu0
        %v5541 = vadd.f32 0.0, %v5540
        %v5542 = vpop.f32.mrf.mxu0
        %5543 = vmatprep.mubr.bf16.mxu0 0
        %5544 = vmatmul.mubr.bf16.gmra.mxu0 %v3610
        %v5545 = vpop.f32.mrf.mxu0
        %v5546 = vadd.f32 0.0, %v5545
        %v5547 = vpop.f32.mrf.mxu0
        %v5548 = vpop.f32.mrf.mxu0
        %v5549 = vadd.f32 0.0, %v5548
        %v5550 = vpop.f32.mrf.mxu0
        %5551 = vmatprep.mubr.bf16.mxu0 0
        %5552 = vmatmul.mubr.bf16.gmra.mxu0 %v3611
        %v5553 = vpop.f32.mrf.mxu0
        %v5554 = vadd.f32 0.0, %v5553
        %v5555 = vpop.f32.mrf.mxu0
        %v5556 = vpop.f32.mrf.mxu0
        %v5557 = vadd.f32 0.0, %v5556
        %v5558 = vpop.f32.mrf.mxu0
        %5559 = vmatprep.mubr.bf16.mxu0 0
        %5560 = vmatmul.mubr.bf16.gmra.mxu0 %v3612
        %v5561 = vpop.f32.mrf.mxu0
        %v5562 = vadd.f32 0.0, %v5561
        %v5563 = vpop.f32.mrf.mxu0
        %v5564 = vpop.f32.mrf.mxu0
        %v5565 = vadd.f32 0.0, %v5564
        %v5566 = vpop.f32.mrf.mxu0
        %5567 = vmatprep.mubr.bf16.mxu0 0
        %5568 = vmatmul.mubr.bf16.gmra.mxu0 %v3613
        %v5569 = vpop.f32.mrf.mxu0
        %v5570 = vadd.f32 0.0, %v5569
        %v5571 = vpop.f32.mrf.mxu0
        %v5572 = vpop.f32.mrf.mxu0
        %v5573 = vadd.f32 0.0, %v5572
        %v5574 = vpop.f32.mrf.mxu0
        %5575 = vmatprep.mubr.bf16.mxu0 0
        %5576 = vmatmul.mubr.bf16.gmra.mxu0 %v3614
        %v5577 = vpop.f32.mrf.mxu0
        %v5578 = vadd.f32 0.0, %v5577
        %v5579 = vpop.f32.mrf.mxu0
        %v5580 = vpop.f32.mrf.mxu0
        %v5581 = vadd.f32 0.0, %v5580
        %v5582 = vpop.f32.mrf.mxu0
        %5583 = vmatprep.mubr.bf16.mxu0 0
        %5584 = vmatmul.mubr.bf16.gmra.mxu0 %v3615
        %v5585 = vpop.f32.mrf.mxu0
        %v5586 = vadd.f32 0.0, %v5585
        %v5587 = vpop.f32.mrf.mxu0
        %v5588 = vpop.f32.mrf.mxu0
        %v5589 = vadd.f32 0.0, %v5588
        %v5590 = vpop.f32.mrf.mxu0
        %5591 = vmatprep.mubr.bf16.mxu0 0
        %5592 = vmatmul.mubr.bf16.gmra.mxu0 %v4593
        %v5593 = vpop.f32.mrf.mxu0
        %v5594 = vadd.f32 0.0, %v5593
        %v5595 = vpop.f32.mrf.mxu0
        %v5596 = vpop.f32.mrf.mxu0
        %v5597 = vadd.f32 0.0, %v5596
        %v5598 = vpop.f32.mrf.mxu0
        %5599 = vmatprep.mubr.bf16.mxu0 0
        %5600 = vmatmul.mubr.bf16.gmra.mxu0 %v3615
        %v5601 = vpop.f32.mrf.mxu0
        %v5602 = vadd.f32 0.0, %v5601
        %v5603 = vpop.f32.mrf.mxu0
        %v5604 = vpop.f32.mrf.mxu0
        %v5605 = vadd.f32 0.0, %v5604
        %v5606 = vpop.f32.mrf.mxu0
        %5607 = vdwg.mxu0
        %v5608 = vadd.f32 %v5351, %v5482
        %v5609 = vadd.f32 %v5352, %v5485
        %v5610 = vadd.f32 %v5353, %v5490
        %v5611 = vadd.f32 %v5354, %v5493
        %v5612 = vadd.f32 %v5355, %v5498
        %v5613 = vadd.f32 %v5356, %v5501
        %v5614 = vadd.f32 %v5357, %v5506
        %v5615 = vadd.f32 %v5358, %v5509
        %v5616 = vadd.f32 %v5359, %v5514
        %v5617 = vadd.f32 %v5360, %v5517
        %v5618 = vadd.f32 %v5361, %v5522
        %v5619 = vadd.f32 %v5362, %v5525
        %v5620 = vadd.f32 %v5363, %v5530
        %v5621 = vadd.f32 %v5364, %v5533
        %v5622 = vadd.f32 %v5365, %v5538
        %v5623 = vadd.f32 %v5366, %v5541
        %v5624 = vadd.f32 %v5367, %v5546
        %v5625 = vadd.f32 %v5368, %v5549
        %v5626 = vadd.f32 %v5369, %v5554
        %v5627 = vadd.f32 %v5370, %v5557
        %v5628 = vadd.f32 %v5371, %v5562
        %v5629 = vadd.f32 %v5372, %v5565
        %v5630 = vadd.f32 %v5373, %v5570
        %v5631 = vadd.f32 %v5374, %v5573
        %v5632 = vadd.f32 %v5375, %v5578
        %v5633 = vadd.f32 %v5376, %v5581
        %v5634 = vadd.f32 %v5377, %v5586
        %v5635 = vadd.f32 %v5378, %v5589
        %v5636 = vadd.f32 %v5379, %v5594
        %v5637 = vadd.f32 %v5380, %v5597
        %v5638 = vadd.f32 %v5381, %v5602
        %v5639 = vadd.f32 %v5382, %v5605
        %v5640 = vld [vmem:[%s2 + $0x1c0] sm:$0xf]
        %v5641 = vld [vmem:[%s2 + $0x1c4] sm:$0xf]
        %v5642 = vld [vmem:[%s2 + $0x1c8] sm:$0xf]
        %v5643 = vld [vmem:[%s2 + $0x1cc] sm:$0xf]
        %v5644 = vld [vmem:[%s2 + $0x1d0] sm:$0xf]
        %v5645 = vld [vmem:[%s2 + $0x1d4] sm:$0xf]
        %v5646 = vld [vmem:[%s2 + $0x1d8] sm:$0xf]
        %v5647 = vld [vmem:[%s2 + $0x1dc] sm:$0xf]
        %v5648 = vld [vmem:[%s2 + $0x1e0] sm:$0xf]
        %v5649 = vld [vmem:[%s2 + $0x1e4] sm:$0xf]
        %v5650 = vld [vmem:[%s2 + $0x1e8] sm:$0xf]
        %v5651 = vld [vmem:[%s2 + $0x1ec] sm:$0xf]
        %v5652 = vld [vmem:[%s2 + $0x1f0] sm:$0xf]
        %v5653 = vld [vmem:[%s2 + $0x1f4] sm:$0xf]
        %v5654 = vld [vmem:[%s2 + $0x1f8] sm:$0xf]
        %v5655 = vld [vmem:[%s2 + $0x1fc] sm:$0xf]
        %v5672 = vunpack.c.l.b16 %v5640
        %v5673 = vunpack.c.l.b16 %v5641
        %v5674 = vunpack.c.l.b16 %v5642
        %v5675 = vunpack.c.l.b16 %v5643
        %v5676 = vunpack.c.l.b16 %v5644
        %v5677 = vunpack.c.l.b16 %v5645
        %v5678 = vunpack.c.l.b16 %v5646
        %v5679 = vunpack.c.l.b16 %v5647
        %v5680 = vunpack.c.l.b16 %v5648
        %v5681 = vunpack.c.l.b16 %v5649
        %v5682 = vunpack.c.l.b16 %v5650
        %v5683 = vunpack.c.l.b16 %v5651
        %v5684 = vunpack.c.l.b16 %v5652
        %v5685 = vunpack.c.l.b16 %v5653
        %v5686 = vunpack.c.l.b16 %v5654
        %v5687 = vunpack.c.l.b16 %v5655
        %v5688 = vpack.c.b16 %v5673, %v5672
        %v5689 = vpack.c.b16 %v5675, %v5674
        %v5690 = vpack.c.b16 %v5677, %v5676
        %v5691 = vpack.c.b16 %v5679, %v5678
        %v5692 = vpack.c.b16 %v5681, %v5680
        %v5693 = vpack.c.b16 %v5683, %v5682
        %v5694 = vpack.c.b16 %v5685, %v5684
        %v5695 = vpack.c.b16 %v5687, %v5686
        %5704 = vmatprep.subr.bf16.mxu0 0
        %5705 = vmatpush1.bf16.msra.mxu0 %v5695
        %5706 = vmatprep.subr.bf16.mxu0 0
        %5707 = vmatpush1.bf16.msra.mxu0 %v5694
        %5708 = vmatprep.subr.bf16.mxu0 0
        %5709 = vmatpush1.bf16.msra.mxu0 %v5693
        %5710 = vmatprep.subr.bf16.mxu0 0
        %5711 = vmatpush1.bf16.msra.mxu0 %v5692
        %5712 = vmatprep.subr.bf16.mxu0 0
        %5713 = vmatpush1.bf16.msra.mxu0 %v5691
        %5714 = vmatprep.subr.bf16.mxu0 0
        %5715 = vmatpush1.bf16.msra.mxu0 %v5690
        %5716 = vmatprep.subr.bf16.mxu0 0
        %5717 = vmatpush1.bf16.msra.mxu0 %v5689
        %5718 = vmatprep.subr.bf16.mxu0 0
        %5719 = vmatpush1.bf16.msra.mxu0 %v5688
        %5720 = vmatprep.subr.bf16.mxu0 0
        %5721 = vmatpush2.bf16.msra.mxu0 0
        %5722 = vmatprep.subr.bf16.mxu0 0
        %5723 = vmatpush2.bf16.msra.mxu0 0
        %5724 = vmatprep.subr.bf16.mxu0 0
        %5725 = vmatpush2.bf16.msra.mxu0 0
        %5726 = vmatprep.subr.bf16.mxu0 0
        %5727 = vmatpush2.bf16.msra.mxu0 0
        %5728 = vmatprep.subr.bf16.mxu0 0
        %5729 = vmatpush2.bf16.msra.mxu0 0
        %5730 = vmatprep.subr.bf16.mxu0 0
        %5731 = vmatpush2.bf16.msra.mxu0 0
        %5732 = vmatprep.subr.bf16.mxu0 0
        %5733 = vmatpush2.bf16.msra.mxu0 0
        %5734 = vmatprep.subr.bf16.mxu0 0
        %5735 = vmatpush2.bf16.msra.mxu0 0
        %5736 = vmatprep.mubr.bf16.mxu0 0
        %5737 = vmatmul.mubr.bf16.gmra.mxu0 %v3767
        %v5738 = vpop.f32.mrf.mxu0
        %v5739 = vadd.f32 0.0, %v5738
        %v5740 = vpop.f32.mrf.mxu0
        %v5741 = vpop.f32.mrf.mxu0
        %v5742 = vadd.f32 0.0, %v5741
        %v5743 = vpop.f32.mrf.mxu0
        %5744 = vmatprep.mubr.bf16.mxu0 0
        %5745 = vmatmul.mubr.bf16.gmra.mxu0 %v3769
        %v5746 = vpop.f32.mrf.mxu0
        %v5747 = vadd.f32 0.0, %v5746
        %v5748 = vpop.f32.mrf.mxu0
        %v5749 = vpop.f32.mrf.mxu0
        %v5750 = vadd.f32 0.0, %v5749
        %v5751 = vpop.f32.mrf.mxu0
        %5752 = vmatprep.mubr.bf16.mxu0 0
        %5753 = vmatmul.mubr.bf16.gmra.mxu0 %v3770
        %v5754 = vpop.f32.mrf.mxu0
        %v5755 = vadd.f32 0.0, %v5754
        %v5756 = vpop.f32.mrf.mxu0
        %v5757 = vpop.f32.mrf.mxu0
        %v5758 = vadd.f32 0.0, %v5757
        %v5759 = vpop.f32.mrf.mxu0
        %5760 = vmatprep.mubr.bf16.mxu0 0
        %5761 = vmatmul.mubr.bf16.gmra.mxu0 %v3771
        %v5762 = vpop.f32.mrf.mxu0
        %v5763 = vadd.f32 0.0, %v5762
        %v5764 = vpop.f32.mrf.mxu0
        %v5765 = vpop.f32.mrf.mxu0
        %v5766 = vadd.f32 0.0, %v5765
        %v5767 = vpop.f32.mrf.mxu0
        %5768 = vmatprep.mubr.bf16.mxu0 0
        %5769 = vmatmul.mubr.bf16.gmra.mxu0 %v3772
        %v5770 = vpop.f32.mrf.mxu0
        %v5771 = vadd.f32 0.0, %v5770
        %v5772 = vpop.f32.mrf.mxu0
        %v5773 = vpop.f32.mrf.mxu0
        %v5774 = vadd.f32 0.0, %v5773
        %v5775 = vpop.f32.mrf.mxu0
        %5776 = vmatprep.mubr.bf16.mxu0 0
        %5777 = vmatmul.mubr.bf16.gmra.mxu0 %v3773
        %v5778 = vpop.f32.mrf.mxu0
        %v5779 = vadd.f32 0.0, %v5778
        %v5780 = vpop.f32.mrf.mxu0
        %v5781 = vpop.f32.mrf.mxu0
        %v5782 = vadd.f32 0.0, %v5781
        %v5783 = vpop.f32.mrf.mxu0
        %5784 = vmatprep.mubr.bf16.mxu0 0
        %5785 = vmatmul.mubr.bf16.gmra.mxu0 %v3774
        %v5786 = vpop.f32.mrf.mxu0
        %v5787 = vadd.f32 0.0, %v5786
        %v5788 = vpop.f32.mrf.mxu0
        %v5789 = vpop.f32.mrf.mxu0
        %v5790 = vadd.f32 0.0, %v5789
        %v5791 = vpop.f32.mrf.mxu0
        %5792 = vmatprep.mubr.bf16.mxu0 0
        %5793 = vmatmul.mubr.bf16.gmra.mxu0 %v3775
        %v5794 = vpop.f32.mrf.mxu0
        %v5795 = vadd.f32 0.0, %v5794
        %v5796 = vpop.f32.mrf.mxu0
        %v5797 = vpop.f32.mrf.mxu0
        %v5798 = vadd.f32 0.0, %v5797
        %v5799 = vpop.f32.mrf.mxu0
        %5800 = vmatprep.mubr.bf16.mxu0 0
        %5801 = vmatmul.mubr.bf16.gmra.mxu0 %v3776
        %v5802 = vpop.f32.mrf.mxu0
        %v5803 = vadd.f32 0.0, %v5802
        %v5804 = vpop.f32.mrf.mxu0
        %v5805 = vpop.f32.mrf.mxu0
        %v5806 = vadd.f32 0.0, %v5805
        %v5807 = vpop.f32.mrf.mxu0
        %5808 = vmatprep.mubr.bf16.mxu0 0
        %5809 = vmatmul.mubr.bf16.gmra.mxu0 %v3777
        %v5810 = vpop.f32.mrf.mxu0
        %v5811 = vadd.f32 0.0, %v5810
        %v5812 = vpop.f32.mrf.mxu0
        %v5813 = vpop.f32.mrf.mxu0
        %v5814 = vadd.f32 0.0, %v5813
        %v5815 = vpop.f32.mrf.mxu0
        %5816 = vmatprep.mubr.bf16.mxu0 0
        %5817 = vmatmul.mubr.bf16.gmra.mxu0 %v3778
        %v5818 = vpop.f32.mrf.mxu0
        %v5819 = vadd.f32 0.0, %v5818
        %v5820 = vpop.f32.mrf.mxu0
        %v5821 = vpop.f32.mrf.mxu0
        %v5822 = vadd.f32 0.0, %v5821
        %v5823 = vpop.f32.mrf.mxu0
        %5824 = vmatprep.mubr.bf16.mxu0 0
        %5825 = vmatmul.mubr.bf16.gmra.mxu0 %v3779
        %v5826 = vpop.f32.mrf.mxu0
        %v5827 = vadd.f32 0.0, %v5826
        %v5828 = vpop.f32.mrf.mxu0
        %v5829 = vpop.f32.mrf.mxu0
        %v5830 = vadd.f32 0.0, %v5829
        %v5831 = vpop.f32.mrf.mxu0
        %5832 = vmatprep.mubr.bf16.mxu0 0
        %5833 = vmatmul.mubr.bf16.gmra.mxu0 %v3780
        %v5834 = vpop.f32.mrf.mxu0
        %v5835 = vadd.f32 0.0, %v5834
        %v5836 = vpop.f32.mrf.mxu0
        %v5837 = vpop.f32.mrf.mxu0
        %v5838 = vadd.f32 0.0, %v5837
        %v5839 = vpop.f32.mrf.mxu0
        %5840 = vmatprep.mubr.bf16.mxu0 0
        %5841 = vmatmul.mubr.bf16.gmra.mxu0 %v3781
        %v5842 = vpop.f32.mrf.mxu0
        %v5843 = vadd.f32 0.0, %v5842
        %v5844 = vpop.f32.mrf.mxu0
        %v5845 = vpop.f32.mrf.mxu0
        %v5846 = vadd.f32 0.0, %v5845
        %v5847 = vpop.f32.mrf.mxu0
        %5848 = vmatprep.mubr.bf16.mxu0 0
        %5849 = vmatmul.mubr.bf16.gmra.mxu0 %v4860
        %v5850 = vpop.f32.mrf.mxu0
        %v5851 = vadd.f32 0.0, %v5850
        %v5852 = vpop.f32.mrf.mxu0
        %v5853 = vpop.f32.mrf.mxu0
        %v5854 = vadd.f32 0.0, %v5853
        %v5855 = vpop.f32.mrf.mxu0
        %5856 = vmatprep.mubr.bf16.mxu0 0
        %5857 = vmatmul.mubr.bf16.gmra.mxu0 %v3781
        %v5858 = vpop.f32.mrf.mxu0
        %v5859 = vadd.f32 0.0, %v5858
        %v5860 = vpop.f32.mrf.mxu0
        %v5861 = vpop.f32.mrf.mxu0
        %v5862 = vadd.f32 0.0, %v5861
        %v5863 = vpop.f32.mrf.mxu0
        %5864 = vdwg.mxu0
        %v5865 = vadd.f32 %v5608, %v5739
        %v5866 = vadd.f32 %v5609, %v5742
        %v5867 = vadd.f32 %v5610, %v5747
        %v5868 = vadd.f32 %v5611, %v5750
        %v5869 = vadd.f32 %v5612, %v5755
        %v5870 = vadd.f32 %v5613, %v5758
        %v5871 = vadd.f32 %v5614, %v5763
        %v5872 = vadd.f32 %v5615, %v5766
        %v5873 = vadd.f32 %v5616, %v5771
        %v5874 = vadd.f32 %v5617, %v5774
        %v5875 = vadd.f32 %v5618, %v5779
        %v5876 = vadd.f32 %v5619, %v5782
        %v5877 = vadd.f32 %v5620, %v5787
        %v5878 = vadd.f32 %v5621, %v5790
        %v5879 = vadd.f32 %v5622, %v5795
        %v5880 = vadd.f32 %v5623, %v5798
        %v5881 = vadd.f32 %v5624, %v5803
        %v5882 = vadd.f32 %v5625, %v5806
        %v5883 = vadd.f32 %v5626, %v5811
        %v5884 = vadd.f32 %v5627, %v5814
        %v5885 = vadd.f32 %v5628, %v5819
        %v5886 = vadd.f32 %v5629, %v5822
        %v5887 = vadd.f32 %v5630, %v5827
        %v5888 = vadd.f32 %v5631, %v5830
        %v5889 = vadd.f32 %v5632, %v5835
        %v5890 = vadd.f32 %v5633, %v5838
        %v5891 = vadd.f32 %v5634, %v5843
        %v5892 = vadd.f32 %v5635, %v5846
        %v5893 = vadd.f32 %v5636, %v5851
        %v5894 = vadd.f32 %v5637, %v5854
        %v5895 = vadd.f32 %v5638, %v5859
        %v5896 = vadd.f32 %v5639, %v5862
        %v5897 = vld [vmem:[%s2 + $0x200] sm:$0xf]
        %v5898 = vld [vmem:[%s2 + $0x204] sm:$0xf]
        %v5899 = vld [vmem:[%s2 + $0x208] sm:$0xf]
        %v5900 = vld [vmem:[%s2 + $0x20c] sm:$0xf]
        %v5901 = vld [vmem:[%s2 + $0x210] sm:$0xf]
        %v5902 = vld [vmem:[%s2 + $0x214] sm:$0xf]
        %v5903 = vld [vmem:[%s2 + $0x218] sm:$0xf]
        %v5904 = vld [vmem:[%s2 + $0x21c] sm:$0xf]
        %v5905 = vld [vmem:[%s2 + $0x220] sm:$0xf]
        %v5906 = vld [vmem:[%s2 + $0x224] sm:$0xf]
        %v5907 = vld [vmem:[%s2 + $0x228] sm:$0xf]
        %v5908 = vld [vmem:[%s2 + $0x22c] sm:$0xf]
        %v5909 = vld [vmem:[%s2 + $0x230] sm:$0xf]
        %v5910 = vld [vmem:[%s2 + $0x234] sm:$0xf]
        %v5911 = vld [vmem:[%s2 + $0x238] sm:$0xf]
        %v5912 = vld [vmem:[%s2 + $0x23c] sm:$0xf]
        %v5929 = vunpack.c.l.b16 %v5897
        %v5930 = vunpack.c.l.b16 %v5898
        %v5931 = vunpack.c.l.b16 %v5899
        %v5932 = vunpack.c.l.b16 %v5900
        %v5933 = vunpack.c.l.b16 %v5901
        %v5934 = vunpack.c.l.b16 %v5902
        %v5935 = vunpack.c.l.b16 %v5903
        %v5936 = vunpack.c.l.b16 %v5904
        %v5937 = vunpack.c.l.b16 %v5905
        %v5938 = vunpack.c.l.b16 %v5906
        %v5939 = vunpack.c.l.b16 %v5907
        %v5940 = vunpack.c.l.b16 %v5908
        %v5941 = vunpack.c.l.b16 %v5909
        %v5942 = vunpack.c.l.b16 %v5910
        %v5943 = vunpack.c.l.b16 %v5911
        %v5944 = vunpack.c.l.b16 %v5912
        %v5945 = vpack.c.b16 %v5930, %v5929
        %v5946 = vpack.c.b16 %v5932, %v5931
        %v5947 = vpack.c.b16 %v5934, %v5933
        %v5948 = vpack.c.b16 %v5936, %v5935
        %v5949 = vpack.c.b16 %v5938, %v5937
        %v5950 = vpack.c.b16 %v5940, %v5939
        %v5951 = vpack.c.b16 %v5942, %v5941
        %v5952 = vpack.c.b16 %v5944, %v5943
        %5961 = vmatprep.subr.bf16.mxu0 0
        %5962 = vmatpush1.bf16.msra.mxu0 %v5952
        %5963 = vmatprep.subr.bf16.mxu0 0
        %5964 = vmatpush1.bf16.msra.mxu0 %v5951
        %5965 = vmatprep.subr.bf16.mxu0 0
        %5966 = vmatpush1.bf16.msra.mxu0 %v5950
        %5967 = vmatprep.subr.bf16.mxu0 0
        %5968 = vmatpush1.bf16.msra.mxu0 %v5949
        %5969 = vmatprep.subr.bf16.mxu0 0
        %5970 = vmatpush1.bf16.msra.mxu0 %v5948
        %5971 = vmatprep.subr.bf16.mxu0 0
        %5972 = vmatpush1.bf16.msra.mxu0 %v5947
        %5973 = vmatprep.subr.bf16.mxu0 0
        %5974 = vmatpush1.bf16.msra.mxu0 %v5946
        %5975 = vmatprep.subr.bf16.mxu0 0
        %5976 = vmatpush1.bf16.msra.mxu0 %v5945
        %5977 = vmatprep.subr.bf16.mxu0 0
        %5978 = vmatpush2.bf16.msra.mxu0 0
        %5979 = vmatprep.subr.bf16.mxu0 0
        %5980 = vmatpush2.bf16.msra.mxu0 0
        %5981 = vmatprep.subr.bf16.mxu0 0
        %5982 = vmatpush2.bf16.msra.mxu0 0
        %5983 = vmatprep.subr.bf16.mxu0 0
        %5984 = vmatpush2.bf16.msra.mxu0 0
        %5985 = vmatprep.subr.bf16.mxu0 0
        %5986 = vmatpush2.bf16.msra.mxu0 0
        %5987 = vmatprep.subr.bf16.mxu0 0
        %5988 = vmatpush2.bf16.msra.mxu0 0
        %5989 = vmatprep.subr.bf16.mxu0 0
        %5990 = vmatpush2.bf16.msra.mxu0 0
        %5991 = vmatprep.subr.bf16.mxu0 0
        %5992 = vmatpush2.bf16.msra.mxu0 0
        %5993 = vmatprep.mubr.bf16.mxu0 0
        %5994 = vmatmul.mubr.bf16.gmra.mxu0 %v4321
        %v5995 = vpop.f32.mrf.mxu0
        %v5996 = vadd.f32 0.0, %v5995
        %v5997 = vpop.f32.mrf.mxu0
        %v5998 = vpop.f32.mrf.mxu0
        %v5999 = vadd.f32 0.0, %v5998
        %v6000 = vpop.f32.mrf.mxu0
        %6001 = vmatprep.mubr.bf16.mxu0 0
        %6002 = vmatmul.mubr.bf16.gmra.mxu0 %v4323
        %v6003 = vpop.f32.mrf.mxu0
        %v6004 = vadd.f32 0.0, %v6003
        %v6005 = vpop.f32.mrf.mxu0
        %v6006 = vpop.f32.mrf.mxu0
        %v6007 = vadd.f32 0.0, %v6006
        %v6008 = vpop.f32.mrf.mxu0
        %6009 = vmatprep.mubr.bf16.mxu0 0
        %6010 = vmatmul.mubr.bf16.gmra.mxu0 %v4324
        %v6011 = vpop.f32.mrf.mxu0
        %v6012 = vadd.f32 0.0, %v6011
        %v6013 = vpop.f32.mrf.mxu0
        %v6014 = vpop.f32.mrf.mxu0
        %v6015 = vadd.f32 0.0, %v6014
        %v6016 = vpop.f32.mrf.mxu0
        %6017 = vmatprep.mubr.bf16.mxu0 0
        %6018 = vmatmul.mubr.bf16.gmra.mxu0 %v4325
        %v6019 = vpop.f32.mrf.mxu0
        %v6020 = vadd.f32 0.0, %v6019
        %v6021 = vpop.f32.mrf.mxu0
        %v6022 = vpop.f32.mrf.mxu0
        %v6023 = vadd.f32 0.0, %v6022
        %v6024 = vpop.f32.mrf.mxu0
        %6025 = vmatprep.mubr.bf16.mxu0 0
        %6026 = vmatmul.mubr.bf16.gmra.mxu0 %v4326
        %v6027 = vpop.f32.mrf.mxu0
        %v6028 = vadd.f32 0.0, %v6027
        %v6029 = vpop.f32.mrf.mxu0
        %v6030 = vpop.f32.mrf.mxu0
        %v6031 = vadd.f32 0.0, %v6030
        %v6032 = vpop.f32.mrf.mxu0
        %6033 = vmatprep.mubr.bf16.mxu0 0
        %6034 = vmatmul.mubr.bf16.gmra.mxu0 %v4327
        %v6035 = vpop.f32.mrf.mxu0
        %v6036 = vadd.f32 0.0, %v6035
        %v6037 = vpop.f32.mrf.mxu0
        %v6038 = vpop.f32.mrf.mxu0
        %v6039 = vadd.f32 0.0, %v6038
        %v6040 = vpop.f32.mrf.mxu0
        %6041 = vmatprep.mubr.bf16.mxu0 0
        %6042 = vmatmul.mubr.bf16.gmra.mxu0 %v4328
        %v6043 = vpop.f32.mrf.mxu0
        %v6044 = vadd.f32 0.0, %v6043
        %v6045 = vpop.f32.mrf.mxu0
        %v6046 = vpop.f32.mrf.mxu0
        %v6047 = vadd.f32 0.0, %v6046
        %v6048 = vpop.f32.mrf.mxu0
        %6049 = vmatprep.mubr.bf16.mxu0 0
        %6050 = vmatmul.mubr.bf16.gmra.mxu0 %v4329
        %v6051 = vpop.f32.mrf.mxu0
        %v6052 = vadd.f32 0.0, %v6051
        %v6053 = vpop.f32.mrf.mxu0
        %v6054 = vpop.f32.mrf.mxu0
        %v6055 = vadd.f32 0.0, %v6054
        %v6056 = vpop.f32.mrf.mxu0
        %6057 = vmatprep.mubr.bf16.mxu0 0
        %6058 = vmatmul.mubr.bf16.gmra.mxu0 %v4330
        %v6059 = vpop.f32.mrf.mxu0
        %v6060 = vadd.f32 0.0, %v6059
        %v6061 = vpop.f32.mrf.mxu0
        %v6062 = vpop.f32.mrf.mxu0
        %v6063 = vadd.f32 0.0, %v6062
        %v6064 = vpop.f32.mrf.mxu0
        %6065 = vmatprep.mubr.bf16.mxu0 0
        %6066 = vmatmul.mubr.bf16.gmra.mxu0 %v4331
        %v6067 = vpop.f32.mrf.mxu0
        %v6068 = vadd.f32 0.0, %v6067
        %v6069 = vpop.f32.mrf.mxu0
        %v6070 = vpop.f32.mrf.mxu0
        %v6071 = vadd.f32 0.0, %v6070
        %v6072 = vpop.f32.mrf.mxu0
        %6073 = vmatprep.mubr.bf16.mxu0 0
        %6074 = vmatmul.mubr.bf16.gmra.mxu0 %v4332
        %v6075 = vpop.f32.mrf.mxu0
        %v6076 = vadd.f32 0.0, %v6075
        %v6077 = vpop.f32.mrf.mxu0
        %v6078 = vpop.f32.mrf.mxu0
        %v6079 = vadd.f32 0.0, %v6078
        %v6080 = vpop.f32.mrf.mxu0
        %6081 = vmatprep.mubr.bf16.mxu0 0
        %6082 = vmatmul.mubr.bf16.gmra.mxu0 %v4333
        %v6083 = vpop.f32.mrf.mxu0
        %v6084 = vadd.f32 0.0, %v6083
        %v6085 = vpop.f32.mrf.mxu0
        %v6086 = vpop.f32.mrf.mxu0
        %v6087 = vadd.f32 0.0, %v6086
        %v6088 = vpop.f32.mrf.mxu0
        %6089 = vmatprep.mubr.bf16.mxu0 0
        %6090 = vmatmul.mubr.bf16.gmra.mxu0 %v4334
        %v6091 = vpop.f32.mrf.mxu0
        %v6092 = vadd.f32 0.0, %v6091
        %v6093 = vpop.f32.mrf.mxu0
        %v6094 = vpop.f32.mrf.mxu0
        %v6095 = vadd.f32 0.0, %v6094
        %v6096 = vpop.f32.mrf.mxu0
        %6097 = vmatprep.mubr.bf16.mxu0 0
        %6098 = vmatmul.mubr.bf16.gmra.mxu0 %v4335
        %v6099 = vpop.f32.mrf.mxu0
        %v6100 = vadd.f32 0.0, %v6099
        %v6101 = vpop.f32.mrf.mxu0
        %v6102 = vpop.f32.mrf.mxu0
        %v6103 = vadd.f32 0.0, %v6102
        %v6104 = vpop.f32.mrf.mxu0
        %6105 = vmatprep.mubr.bf16.mxu0 0
        %6106 = vmatmul.mubr.bf16.gmra.mxu0 %v5125
        %v6107 = vpop.f32.mrf.mxu0
        %v6108 = vadd.f32 0.0, %v6107
        %v6109 = vpop.f32.mrf.mxu0
        %v6110 = vpop.f32.mrf.mxu0
        %v6111 = vadd.f32 0.0, %v6110
        %v6112 = vpop.f32.mrf.mxu0
        %6113 = vmatprep.mubr.bf16.mxu0 0
        %6114 = vmatmul.mubr.bf16.gmra.mxu0 %v4335
        %v6115 = vpop.f32.mrf.mxu0
        %v6116 = vadd.f32 0.0, %v6115
        %v6117 = vpop.f32.mrf.mxu0
        %v6118 = vpop.f32.mrf.mxu0
        %v6119 = vadd.f32 0.0, %v6118
        %v6120 = vpop.f32.mrf.mxu0
        %6121 = vdwg.mxu0
        %v6122 = vadd.f32 %v5865, %v5996
        %v6123 = vadd.f32 %v5866, %v5999
        %v6124 = vadd.f32 %v5867, %v6004
        %v6125 = vadd.f32 %v5868, %v6007
        %v6126 = vadd.f32 %v5869, %v6012
        %v6127 = vadd.f32 %v5870, %v6015
        %v6128 = vadd.f32 %v5871, %v6020
        %v6129 = vadd.f32 %v5872, %v6023
        %v6130 = vadd.f32 %v5873, %v6028
        %v6131 = vadd.f32 %v5874, %v6031
        %v6132 = vadd.f32 %v5875, %v6036
        %v6133 = vadd.f32 %v5876, %v6039
        %v6134 = vadd.f32 %v5877, %v6044
        %v6135 = vadd.f32 %v5878, %v6047
        %v6136 = vadd.f32 %v5879, %v6052
        %v6137 = vadd.f32 %v5880, %v6055
        %v6138 = vadd.f32 %v5881, %v6060
        %v6139 = vadd.f32 %v5882, %v6063
        %v6140 = vadd.f32 %v5883, %v6068
        %v6141 = vadd.f32 %v5884, %v6071
        %v6142 = vadd.f32 %v5885, %v6076
        %v6143 = vadd.f32 %v5886, %v6079
        %v6144 = vadd.f32 %v5887, %v6084
        %v6145 = vadd.f32 %v5888, %v6087
        %v6146 = vadd.f32 %v5889, %v6092
        %v6147 = vadd.f32 %v5890, %v6095
        %v6148 = vadd.f32 %v5891, %v6100
        %v6149 = vadd.f32 %v5892, %v6103
        %v6150 = vadd.f32 %v5893, %v6108
        %v6151 = vadd.f32 %v5894, %v6111
        %v6152 = vadd.f32 %v5895, %v6116
        %v6153 = vadd.f32 %v5896, %v6119
        %v6154 = vld [vmem:[%s5] sm:$0x1]
        %v6155 = vld [vmem:[%s6] sm:$0x1]
        %v6156 = vadd.f32 %v6122, %v6123
        %v6157 = vadd.f32 %v6156, %v6124
        %v6158 = vadd.f32 %v6157, %v6125
        %v6159 = vadd.f32 %v6158, %v6126
        %v6160 = vadd.f32 %v6159, %v6127
        %v6161 = vadd.f32 %v6160, %v6128
        %v6162 = vadd.f32 %v6161, %v6129
        %v6163 = vadd.f32 %v6162, %v6130
        %v6164 = vadd.f32 %v6163, %v6131
        %v6165 = vadd.f32 %v6164, %v6132
        %v6166 = vadd.f32 %v6165, %v6133
        %v6167 = vadd.f32 %v6166, %v6134
        %v6168 = vadd.f32 %v6167, %v6135
        %v6169 = vadd.f32 %v6168, %v6136
        %v6170 = vadd.f32 %v6169, %v6137
        %v6171 = vadd.f32 %v6170, %v6138
        %v6172 = vadd.f32 %v6171, %v6139
        %v6173 = vadd.f32 %v6172, %v6140
        %v6174 = vadd.f32 %v6173, %v6141
        %v6175 = vadd.f32 %v6174, %v6142
        %v6176 = vadd.f32 %v6175, %v6143
        %v6177 = vadd.f32 %v6176, %v6144
        %v6178 = vadd.f32 %v6177, %v6145
        %v6179 = vadd.f32 %v6178, %v6146
        %v6180 = vadd.f32 %v6179, %v6147
        %v6181 = vadd.f32 %v6180, %v6148
        %v6182 = vadd.f32 %v6181, %v6149
        %v6183 = vadd.f32 %v6182, %v6150
        %v6184 = vadd.f32 %v6183, %v6151
        %v6185 = vadd.f32 %v6184, %v6152
        %v6186 = vadd.f32 %v6185, %v6153
        %v6187 = vrot.slane %v6186, 4
        %v6188 = vadd.f32 %v6186, %v6187
        %v6189 = vrot.slane %v6188, 2
        %v6190 = vadd.f32 %v6188, %v6189
        %v6191 = vrot.slane %v6190, 1
        %v6192 = vadd.f32 %v6190, %v6191
        %v6193 = vmul.f32 %v6192, 0.00390625
        %v6194 = vmul.f32 %v6122, %v6122
        %v6195 = vmul.f32 %v6123, %v6123
        %v6196 = vmul.f32 %v6124, %v6124
        %v6197 = vmul.f32 %v6125, %v6125
        %v6198 = vmul.f32 %v6126, %v6126
        %v6199 = vmul.f32 %v6127, %v6127
        %v6200 = vmul.f32 %v6128, %v6128
        %v6201 = vmul.f32 %v6129, %v6129
        %v6202 = vmul.f32 %v6130, %v6130
        %v6203 = vmul.f32 %v6131, %v6131
        %v6204 = vmul.f32 %v6132, %v6132
        %v6205 = vmul.f32 %v6133, %v6133
        %v6206 = vmul.f32 %v6134, %v6134
        %v6207 = vmul.f32 %v6135, %v6135
        %v6208 = vmul.f32 %v6136, %v6136
        %v6209 = vmul.f32 %v6137, %v6137
        %v6210 = vmul.f32 %v6138, %v6138
        %v6211 = vmul.f32 %v6139, %v6139
        %v6212 = vmul.f32 %v6140, %v6140
        %v6213 = vmul.f32 %v6141, %v6141
        %v6214 = vmul.f32 %v6142, %v6142
        %v6215 = vmul.f32 %v6143, %v6143
        %v6216 = vmul.f32 %v6144, %v6144
        %v6217 = vmul.f32 %v6145, %v6145
        %v6218 = vmul.f32 %v6146, %v6146
        %v6219 = vmul.f32 %v6147, %v6147
        %v6220 = vmul.f32 %v6148, %v6148
        %v6221 = vmul.f32 %v6149, %v6149
        %v6222 = vmul.f32 %v6150, %v6150
        %v6223 = vmul.f32 %v6151, %v6151
        %v6224 = vmul.f32 %v6152, %v6152
        %v6225 = vmul.f32 %v6153, %v6153
        %v6226 = vadd.f32 %v6194, %v6195
        %v6227 = vadd.f32 %v6226, %v6196
        %v6228 = vadd.f32 %v6227, %v6197
        %v6229 = vadd.f32 %v6228, %v6198
        %v6230 = vadd.f32 %v6229, %v6199
        %v6231 = vadd.f32 %v6230, %v6200
        %v6232 = vadd.f32 %v6231, %v6201
        %v6233 = vadd.f32 %v6232, %v6202
        %v6234 = vadd.f32 %v6233, %v6203
        %v6235 = vadd.f32 %v6234, %v6204
        %v6236 = vadd.f32 %v6235, %v6205
        %v6237 = vadd.f32 %v6236, %v6206
        %v6238 = vadd.f32 %v6237, %v6207
        %v6239 = vadd.f32 %v6238, %v6208
        %v6240 = vadd.f32 %v6239, %v6209
        %v6241 = vadd.f32 %v6240, %v6210
        %v6242 = vadd.f32 %v6241, %v6211
        %v6243 = vadd.f32 %v6242, %v6212
        %v6244 = vadd.f32 %v6243, %v6213
        %v6245 = vadd.f32 %v6244, %v6214
        %v6246 = vadd.f32 %v6245, %v6215
        %v6247 = vadd.f32 %v6246, %v6216
        %v6248 = vadd.f32 %v6247, %v6217
        %v6249 = vadd.f32 %v6248, %v6218
        %v6250 = vadd.f32 %v6249, %v6219
        %v6251 = vadd.f32 %v6250, %v6220
        %v6252 = vadd.f32 %v6251, %v6221
        %v6253 = vadd.f32 %v6252, %v6222
        %v6254 = vadd.f32 %v6253, %v6223
        %v6255 = vadd.f32 %v6254, %v6224
        %v6256 = vadd.f32 %v6255, %v6225
        %v6257 = vrot.slane %v6256, 4
        %v6258 = vadd.f32 %v6256, %v6257
        %v6259 = vrot.slane %v6258, 2
        %v6260 = vadd.f32 %v6258, %v6259
        %v6261 = vrot.slane %v6260, 1
        %v6262 = vadd.f32 %v6260, %v6261
        %v6263 = vmul.f32 %v6262, 0.00390625
        %v6264 = vmul.f32 %v6193, %v6193
        %v6265 = vsub.f32 %v6263, %v6264
        %v6266 = vmax.f32 %v6265, 0.0
        %v6267 = vsub.f32 %v6122, %v6193
        %v6268 = vsub.f32 %v6123, %v6193
        %v6269 = vsub.f32 %v6124, %v6193
        %v6270 = vsub.f32 %v6125, %v6193
        %v6271 = vsub.f32 %v6126, %v6193
        %v6272 = vsub.f32 %v6127, %v6193
        %v6273 = vsub.f32 %v6128, %v6193
        %v6274 = vsub.f32 %v6129, %v6193
        %v6275 = vsub.f32 %v6130, %v6193
        %v6276 = vsub.f32 %v6131, %v6193
        %v6277 = vsub.f32 %v6132, %v6193
        %v6278 = vsub.f32 %v6133, %v6193
        %v6279 = vsub.f32 %v6134, %v6193
        %v6280 = vsub.f32 %v6135, %v6193
        %v6281 = vsub.f32 %v6136, %v6193
        %v6282 = vsub.f32 %v6137, %v6193
        %v6283 = vsub.f32 %v6138, %v6193
        %v6284 = vsub.f32 %v6139, %v6193
        %v6285 = vsub.f32 %v6140, %v6193
        %v6286 = vsub.f32 %v6141, %v6193
        %v6287 = vsub.f32 %v6142, %v6193
        %v6288 = vsub.f32 %v6143, %v6193
        %v6289 = vsub.f32 %v6144, %v6193
        %v6290 = vsub.f32 %v6145, %v6193
        %v6291 = vsub.f32 %v6146, %v6193
        %v6292 = vsub.f32 %v6147, %v6193
        %v6293 = vsub.f32 %v6148, %v6193
        %v6294 = vsub.f32 %v6149, %v6193
        %v6295 = vsub.f32 %v6150, %v6193
        %v6296 = vsub.f32 %v6151, %v6193
        %v6297 = vsub.f32 %v6152, %v6193
        %v6298 = vsub.f32 %v6153, %v6193
        %v6299 = vadd.f32 %v6266, 1e-09
        %v6300 = vrsqrt.pop %v6299
        %v6301 = vmul.f32 %v6267, %v6300
        %v6302 = vmul.f32 %v6268, %v6300
        %v6303 = vmul.f32 %v6269, %v6300
        %v6304 = vmul.f32 %v6270, %v6300
        %v6305 = vmul.f32 %v6271, %v6300
        %v6306 = vmul.f32 %v6272, %v6300
        %v6307 = vmul.f32 %v6273, %v6300
        %v6308 = vmul.f32 %v6274, %v6300
        %v6309 = vmul.f32 %v6275, %v6300
        %v6310 = vmul.f32 %v6276, %v6300
        %v6311 = vmul.f32 %v6277, %v6300
        %v6312 = vmul.f32 %v6278, %v6300
        %v6313 = vmul.f32 %v6279, %v6300
        %v6314 = vmul.f32 %v6280, %v6300
        %v6315 = vmul.f32 %v6281, %v6300
        %v6316 = vmul.f32 %v6282, %v6300
        %v6317 = vmul.f32 %v6283, %v6300
        %v6318 = vmul.f32 %v6284, %v6300
        %v6319 = vmul.f32 %v6285, %v6300
        %v6320 = vmul.f32 %v6286, %v6300
        %v6321 = vmul.f32 %v6287, %v6300
        %v6322 = vmul.f32 %v6288, %v6300
        %v6323 = vmul.f32 %v6289, %v6300
        %v6324 = vmul.f32 %v6290, %v6300
        %v6325 = vmul.f32 %v6291, %v6300
        %v6326 = vmul.f32 %v6292, %v6300
        %v6327 = vmul.f32 %v6293, %v6300
        %v6328 = vmul.f32 %v6294, %v6300
        %v6329 = vmul.f32 %v6295, %v6300
        %v6330 = vmul.f32 %v6296, %v6300
        %v6331 = vmul.f32 %v6297, %v6300
        %v6332 = vmul.f32 %v6298, %v6300
        %v6334 = vlaneseq
        %v6335 = vshrl.u32 %v6334, 7
        %v6336 = vsub.s32 0, %v6335
        %v6337 = vrot.slane %v6154, %v6336
        %v6339 = vmul.f32 %v6301, %v6337
        %v6340 = vmul.f32 %v6302, %v6337
        %v6341 = vmul.f32 %v6303, %v6337
        %v6342 = vmul.f32 %v6304, %v6337
        %v6343 = vmul.f32 %v6305, %v6337
        %v6344 = vmul.f32 %v6306, %v6337
        %v6345 = vmul.f32 %v6307, %v6337
        %v6346 = vmul.f32 %v6308, %v6337
        %v6347 = vmul.f32 %v6309, %v6337
        %v6348 = vmul.f32 %v6310, %v6337
        %v6349 = vmul.f32 %v6311, %v6337
        %v6350 = vmul.f32 %v6312, %v6337
        %v6351 = vmul.f32 %v6313, %v6337
        %v6352 = vmul.f32 %v6314, %v6337
        %v6353 = vmul.f32 %v6315, %v6337
        %v6354 = vmul.f32 %v6316, %v6337
        %v6355 = vmul.f32 %v6317, %v6337
        %v6356 = vmul.f32 %v6318, %v6337
        %v6357 = vmul.f32 %v6319, %v6337
        %v6358 = vmul.f32 %v6320, %v6337
        %v6359 = vmul.f32 %v6321, %v6337
        %v6360 = vmul.f32 %v6322, %v6337
        %v6361 = vmul.f32 %v6323, %v6337
        %v6362 = vmul.f32 %v6324, %v6337
        %v6363 = vmul.f32 %v6325, %v6337
        %v6364 = vmul.f32 %v6326, %v6337
        %v6365 = vmul.f32 %v6327, %v6337
        %v6366 = vmul.f32 %v6328, %v6337
        %v6367 = vmul.f32 %v6329, %v6337
        %v6368 = vmul.f32 %v6330, %v6337
        %v6369 = vmul.f32 %v6331, %v6337
        %v6370 = vmul.f32 %v6332, %v6337
        %v6372 = vlaneseq
        %v6373 = vshrl.u32 %v6372, 7
        %v6374 = vsub.s32 0, %v6373
        %v6375 = vrot.slane %v6155, %v6374
        %v6377 = vadd.f32 %v6339, %v6375
        %v6378 = vadd.f32 %v6340, %v6375
        %v6379 = vadd.f32 %v6341, %v6375
        %v6380 = vadd.f32 %v6342, %v6375
        %v6381 = vadd.f32 %v6343, %v6375
        %v6382 = vadd.f32 %v6344, %v6375
        %v6383 = vadd.f32 %v6345, %v6375
        %v6384 = vadd.f32 %v6346, %v6375
        %v6385 = vadd.f32 %v6347, %v6375
        %v6386 = vadd.f32 %v6348, %v6375
        %v6387 = vadd.f32 %v6349, %v6375
        %v6388 = vadd.f32 %v6350, %v6375
        %v6389 = vadd.f32 %v6351, %v6375
        %v6390 = vadd.f32 %v6352, %v6375
        %v6391 = vadd.f32 %v6353, %v6375
        %v6392 = vadd.f32 %v6354, %v6375
        %v6393 = vadd.f32 %v6355, %v6375
        %v6394 = vadd.f32 %v6356, %v6375
        %v6395 = vadd.f32 %v6357, %v6375
        %v6396 = vadd.f32 %v6358, %v6375
        %v6397 = vadd.f32 %v6359, %v6375
        %v6398 = vadd.f32 %v6360, %v6375
        %v6399 = vadd.f32 %v6361, %v6375
        %v6400 = vadd.f32 %v6362, %v6375
        %v6401 = vadd.f32 %v6363, %v6375
        %v6402 = vadd.f32 %v6364, %v6375
        %v6403 = vadd.f32 %v6365, %v6375
        %v6404 = vadd.f32 %v6366, %v6375
        %v6405 = vadd.f32 %v6367, %v6375
        %v6406 = vadd.f32 %v6368, %v6375
        %v6407 = vadd.f32 %v6369, %v6375
        %v6408 = vadd.f32 %v6370, %v6375
        %v6409 = vadd.f32 %v6377, %v278
        %v6410 = vadd.f32 %v6378, %v279
        %v6411 = vadd.f32 %v6379, %v280
        %v6412 = vadd.f32 %v6380, %v281
        %v6413 = vadd.f32 %v6381, %v282
        %v6414 = vadd.f32 %v6382, %v283
        %v6415 = vadd.f32 %v6383, %v284
        %v6416 = vadd.f32 %v6384, %v285
        %v6417 = vadd.f32 %v6385, %v286
        %v6418 = vadd.f32 %v6386, %v287
        %v6419 = vadd.f32 %v6387, %v288
        %v6420 = vadd.f32 %v6388, %v289
        %v6421 = vadd.f32 %v6389, %v290
        %v6422 = vadd.f32 %v6390, %v291
        %v6423 = vadd.f32 %v6391, %v292
        %v6424 = vadd.f32 %v6392, %v293
        %v6425 = vadd.f32 %v6393, %v294
        %v6426 = vadd.f32 %v6394, %v295
        %v6427 = vadd.f32 %v6395, %v296
        %v6428 = vadd.f32 %v6396, %v297
        %v6429 = vadd.f32 %v6397, %v298
        %v6430 = vadd.f32 %v6398, %v299
        %v6431 = vadd.f32 %v6399, %v300
        %v6432 = vadd.f32 %v6400, %v301
        %v6433 = vadd.f32 %v6401, %v302
        %v6434 = vadd.f32 %v6402, %v303
        %v6435 = vadd.f32 %v6403, %v304
        %v6436 = vadd.f32 %v6404, %v305
        %v6437 = vadd.f32 %v6405, %v306
        %v6438 = vadd.f32 %v6406, %v307
        %v6439 = vadd.f32 %v6407, %v308
        %v6440 = vadd.f32 %v6408, %v309
        %6441 = vst [vmem:[%s271] sm:$0xff] %v6409
        %6442 = vst [vmem:[%s271 + $0x8] sm:$0xff] %v6410
        %6443 = vst [vmem:[%s271 + $0x10] sm:$0xff] %v6411
        %6444 = vst [vmem:[%s271 + $0x18] sm:$0xff] %v6412
        %6445 = vst [vmem:[%s271 + $0x20] sm:$0xff] %v6413
        %6446 = vst [vmem:[%s271 + $0x28] sm:$0xff] %v6414
        %6447 = vst [vmem:[%s271 + $0x30] sm:$0xff] %v6415
        %6448 = vst [vmem:[%s271 + $0x38] sm:$0xff] %v6416
        %6449 = vst [vmem:[%s271 + $0x40] sm:$0xff] %v6417
        %6450 = vst [vmem:[%s271 + $0x48] sm:$0xff] %v6418
        %6451 = vst [vmem:[%s271 + $0x50] sm:$0xff] %v6419
        %6452 = vst [vmem:[%s271 + $0x58] sm:$0xff] %v6420
        %6453 = vst [vmem:[%s271 + $0x60] sm:$0xff] %v6421
        %6454 = vst [vmem:[%s271 + $0x68] sm:$0xff] %v6422
        %6455 = vst [vmem:[%s271 + $0x70] sm:$0xff] %v6423
        %6456 = vst [vmem:[%s271 + $0x78] sm:$0xff] %v6424
        %6457 = vst [vmem:[%s271 + $0x80] sm:$0xff] %v6425
        %6458 = vst [vmem:[%s271 + $0x88] sm:$0xff] %v6426
        %6459 = vst [vmem:[%s271 + $0x90] sm:$0xff] %v6427
        %6460 = vst [vmem:[%s271 + $0x98] sm:$0xff] %v6428
        %6461 = vst [vmem:[%s271 + $0xa0] sm:$0xff] %v6429
        %6462 = vst [vmem:[%s271 + $0xa8] sm:$0xff] %v6430
        %6463 = vst [vmem:[%s271 + $0xb0] sm:$0xff] %v6431
        %6464 = vst [vmem:[%s271 + $0xb8] sm:$0xff] %v6432
        %6465 = vst [vmem:[%s271 + $0xc0] sm:$0xff] %v6433
        %6466 = vst [vmem:[%s271 + $0xc8] sm:$0xff] %v6434
        %6467 = vst [vmem:[%s271 + $0xd0] sm:$0xff] %v6435
        %6468 = vst [vmem:[%s271 + $0xd8] sm:$0xff] %v6436
        %6469 = vst [vmem:[%s271 + $0xe0] sm:$0xff] %v6437
        %6470 = vst [vmem:[%s271 + $0xe8] sm:$0xff] %v6438
        %6471 = vst [vmem:[%s271 + $0xf0] sm:$0xff] %v6439
        %6472 = vst [vmem:[%s271 + $0xf8] sm:$0xff] %v6440
        %s6473 = sand.u32 %s181, 1
        %s6474 = scalar_lea.sflag [#allocation3], %s6473
        %s6475 = sand.u32 %s181, 1
        %s6476 = smul.addr %s6475, 256
        %s6477 = scalar_lea.vmem [#allocation2], %s6476
        // Predicated region
        $region49: #{residual_block_forward.1} parent=47 // pred_check
          %p6478 = pneg %p191
        $region50: #{residual_block_forward.1} parent=47 // pred_check_branch
          %6480 = sbr.rel (%p6478) target = $region52
        $region51: #{residual_block_forward.1} parent=47 // pred_region
          %s6482 = ssub.s32 4096, 4096
          %6483 = vsyncadd %s6474, %s6482
          %s6484 = smul.addr %s21, 32
          %s6485 = smul.addr %s6484, 128
          %s6486 = scalar_lea.hbm %s7, %s6485
          %s6487 = sshll.u32 %s6477, 4
          %s6488 = int_to_ptr.vmem [resolvable:$true] %s6487
          %6493 = dma.vmem_to_hbm [thread:$0]  %s6488, 4096, %s6486, %s6474, 128, 128, 8
        $region52: #{residual_block_forward.1} parent=47 // pred_fallthru
          _
      $region48: #{residual_block_forward.1} parent=5 // pred_fallthru
        _
      %p6494 = scmp.le.s32.totalorder 2, %s16
      // Predicated region
      $region53: #{residual_block_forward.1} parent=5 // pred_check
        %p6495 = pneg %p6494
      $region54: #{residual_block_forward.1} parent=5 // pred_check_branch
        %6497 = sbr.rel (%p6495) target = $region56
      $region55: #{residual_block_forward.1} parent=5 // pred_region
        %s6498 = ssub.s32 %s16, 2
        // Predicated region
        $region57: #{residual_block_forward.1} parent=55 // pred_check
          %p6499 = pneg %p197
        $region58: #{residual_block_forward.1} parent=55 // pred_check_branch
          %6501 = sbr.rel (%p6499) target = $region60
        $region59: #{residual_block_forward.1} parent=55 // pred_region
          %s6502 = sand.u32 %s182, 1
          %s6503 = scalar_lea.sflag [#allocation3], %s6502
          %s6504 = sand.u32 %s182, 1
          %s6505 = smul.addr %s6504, 256
          %s6506 = scalar_lea.vmem [#allocation2], %s6505
          %6507 = dma.done %s6503, 4096
        $region60: #{residual_block_forward.1} parent=55 // pred_fallthru
          _
      $region56: #{residual_block_forward.1} parent=5 // pred_fallthru
        _
    $region6: #{residual_block_forward.1} parent=1 // loop_footer
      %s20 = sadd.s32 1, %s16
    $region7: #{residual_block_forward.1} parent=1 // loop_footer_branch
      %15 = sbr.rel target = $region3
    $region8: #{residual_block_forward.1} parent=1 // loop_exit
      _
    %6508 = vsyncpa [#allocation3], 1
    %s6509 = scalar_lea.sflag [#allocation3], 1
    %6510 = vsyncpa %s6509, 1

</llo_original>
